<compile_context>
chip_gen: v7x
topology: tpu7x:2x2x1
jax: 0.10.0
libtpu: 0.0.40
codegen_flags: <defaults>
</compile_context>

<pallas_src>
import functools

import jax
import jax.numpy as jnp
from jax import lax
from jax.experimental import pallas as pl
from jax.experimental.pallas import tpu as pltpu

NEG_SLOPE = 0.2  # LeakyReLU slope used by FeedForward


def _leaky_relu(x):
    return jnp.where(x >= 0, x, NEG_SLOPE * x)


def _fused_ff_kernel(x_ref, w1_ref, w2_ref, o_ref, xpad_ref, mid_ref, *,
                     H, W, C, C_out):
    """One batch element: conv3x3(dil=2,pad=2)+LReLU -> conv3x3(pad=1)+LReLU.

    x_ref   : (1, H, W, C)           input block (compute dtype)
    w1_ref  : (3, 3*C, C)            conv1 weights, (kx, ci) folded into K
    w2_ref  : (3, 3*C, C_out)        conv2 weights, (kx, ci) folded into K
    o_ref   : (1, H, W, C_out)       output block
    xpad_ref: (H+4, W+16, C)         zero-bordered conv1 staging (compute dt)
    mid_ref : (H+2, W+16, C)         zero-bordered intermediate (compute dt)

    Column layout of both scratch buffers: image lives at cols [8, 8+W)
    (sublane-aligned store); left halo cols [0,8) and right halo cols
    [W+8, W+16) are zero.
    """
    cdt = xpad_ref.dtype
    Hp1, Hp2 = H + 4, H + 2
    Wpad = W + 16

    # ---- re-zero only the halo strips (cheap; done every grid step so it is
    # correct however the "parallel" batch axis is sharded across cores) -----
    xpad_ref[:, 0:8, :] = jnp.zeros((Hp1, 8, C), cdt)
    xpad_ref[:, W + 8:Wpad, :] = jnp.zeros((Hp1, 8, C), cdt)
    xpad_ref[0:2, :, :] = jnp.zeros((2, Wpad, C), cdt)
    xpad_ref[H + 2:Hp1, :, :] = jnp.zeros((2, Wpad, C), cdt)

    mid_ref[:, 0:8, :] = jnp.zeros((Hp2, 8, C), cdt)
    mid_ref[:, W + 8:Wpad, :] = jnp.zeros((Hp2, 8, C), cdt)
    mid_ref[0:1, :, :] = jnp.zeros((1, Wpad, C), cdt)
    mid_ref[H + 1:Hp2, :, :] = jnp.zeros((1, Wpad, C), cdt)

    # ---- stage the input block into the interior (aligned col offset 8) ----
    xpad_ref[2:2 + H, 8:8 + W, :] = x_ref[0].astype(cdt)

    def conv3x3(src_ref, w_ref, dilation, pad, n_in, n_out):
        # kx folded into the lane/contraction dim: 3 column-shifted copies of
        # the padded slab, built ONCE per conv.
        c0 = 8 - pad
        x3 = jnp.concatenate(
            [src_ref[:, c0 + kx * dilation: c0 + kx * dilation + W, :]
             for kx in range(3)],
            axis=-1)                                   # (Hp, W, 3*n_in)
        # ky folded into 3 accumulating matmuls (K = 3*n_in each); the ky row
        # shift is a free major-dim slice and (H, W)->(H*W) is layout-free
        # for W a multiple of 8.
        acc = None
        for ky in range(3):
            lhs = x3[ky * dilation: ky * dilation + H]
            lhs = lhs.reshape(H * W, 3 * n_in)
            part = jnp.dot(lhs, w_ref[ky],
                           preferred_element_type=jnp.float32)
            acc = part if acc is None else acc + part
        return _leaky_relu(acc).reshape(H, W, n_out)   # f32

    # conv1: 3x3, padding=2, dilation=2, bias=False, + LeakyReLU(0.2)
    y1 = conv3x3(xpad_ref, w1_ref, 2, 2, C, C)
    mid_ref[1:1 + H, 8:8 + W, :] = y1.astype(cdt)      # aligned interior store

    # conv2: 3x3, padding=1, dilation=1, bias=False, + LeakyReLU(0.2)
    y2 = conv3x3(mid_ref, w2_ref, 1, 1, C, C_out)
    o_ref[0] = y2.astype(o_ref.dtype)


def feed_forward(x_nchw, w1_hwio, w2_hwio, *, compute_dtype=None):
    """Pallas forward of FeedForward on an NCHW input; weights in HWIO.

    compute_dtype=jnp.bfloat16 is recommended on all TPU generations (MXU
    operands are bf16 with f32 accumulation; all VPU work stays f32).
    """
    N, C, H, W = x_nchw.shape
    assert w1_hwio.shape == (3, 3, C, C)
    assert w2_hwio.shape[:3] == (3, 3, C)
    C_out = w2_hwio.shape[3]

    if compute_dtype is None:
        compute_dtype = x_nchw.dtype

    x_nhwc = jnp.transpose(x_nchw, (0, 2, 3, 1)).astype(compute_dtype)
    # lane-dense weight slabs: (ky, 3*Cin, Cout) with (kx, ci) folded into K
    w1 = w1_hwio.reshape(3, 3 * C, C).astype(compute_dtype)
    w2 = w2_hwio.reshape(3, 3 * C, C_out).astype(compute_dtype)

    kernel = functools.partial(_fused_ff_kernel, H=H, W=W, C=C, C_out=C_out)

    itemsize = jnp.dtype(compute_dtype).itemsize
    cost = pl.CostEstimate(
        flops=2 * N * H * W * 9 * C * (C + C_out),
        transcendentals=0,
        bytes_accessed=(N * H * W * C * itemsize                      # input
                        + N * H * W * C_out * x_nchw.dtype.itemsize   # output
                        + 9 * C * (C + C_out) * itemsize),            # weights
    )

    out_nhwc = pl.pallas_call(
        kernel,
        out_shape=jax.ShapeDtypeStruct((N, H, W, C_out), x_nchw.dtype),
        grid_spec=pltpu.PrefetchScalarGridSpec(
            num_scalar_prefetch=0,
            grid=(N,),
            in_specs=[
                pl.BlockSpec((1, H, W, C), lambda n: (n, 0, 0, 0)),
                pl.BlockSpec((3, 3 * C, C), lambda n: (0, 0, 0)),
                pl.BlockSpec((3, 3 * C, C_out), lambda n: (0, 0, 0)),
            ],
            out_specs=pl.BlockSpec((1, H, W, C_out), lambda n: (n, 0, 0, 0)),
            scratch_shapes=[
                pltpu.VMEM((H + 4, W + 16, C), compute_dtype),  # conv1 staging
                pltpu.VMEM((H + 2, W + 16, C), compute_dtype),  # padded mid
            ],
        ),
        compiler_params=pltpu.CompilerParams(
            dimension_semantics=("parallel",),
            vmem_limit_bytes=64 * 1024 * 1024,
        ),
        cost_estimate=cost,
    )(x_nhwc, w1, w2)

    return jnp.transpose(out_nhwc, (0, 3, 1, 2))                # NHWC -> NCHW


def spatial_transformer_block(x_nchw, w1_hwio, w2_hwio, *, compute_dtype=None):
    """Forward of SpatialTransformerBlock (== FeedForward) on an NCHW input."""
    return feed_forward(x_nchw, w1_hwio, w2_hwio, compute_dtype=compute_dtype)


# ----------------------- pure-JAX reference (for check) ----------------------
def _ref_forward(x_nchw, w1_hwio, w2_hwio):
    x = jnp.transpose(x_nchw, (0, 2, 3, 1))

    def conv(x, w, pad, dil):
        y = lax.conv_general_dilated(
            x, w, window_strides=(1, 1),
            padding=((pad, pad), (pad, pad)),
            rhs_dilation=(dil, dil),
            dimension_numbers=("NHWC", "HWIO", "NHWC"),
        )
        return jnp.where(y >= 0, y, NEG_SLOPE * y)

    x = conv(x, w1_hwio, 2, 2)
    x = conv(x, w2_hwio, 1, 1)
    return jnp.transpose(x, (0, 3, 1, 2))


if __name__ == "__main__":
    # Small shapes consistent with the module: batch=2, hidden(channels)=32,
    # spatial 16x16.  (Module defaults are hidden=128, 48x64 — same code path.)
    N, C, H, W = 2, 32, 16, 16

    key = jax.random.PRNGKey(0)
    k_x, k_w1, k_w2 = jax.random.split(key, 3)

    x_nchw = jax.random.normal(k_x, (N, C, H, W), dtype=jnp.float32)

    # Deterministic weights, PyTorch-style kaiming-uniform bound 1/sqrt(fan_in),
    # fan_in = Cin * 3 * 3.  Stored in HWIO layout (kH, kW, Cin, Cout).
    bound = 1.0 / (C * 9) ** 0.5
    w1 = jax.random.uniform(k_w1, (3, 3, C, C), jnp.float32, -bound, bound)
    w2 = jax.random.uniform(k_w2, (3, 3, C, C), jnp.float32, -bound, bound)

    ref = _ref_forward(x_nchw, w1, w2)

    # f32 path (exact check)
    out = spatial_transformer_block(x_nchw, w1, w2)
    out = jax.block_until_ready(out)
    assert out.shape == (N, C, H, W)
    assert jnp.allclose(out, ref, atol=1e-4, rtol=1e-4), \
        float(jnp.max(jnp.abs(out - ref)))

    # bf16 MXU path (recommended on v5e/v6e/v7x): f32 accumulation, loose check.
    out_bf16 = jax.block_until_ready(
        spatial_transformer_block(x_nchw, w1, w2, compute_dtype=jnp.bfloat16))
    assert jnp.allclose(out_bf16, ref, atol=1e-1, rtol=1e-1)

    print("KERNEL_OK")
</pallas_src>

<mosaic_0001>
module attributes {stable_mosaic.version = 11 : i64} {
  func.func @_fused_ff_kernel(%arg0: i32, %arg1: memref<1x16x16x32xf32, #tpu.memory_space<vmem>>, %arg2: memref<3x96x32xf32, #tpu.memory_space<vmem>>, %arg3: memref<3x96x32xf32, #tpu.memory_space<vmem>>, %arg4: memref<1x16x16x32xf32, #tpu.memory_space<vmem>>, %arg5: memref<20x32x32xf32, #tpu.memory_space<vmem>>, %arg6: memref<18x32x32xf32, #tpu.memory_space<vmem>>) attributes {dimension_semantics = [#tpu.dimension_semantics<parallel>], iteration_bounds = array<i64: 2>, scalar_prefetch = 0 : i64, scratch_operands = 2 : i64, tpu.core_type = #tpu.core_type<tc>, window_params = [{transform_indices = @transform_0, window_bounds = array<i64: 1, 16, 16, 32>}, {pipeline_mode = #tpu.pipeline_mode<synchronous>, transform_indices = @transform_1, window_bounds = array<i64: 3, 96, 32>}, {pipeline_mode = #tpu.pipeline_mode<synchronous>, transform_indices = @transform_2, window_bounds = array<i64: 3, 96, 32>}, {transform_indices = @transform_3, window_bounds = array<i64: 1, 16, 16, 32>}]} {
    %cst = arith.constant 0.000000e+00 : f32
    %0 = vector.broadcast %cst : f32 to vector<20x8x32xf32>
    %c0 = arith.constant 0 : index
    %c0_0 = arith.constant 0 : index
    %c0_1 = arith.constant 0 : index
    %1 = vector.load %arg5[%c0, %c0_0, %c0_1] : memref<20x32x32xf32, #tpu.memory_space<vmem>>, vector<20x8x32xf32>
    tpu.vector_store %arg5[%c0, %c0_0, %c0_1], %0 {strides = array<i32>} : memref<20x32x32xf32, #tpu.memory_space<vmem>>, vector<20x8x32xf32>,
    %cst_2 = arith.constant 0.000000e+00 : f32
    %2 = vector.broadcast %cst_2 : f32 to vector<20x8x32xf32>
    %c0_3 = arith.constant 0 : index
    %c24 = arith.constant 24 : index
    %c0_4 = arith.constant 0 : index
    %3 = vector.load %arg5[%c0_3, %c24, %c0_4] : memref<20x32x32xf32, #tpu.memory_space<vmem>>, vector<20x8x32xf32>
    tpu.vector_store %arg5[%c0_3, %c24, %c0_4], %2 {strides = array<i32>} : memref<20x32x32xf32, #tpu.memory_space<vmem>>, vector<20x8x32xf32>,
    %cst_5 = arith.constant 0.000000e+00 : f32
    %4 = vector.broadcast %cst_5 : f32 to vector<2x32x32xf32>
    %c0_6 = arith.constant 0 : index
    %c0_7 = arith.constant 0 : index
    %c0_8 = arith.constant 0 : index
    %5 = vector.load %arg5[%c0_6, %c0_7, %c0_8] : memref<20x32x32xf32, #tpu.memory_space<vmem>>, vector<2x32x32xf32>
    tpu.vector_store %arg5[%c0_6, %c0_7, %c0_8], %4 {strides = array<i32>} : memref<20x32x32xf32, #tpu.memory_space<vmem>>, vector<2x32x32xf32>,
    %cst_9 = arith.constant 0.000000e+00 : f32
    %6 = vector.broadcast %cst_9 : f32 to vector<2x32x32xf32>
    %c18 = arith.constant 18 : index
    %c0_10 = arith.constant 0 : index
    %c0_11 = arith.constant 0 : index
    %7 = vector.load %arg5[%c18, %c0_10, %c0_11] : memref<20x32x32xf32, #tpu.memory_space<vmem>>, vector<2x32x32xf32>
    tpu.vector_store %arg5[%c18, %c0_10, %c0_11], %6 {strides = array<i32>} : memref<20x32x32xf32, #tpu.memory_space<vmem>>, vector<2x32x32xf32>,
    %cst_12 = arith.constant 0.000000e+00 : f32
    %8 = vector.broadcast %cst_12 : f32 to vector<18x8x32xf32>
    %c0_13 = arith.constant 0 : index
    %c0_14 = arith.constant 0 : index
    %c0_15 = arith.constant 0 : index
    %9 = vector.load %arg6[%c0_13, %c0_14, %c0_15] : memref<18x32x32xf32, #tpu.memory_space<vmem>>, vector<18x8x32xf32>
    tpu.vector_store %arg6[%c0_13, %c0_14, %c0_15], %8 {strides = array<i32>} : memref<18x32x32xf32, #tpu.memory_space<vmem>>, vector<18x8x32xf32>,
    %cst_16 = arith.constant 0.000000e+00 : f32
    %10 = vector.broadcast %cst_16 : f32 to vector<18x8x32xf32>
    %c0_17 = arith.constant 0 : index
    %c24_18 = arith.constant 24 : index
    %c0_19 = arith.constant 0 : index
    %11 = vector.load %arg6[%c0_17, %c24_18, %c0_19] : memref<18x32x32xf32, #tpu.memory_space<vmem>>, vector<18x8x32xf32>
    tpu.vector_store %arg6[%c0_17, %c24_18, %c0_19], %10 {strides = array<i32>} : memref<18x32x32xf32, #tpu.memory_space<vmem>>, vector<18x8x32xf32>,
    %cst_20 = arith.constant 0.000000e+00 : f32
    %12 = vector.broadcast %cst_20 : f32 to vector<1x32x32xf32>
    %c0_21 = arith.constant 0 : index
    %c0_22 = arith.constant 0 : index
    %c0_23 = arith.constant 0 : index
    %13 = vector.load %arg6[%c0_21, %c0_22, %c0_23] : memref<18x32x32xf32, #tpu.memory_space<vmem>>, vector<1x32x32xf32>
    tpu.vector_store %arg6[%c0_21, %c0_22, %c0_23], %12 {strides = array<i32>} : memref<18x32x32xf32, #tpu.memory_space<vmem>>, vector<1x32x32xf32>,
    %cst_24 = arith.constant 0.000000e+00 : f32
    %14 = vector.broadcast %cst_24 : f32 to vector<1x32x32xf32>
    %c17 = arith.constant 17 : index
    %c0_25 = arith.constant 0 : index
    %c0_26 = arith.constant 0 : index
    %15 = vector.load %arg6[%c17, %c0_25, %c0_26] : memref<18x32x32xf32, #tpu.memory_space<vmem>>, vector<1x32x32xf32>
    tpu.vector_store %arg6[%c17, %c0_25, %c0_26], %14 {strides = array<i32>} : memref<18x32x32xf32, #tpu.memory_space<vmem>>, vector<1x32x32xf32>,
    %c0_27 = arith.constant 0 : index
    %c0_28 = arith.constant 0 : index
    %c0_29 = arith.constant 0 : index
    %c0_30 = arith.constant 0 : index
    %16 = vector.load %arg1[%c0_27, %c0_28, %c0_29, %c0_30] : memref<1x16x16x32xf32, #tpu.memory_space<vmem>>, vector<1x16x16x32xf32>
    %17 = vector.shape_cast %16 : vector<1x16x16x32xf32> to vector<16x16x32xf32>
    %c2 = arith.constant 2 : index
    %c8 = arith.constant 8 : index
    %c0_31 = arith.constant 0 : index
    %18 = vector.load %arg5[%c2, %c8, %c0_31] : memref<20x32x32xf32, #tpu.memory_space<vmem>>, vector<16x16x32xf32>
    tpu.vector_store %arg5[%c2, %c8, %c0_31], %17 {strides = array<i32>} : memref<20x32x32xf32, #tpu.memory_space<vmem>>, vector<16x16x32xf32>,
    %c0_32 = arith.constant 0 : index
    %c6 = arith.constant 6 : index
    %c0_33 = arith.constant 0 : index
    %19 = vector.load %arg5[%c0_32, %c6, %c0_33] : memref<20x32x32xf32, #tpu.memory_space<vmem>>, vector<20x16x32xf32>
    %c0_34 = arith.constant 0 : index
    %c8_35 = arith.constant 8 : index
    %c0_36 = arith.constant 0 : index
    %20 = vector.load %arg5[%c0_34, %c8_35, %c0_36] : memref<20x32x32xf32, #tpu.memory_space<vmem>>, vector<20x16x32xf32>
    %c0_37 = arith.constant 0 : index
    %c10 = arith.constant 10 : index
    %c0_38 = arith.constant 0 : index
    %21 = vector.load %arg5[%c0_37, %c10, %c0_38] : memref<20x32x32xf32, #tpu.memory_space<vmem>>, vector<20x16x32xf32>
    %22 = tpu.concatenate %19, %20, %21 in 2 : vector<20x16x32xf32>, vector<20x16x32xf32>, vector<20x16x32xf32> -> vector<20x16x96xf32>
    %23 = vector.extract_strided_slice %22 {offsets = [0, 0, 0], sizes = [16, 16, 96], strides = [1, 1, 1]} : vector<20x16x96xf32> to vector<16x16x96xf32>
    %24 = vector.shape_cast %23 : vector<16x16x96xf32> to vector<256x96xf32>
    %c0_39 = arith.constant 0 : index
    %c0_40 = arith.constant 0 : index
    %c0_41 = arith.constant 0 : index
    %25 = vector.load %arg2[%c0_39, %c0_40, %c0_41] : memref<3x96x32xf32, #tpu.memory_space<vmem>>, vector<1x96x32xf32>
    %26 = vector.shape_cast %25 : vector<1x96x32xf32> to vector<96x32xf32>
    %cst_42 = arith.constant dense<0.000000e+00> : vector<256x32xf32>
    %27 = tpu.matmul %24, %26, %cst_42 {dimension_numbers = #tpu.dot_dimension_numbers<[1], [0], [0], [1], [0, 0, 1, 1], [], []>} : vector<256x96xf32>, vector<96x32xf32>, vector<256x32xf32> -> vector<256x32xf32>
    %28 = vector.extract_strided_slice %22 {offsets = [2, 0, 0], sizes = [16, 16, 96], strides = [1, 1, 1]} : vector<20x16x96xf32> to vector<16x16x96xf32>
    %29 = vector.shape_cast %28 : vector<16x16x96xf32> to vector<256x96xf32>
    %c1 = arith.constant 1 : index
    %c0_43 = arith.constant 0 : index
    %c0_44 = arith.constant 0 : index
    %30 = vector.load %arg2[%c1, %c0_43, %c0_44] : memref<3x96x32xf32, #tpu.memory_space<vmem>>, vector<1x96x32xf32>
    %31 = vector.shape_cast %30 : vector<1x96x32xf32> to vector<96x32xf32>
    %cst_45 = arith.constant dense<0.000000e+00> : vector<256x32xf32>
    %32 = tpu.matmul %29, %31, %cst_45 {dimension_numbers = #tpu.dot_dimension_numbers<[1], [0], [0], [1], [0, 0, 1, 1], [], []>} : vector<256x96xf32>, vector<96x32xf32>, vector<256x32xf32> -> vector<256x32xf32>
    %33 = arith.addf %27, %32 : vector<256x32xf32>
    %34 = vector.extract_strided_slice %22 {offsets = [4, 0, 0], sizes = [16, 16, 96], strides = [1, 1, 1]} : vector<20x16x96xf32> to vector<16x16x96xf32>
    %35 = vector.shape_cast %34 : vector<16x16x96xf32> to vector<256x96xf32>
    %c2_46 = arith.constant 2 : index
    %c0_47 = arith.constant 0 : index
    %c0_48 = arith.constant 0 : index
    %36 = vector.load %arg2[%c2_46, %c0_47, %c0_48] : memref<3x96x32xf32, #tpu.memory_space<vmem>>, vector<1x96x32xf32>
    %37 = vector.shape_cast %36 : vector<1x96x32xf32> to vector<96x32xf32>
    %cst_49 = arith.constant dense<0.000000e+00> : vector<256x32xf32>
    %38 = tpu.matmul %35, %37, %cst_49 {dimension_numbers = #tpu.dot_dimension_numbers<[1], [0], [0], [1], [0, 0, 1, 1], [], []>} : vector<256x96xf32>, vector<96x32xf32>, vector<256x32xf32> -> vector<256x32xf32>
    %39 = arith.addf %33, %38 : vector<256x32xf32>
    %cst_50 = arith.constant 0.000000e+00 : f32
    %40 = vector.broadcast %cst_50 : f32 to vector<256x32xf32>
    %41 = arith.cmpf oge, %39, %40 : vector<256x32xf32>
    %cst_51 = arith.constant 2.000000e-01 : f32
    %42 = vector.broadcast %cst_51 : f32 to vector<256x32xf32>
    %43 = arith.mulf %42, %39 : vector<256x32xf32>
    %44 = arith.select %41, %39, %43 : vector<256x32xi1>, vector<256x32xf32>
    %45 = vector.shape_cast %44 : vector<256x32xf32> to vector<16x16x32xf32>
    %c1_52 = arith.constant 1 : index
    %c8_53 = arith.constant 8 : index
    %c0_54 = arith.constant 0 : index
    %46 = vector.load %arg6[%c1_52, %c8_53, %c0_54] : memref<18x32x32xf32, #tpu.memory_space<vmem>>, vector<16x16x32xf32>
    tpu.vector_store %arg6[%c1_52, %c8_53, %c0_54], %45 {strides = array<i32>} : memref<18x32x32xf32, #tpu.memory_space<vmem>>, vector<16x16x32xf32>,
    %c0_55 = arith.constant 0 : index
    %c7 = arith.constant 7 : index
    %c0_56 = arith.constant 0 : index
    %47 = vector.load %arg6[%c0_55, %c7, %c0_56] : memref<18x32x32xf32, #tpu.memory_space<vmem>>, vector<18x16x32xf32>
    %c0_57 = arith.constant 0 : index
    %c8_58 = arith.constant 8 : index
    %c0_59 = arith.constant 0 : index
    %48 = vector.load %arg6[%c0_57, %c8_58, %c0_59] : memref<18x32x32xf32, #tpu.memory_space<vmem>>, vector<18x16x32xf32>
    %c0_60 = arith.constant 0 : index
    %c9 = arith.constant 9 : index
    %c0_61 = arith.constant 0 : index
    %49 = vector.load %arg6[%c0_60, %c9, %c0_61] : memref<18x32x32xf32, #tpu.memory_space<vmem>>, vector<18x16x32xf32>
    %50 = tpu.concatenate %47, %48, %49 in 2 : vector<18x16x32xf32>, vector<18x16x32xf32>, vector<18x16x32xf32> -> vector<18x16x96xf32>
    %51 = vector.extract_strided_slice %50 {offsets = [0, 0, 0], sizes = [16, 16, 96], strides = [1, 1, 1]} : vector<18x16x96xf32> to vector<16x16x96xf32>
    %52 = vector.shape_cast %51 : vector<16x16x96xf32> to vector<256x96xf32>
    %c0_62 = arith.constant 0 : index
    %c0_63 = arith.constant 0 : index
    %c0_64 = arith.constant 0 : index
    %53 = vector.load %arg3[%c0_62, %c0_63, %c0_64] : memref<3x96x32xf32, #tpu.memory_space<vmem>>, vector<1x96x32xf32>
    %54 = vector.shape_cast %53 : vector<1x96x32xf32> to vector<96x32xf32>
    %cst_65 = arith.constant dense<0.000000e+00> : vector<256x32xf32>
    %55 = tpu.matmul %52, %54, %cst_65 {dimension_numbers = #tpu.dot_dimension_numbers<[1], [0], [0], [1], [0, 0, 1, 1], [], []>} : vector<256x96xf32>, vector<96x32xf32>, vector<256x32xf32> -> vector<256x32xf32>
    %56 = vector.extract_strided_slice %50 {offsets = [1, 0, 0], sizes = [16, 16, 96], strides = [1, 1, 1]} : vector<18x16x96xf32> to vector<16x16x96xf32>
    %57 = vector.shape_cast %56 : vector<16x16x96xf32> to vector<256x96xf32>
    %c1_66 = arith.constant 1 : index
    %c0_67 = arith.constant 0 : index
    %c0_68 = arith.constant 0 : index
    %58 = vector.load %arg3[%c1_66, %c0_67, %c0_68] : memref<3x96x32xf32, #tpu.memory_space<vmem>>, vector<1x96x32xf32>
    %59 = vector.shape_cast %58 : vector<1x96x32xf32> to vector<96x32xf32>
    %cst_69 = arith.constant dense<0.000000e+00> : vector<256x32xf32>
    %60 = tpu.matmul %57, %59, %cst_69 {dimension_numbers = #tpu.dot_dimension_numbers<[1], [0], [0], [1], [0, 0, 1, 1], [], []>} : vector<256x96xf32>, vector<96x32xf32>, vector<256x32xf32> -> vector<256x32xf32>
    %61 = arith.addf %55, %60 : vector<256x32xf32>
    %62 = vector.extract_strided_slice %50 {offsets = [2, 0, 0], sizes = [16, 16, 96], strides = [1, 1, 1]} : vector<18x16x96xf32> to vector<16x16x96xf32>
    %63 = vector.shape_cast %62 : vector<16x16x96xf32> to vector<256x96xf32>
    %c2_70 = arith.constant 2 : index
    %c0_71 = arith.constant 0 : index
    %c0_72 = arith.constant 0 : index
    %64 = vector.load %arg3[%c2_70, %c0_71, %c0_72] : memref<3x96x32xf32, #tpu.memory_space<vmem>>, vector<1x96x32xf32>
    %65 = vector.shape_cast %64 : vector<1x96x32xf32> to vector<96x32xf32>
    %cst_73 = arith.constant dense<0.000000e+00> : vector<256x32xf32>
    %66 = tpu.matmul %63, %65, %cst_73 {dimension_numbers = #tpu.dot_dimension_numbers<[1], [0], [0], [1], [0, 0, 1, 1], [], []>} : vector<256x96xf32>, vector<96x32xf32>, vector<256x32xf32> -> vector<256x32xf32>
    %67 = arith.addf %61, %66 : vector<256x32xf32>
    %cst_74 = arith.constant 0.000000e+00 : f32
    %68 = vector.broadcast %cst_74 : f32 to vector<256x32xf32>
    %69 = arith.cmpf oge, %67, %68 : vector<256x32xf32>
    %cst_75 = arith.constant 2.000000e-01 : f32
    %70 = vector.broadcast %cst_75 : f32 to vector<256x32xf32>
    %71 = arith.mulf %70, %67 : vector<256x32xf32>
    %72 = arith.select %69, %67, %71 : vector<256x32xi1>, vector<256x32xf32>
    %73 = vector.shape_cast %72 : vector<256x32xf32> to vector<16x16x32xf32>
    %c0_76 = arith.constant 0 : index
    %c0_77 = arith.constant 0 : index
    %c0_78 = arith.constant 0 : index
    %c0_79 = arith.constant 0 : index
    %74 = vector.load %arg4[%c0_76, %c0_77, %c0_78, %c0_79] : memref<1x16x16x32xf32, #tpu.memory_space<vmem>>, vector<1x16x16x32xf32>
    %75 = vector.shape_cast %74 : vector<1x16x16x32xf32> to vector<16x16x32xf32>
    %76 = vector.shape_cast %73 : vector<16x16x32xf32> to vector<1x16x16x32xf32>
    tpu.vector_store %arg4[%c0_76, %c0_77, %c0_78, %c0_79], %76 {strides = array<i32>} : memref<1x16x16x32xf32, #tpu.memory_space<vmem>>, vector<1x16x16x32xf32>,
    return
  }
  func.func @transform_0(%arg0: i32) -> (i32, i32, i32, i32) {
    %c0_i32 = arith.constant 0 : i32
    %c0_i32_0 = arith.constant 0 : i32
    %c0_i32_1 = arith.constant 0 : i32
    %c0_i32_2 = arith.constant 0 : i32
    return %arg0, %c0_i32, %c0_i32_0, %c0_i32_1 : i32, i32, i32, i32
  }
  func.func @transform_1(%arg0: i32) -> (i32, i32, i32) {
    %c0_i32 = arith.constant 0 : i32
    %c0_i32_0 = arith.constant 0 : i32
    %c0_i32_1 = arith.constant 0 : i32
    %c0_i32_2 = arith.constant 0 : i32
    return %c0_i32, %c0_i32_0, %c0_i32_1 : i32, i32, i32
  }
  func.func @transform_2(%arg0: i32) -> (i32, i32, i32) {
    %c0_i32 = arith.constant 0 : i32
    %c0_i32_0 = arith.constant 0 : i32
    %c0_i32_1 = arith.constant 0 : i32
    %c0_i32_2 = arith.constant 0 : i32
    return %c0_i32, %c0_i32_0, %c0_i32_1 : i32, i32, i32
  }
  func.func @transform_3(%arg0: i32) -> (i32, i32, i32, i32) {
    %c0_i32 = arith.constant 0 : i32
    %c0_i32_0 = arith.constant 0 : i32
    %c0_i32_1 = arith.constant 0 : i32
    %c0_i32_2 = arith.constant 0 : i32
    return %arg0, %c0_i32, %c0_i32_0, %c0_i32_1 : i32, i32, i32, i32
  }
}

</mosaic_0001>

<llo_original>
// kernel: tpu_custom_call.1
$region0: #{tpu_custom_call.1}
  #allocation0 [shape = 'u32[]', space=smem, size = 0x4, offset = 0x4, fixed_abs, tag = 'smem constant byte address 0x4 - core index']
  #allocation1 [shape = 'u32[144,128]{1,0:T(1,128)}', space=vmem, size = 0x12000, scoped, tag = 'internal scratch']
  #allocation2 [shape = 'f32[20,32,32]{2,1,0:T(8,128)}', space=vmem, size = 0x50000, scoped, tag = 'scratch operand']
  #allocation3 [shape = 'f32[18,32,32]{2,1,0:T(8,128)}', space=vmem, size = 0x48000, scoped, tag = 'scratch operand']
  %s0 = inlined_call_operand.hbm [shape: f32[2,16,16,32], index: 0, kind: input, shape index: {}]
  %s1 = inlined_call_operand.hbm [shape: f32[3,96,32], index: 1, kind: input, shape index: {}]
  %s2 = inlined_call_operand.hbm [shape: f32[3,96,32], index: 2, kind: input, shape index: {}]
  %s3 = inlined_call_operand.hbm [shape: f32[2,16,16,32], index: 3, kind: output, shape index: {}]
  %s4 = sld [smem:[#allocation0]]
  $region57: #{tpu_custom_call.1} parent=0
    _
  %s6 = ssub.s32 1, %s4
  %s7 = scalar_select 0, %s6, %s4
  $region1: #{tpu_custom_call.1} parent=0
    #allocation4 [shape = 'u8[262144]{0}', space=vmem, size = 0x40000, scoped, tag = 'input window, operand 0']
    #allocation5 [shape = 's32[2]{0}', space=sflag, size = 0x8, scoped, tag = 'scoped memory for tpu_custom_call.1']
    #allocation6 [shape = 's32[2]{0}', space=sflag, size = 0x8, scoped, tag = 'scoped memory for tpu_custom_call.1']
    #allocation7 [shape = 'u8[147456]{0}', space=vmem, size = 0x24000, scoped, tag = 'input window, operand 1, single buffered']
    #allocation8 [shape = 's32[1]{0}', space=sflag, size = 0x4, scoped, tag = 'scoped memory for tpu_custom_call.1']
    #allocation9 [shape = 'u8[147456]{0}', space=vmem, size = 0x24000, scoped, tag = 'input window, operand 2, single buffered']
    #allocation10 [shape = 'u8[262144]{0}', space=vmem, size = 0x40000, scoped, tag = 'output window, operand 0']
    %8 = vsyncpa [#allocation5], 0
    %s9 = scalar_lea.sflag [#allocation5], 1
    %10 = vsyncpa %s9, 0
    %11 = vsyncpa [#allocation8], 0
    %12 = vsyncpa [#allocation6], 0
    %s13 = scalar_lea.sflag [#allocation6], 1
    %14 = vsyncpa %s13, 0
    loop: start=0, step=1, limit=4
    $region2: #{tpu_custom_call.1} parent=1 // loop_pre_header
      _
    $region3: #{tpu_custom_call.1} parent=1 // loop_header
      %s16 = sphi 0, %s20
      %p17 = scmp.ge.s32.totalorder %s16, 4
      %s26 = sphi 0, %s28
      %s29 = sphi 0, %s26
      %s30 = sphi 0, %s29
      %s46 = sphi 0, %s30
      %s50 = sphi 0, %s50
      %s52 = sphi 0, %s50
      %s53 = sphi 0, %s52
      %s67 = sphi 0, %s53
      %s71 = sphi 0, %s71
      %s73 = sphi 0, %s71
      %s74 = sphi 0, %s73
      %s88 = sphi 0, %s74
      %s94 = sphi 0, %s96
      %s97 = sphi 0, %s94
      %s98 = sphi 0, %s97
      %s114 = sphi 0, %s98
    $region4: #{tpu_custom_call.1} parent=1 // loop_header_branch
      %19 = sbr.rel (%p17) target = $region8
    $region5: #{tpu_custom_call.1} parent=1 // loop_body
      %s21 = ssub.s32 %s16, 1
      %s22 = ssub.s32 %s16, 2
      %s23 = sadd.s32 %s16, 1
      %s24 = ssub.s32 %s16, %s23
      %p25 = scmp.eq.s32.totalorder %s24, 0
      %s27 = sadd.s32 %s26, 1
      %s28 = scalar_select %p25, %s26, %s27
      %p31 = pneg %p25
      %p32 = scmp.eq.s32.totalorder %s16, 1
      %p33 = por %p31, %p32
      %p34 = scmp.ne.s32.totalorder %s26, %s29
      %p35 = scmp.eq.s32.totalorder %s16, 0
      %p36 = por %p34, %p35
      %p37 = scmp.ne.s32.totalorder %s26, %s29
      %p38 = scmp.eq.s32.totalorder %s21, 1
      %p39 = por %p37, %p38
      %p40 = scmp.ne.s32.totalorder %s29, %s30
      %p41 = scmp.eq.s32.totalorder %s21, 0
      %p42 = por %p40, %p41
      %p43 = scmp.ne.s32.totalorder %s29, %s30
      %p44 = scmp.eq.s32.totalorder %s22, 1
      %p45 = por %p43, %p44
      %p47 = scmp.ne.s32.totalorder %s30, %s46
      %p48 = scmp.eq.s32.totalorder %s22, 0
      %p49 = por %p47, %p48
      %s51 = sadd.s32 %s50, 1
      %p54 = scmp.eq.s32.totalorder %s16, 1
      %p55 = scmp.ne.s32.totalorder %s50, %s52
      %p56 = scmp.eq.s32.totalorder %s16, 0
      %p57 = por %p55, %p56
      %p58 = scmp.ne.s32.totalorder %s50, %s52
      %p59 = scmp.eq.s32.totalorder %s21, 1
      %p60 = por %p58, %p59
      %p61 = scmp.ne.s32.totalorder %s52, %s53
      %p62 = scmp.eq.s32.totalorder %s21, 0
      %p63 = por %p61, %p62
      %p64 = scmp.ne.s32.totalorder %s52, %s53
      %p65 = scmp.eq.s32.totalorder %s22, 1
      %p66 = por %p64, %p65
      %p68 = scmp.ne.s32.totalorder %s53, %s67
      %p69 = scmp.eq.s32.totalorder %s22, 0
      %p70 = por %p68, %p69
      %s72 = sadd.s32 %s71, 1
      %p75 = scmp.eq.s32.totalorder %s16, 1
      %p76 = scmp.ne.s32.totalorder %s71, %s73
      %p77 = scmp.eq.s32.totalorder %s16, 0
      %p78 = por %p76, %p77
      %p79 = scmp.ne.s32.totalorder %s71, %s73
      %p80 = scmp.eq.s32.totalorder %s21, 1
      %p81 = por %p79, %p80
      %p82 = scmp.ne.s32.totalorder %s73, %s74
      %p83 = scmp.eq.s32.totalorder %s21, 0
      %p84 = por %p82, %p83
      %p85 = scmp.ne.s32.totalorder %s73, %s74
      %p86 = scmp.eq.s32.totalorder %s22, 1
      %p87 = por %p85, %p86
      %p89 = scmp.ne.s32.totalorder %s74, %s88
      %p90 = scmp.eq.s32.totalorder %s22, 0
      %p91 = por %p89, %p90
      %s92 = ssub.s32 %s16, %s23
      %p93 = scmp.eq.s32.totalorder %s92, 0
      %s95 = sadd.s32 %s94, 1
      %s96 = scalar_select %p93, %s94, %s95
      %p99 = pneg %p93
      %p100 = scmp.eq.s32.totalorder %s16, 1
      %p101 = por %p99, %p100
      %p102 = scmp.ne.s32.totalorder %s94, %s97
      %p103 = scmp.eq.s32.totalorder %s16, 0
      %p104 = por %p102, %p103
      %p105 = scmp.ne.s32.totalorder %s94, %s97
      %p106 = scmp.eq.s32.totalorder %s21, 1
      %p107 = por %p105, %p106
      %p108 = scmp.ne.s32.totalorder %s97, %s98
      %p109 = scmp.eq.s32.totalorder %s21, 0
      %p110 = por %p108, %p109
      %p111 = scmp.ne.s32.totalorder %s97, %s98
      %p112 = scmp.eq.s32.totalorder %s22, 1
      %p113 = por %p111, %p112
      %p115 = scmp.ne.s32.totalorder %s98, %s114
      %p116 = scmp.eq.s32.totalorder %s22, 0
      %p117 = por %p115, %p116
      %p118 = scmp.le.s32.totalorder 1, %s16
      %p119 = scmp.lt.s32.totalorder %s16, 3
      %p120 = pnand %p118, %p119
      %p121 = pneg %p120
      // Predicated region
      $region9: #{tpu_custom_call.1} parent=5 // pred_check
        _
      $region10: #{tpu_custom_call.1} parent=5 // pred_check_branch
        %123 = sbr.rel (%p120) target = $region12
      $region11: #{tpu_custom_call.1} parent=5 // pred_region
        %s124 = ssub.s32 %s16, 1
        // Predicated region
        $region13: #{tpu_custom_call.1} parent=11 // pred_check
          %p125 = pneg %p63
        $region14: #{tpu_custom_call.1} parent=11 // pred_check_branch
          %127 = sbr.rel (%p125) target = $region16
        $region15: #{tpu_custom_call.1} parent=11 // pred_region
          %s129 = ssub.s32 4608, 4608
          %130 = vsyncadd [#allocation8], %s129
          %s131 = sshll.u32 [#allocation7], 4
          %s132 = int_to_ptr.vmem [resolvable:$true] %s131
          %137 = dma.hbm_to_vmem [thread:$0]  %s1, 4608, %s132, [#allocation8], 128, 128, 8
        $region16: #{tpu_custom_call.1} parent=11 // pred_fallthru
          _
        // Predicated region
        $region17: #{tpu_custom_call.1} parent=11 // pred_check
          %p138 = pneg %p84
        $region18: #{tpu_custom_call.1} parent=11 // pred_check_branch
          %140 = sbr.rel (%p138) target = $region20
        $region19: #{tpu_custom_call.1} parent=11 // pred_region
          %s142 = ssub.s32 4608, 4608
          %143 = vsyncadd [#allocation8], %s142
          %s144 = sshll.u32 [#allocation9], 4
          %s145 = int_to_ptr.vmem [resolvable:$true] %s144
          %150 = dma.hbm_to_vmem [thread:$0]  %s2, 4608, %s145, [#allocation8], 128, 128, 8
        $region20: #{tpu_custom_call.1} parent=11 // pred_fallthru
          _
      $region12: #{tpu_custom_call.1} parent=5 // pred_fallthru
        _
      %p151 = scmp.lt.s32.totalorder %s16, 2
      // Predicated region
      $region21: #{tpu_custom_call.1} parent=5 // pred_check
        %p152 = pneg %p151
      $region22: #{tpu_custom_call.1} parent=5 // pred_check_branch
        %154 = sbr.rel (%p152) target = $region24
      $region23: #{tpu_custom_call.1} parent=5 // pred_region
        // Predicated region
        $region25: #{tpu_custom_call.1} parent=23 // pred_check
          %p155 = pneg %p36
        $region26: #{tpu_custom_call.1} parent=23 // pred_check_branch
          %157 = sbr.rel (%p155) target = $region28
        $region27: #{tpu_custom_call.1} parent=23 // pred_region
          %s158 = sand.u32 %s26, 1
          %s159 = scalar_lea.sflag [#allocation5], %s158
          %s160 = sand.u32 %s26, 1
          %s161 = smul.addr %s160, 256
          %s162 = scalar_lea.vmem [#allocation4], %s161
          %s164 = ssub.s32 4096, 4096
          %165 = vsyncadd %s159, %s164
          %s166 = smul.addr %s16, 32
          %s167 = smul.addr %s166, 128
          %s168 = scalar_lea.hbm %s0, %s167
          %s169 = sshll.u32 %s162, 4
          %s170 = int_to_ptr.vmem [resolvable:$true] %s169
          %175 = dma.hbm_to_vmem [thread:$0]  %s168, 4096, %s170, %s159, 128, 128, 8
        $region28: #{tpu_custom_call.1} parent=23 // pred_fallthru
          _
      $region24: #{tpu_custom_call.1} parent=5 // pred_fallthru
        _
      %p176 = scmp.le.s32.totalorder 1, %s16
      %p177 = scmp.lt.s32.totalorder %s16, 3
      %p178 = pnand %p176, %p177
      %p179 = pneg %p178
      // Predicated region
      $region29: #{tpu_custom_call.1} parent=5 // pred_check
        _
      $region30: #{tpu_custom_call.1} parent=5 // pred_check_branch
        %181 = sbr.rel (%p178) target = $region32
      $region31: #{tpu_custom_call.1} parent=5 // pred_region
        %s182 = ssub.s32 %s16, 1
        %s183 = sand.u32 %s29, 1
        %s184 = scalar_lea.sflag [#allocation5], %s183
        %s185 = sand.u32 %s29, 1
        %s186 = smul.addr %s185, 256
        %s187 = scalar_lea.vmem [#allocation4], %s186
        // Predicated region
        $region33: #{tpu_custom_call.1} parent=31 // pred_check
          %p188 = pneg %p42
        $region34: #{tpu_custom_call.1} parent=31 // pred_check_branch
          %190 = sbr.rel (%p188) target = $region36
        $region35: #{tpu_custom_call.1} parent=31 // pred_region
          %191 = dma.done %s184, 4096
        $region36: #{tpu_custom_call.1} parent=31 // pred_fallthru
          _
        // Predicated region
        $region37: #{tpu_custom_call.1} parent=31 // pred_check
          %p192 = pneg %p63
        $region38: #{tpu_custom_call.1} parent=31 // pred_check_branch
          %194 = sbr.rel (%p192) target = $region40
        $region39: #{tpu_custom_call.1} parent=31 // pred_region
          %195 = dma.done [#allocation8], 4608
        $region40: #{tpu_custom_call.1} parent=31 // pred_fallthru
          _
        // Predicated region
        $region41: #{tpu_custom_call.1} parent=31 // pred_check
          %p196 = pneg %p84
        $region42: #{tpu_custom_call.1} parent=31 // pred_check_branch
          %198 = sbr.rel (%p196) target = $region44
        $region43: #{tpu_custom_call.1} parent=31 // pred_region
          %199 = dma.done [#allocation8], 4608
        $region44: #{tpu_custom_call.1} parent=31 // pred_fallthru
          _
        %s200 = sand.u32 %s29, 1
        %s201 = scalar_lea.sflag [#allocation5], %s200
        %s202 = sand.u32 %s29, 1
        %s203 = smul.addr %s202, 256
        %s204 = scalar_lea.vmem [#allocation4], %s203
        %p205 = pneg %p42
        %p206 = pneg %p39
        %p207 = pneg %p63
        %p208 = pneg %p60
        %p209 = pneg %p84
        %p210 = pneg %p81
        %p211 = pneg %p110
        %p212 = pneg %p107
        %s213 = sand.u32 %s97, 1
        %s214 = scalar_lea.sflag [#allocation6], %s213
        %s215 = sand.u32 %s97, 1
        %s216 = smul.addr %s215, 256
        %s217 = scalar_lea.vmem [#allocation10], %s216
        %vm218 = vcmask 261120
        %219 = vst.msk [vmem:[#allocation2] sm:$0xff] %vm218, 0.0
        %220 = vst.msk [vmem:[#allocation2 + $0x20] sm:$0xff] %vm218, 0.0
        %221 = vst.msk [vmem:[#allocation2 + $0x40] sm:$0xff] %vm218, 0.0
        %222 = vst.msk [vmem:[#allocation2 + $0x60] sm:$0xff] %vm218, 0.0
        %223 = vst.msk [vmem:[#allocation2 + $0x80] sm:$0xff] %vm218, 0.0
        %224 = vst.msk [vmem:[#allocation2 + $0xa0] sm:$0xff] %vm218, 0.0
        %225 = vst.msk [vmem:[#allocation2 + $0xc0] sm:$0xff] %vm218, 0.0
        %226 = vst.msk [vmem:[#allocation2 + $0xe0] sm:$0xff] %vm218, 0.0
        %227 = vst.msk [vmem:[#allocation2 + $0x100] sm:$0xff] %vm218, 0.0
        %228 = vst.msk [vmem:[#allocation2 + $0x120] sm:$0xff] %vm218, 0.0
        %229 = vst.msk [vmem:[#allocation2 + $0x140] sm:$0xff] %vm218, 0.0
        %230 = vst.msk [vmem:[#allocation2 + $0x160] sm:$0xff] %vm218, 0.0
        %231 = vst.msk [vmem:[#allocation2 + $0x180] sm:$0xff] %vm218, 0.0
        %232 = vst.msk [vmem:[#allocation2 + $0x1a0] sm:$0xff] %vm218, 0.0
        %233 = vst.msk [vmem:[#allocation2 + $0x1c0] sm:$0xff] %vm218, 0.0
        %234 = vst.msk [vmem:[#allocation2 + $0x1e0] sm:$0xff] %vm218, 0.0
        %235 = vst.msk [vmem:[#allocation2 + $0x200] sm:$0xff] %vm218, 0.0
        %236 = vst.msk [vmem:[#allocation2 + $0x220] sm:$0xff] %vm218, 0.0
        %237 = vst.msk [vmem:[#allocation2 + $0x240] sm:$0xff] %vm218, 0.0
        %238 = vst.msk [vmem:[#allocation2 + $0x260] sm:$0xff] %vm218, 0.0
        %239 = vst.msk [vmem:[#allocation2 + $0x18] sm:$0xff] %vm218, 0.0
        %240 = vst.msk [vmem:[#allocation2 + $0x38] sm:$0xff] %vm218, 0.0
        %241 = vst.msk [vmem:[#allocation2 + $0x58] sm:$0xff] %vm218, 0.0
        %242 = vst.msk [vmem:[#allocation2 + $0x78] sm:$0xff] %vm218, 0.0
        %243 = vst.msk [vmem:[#allocation2 + $0x98] sm:$0xff] %vm218, 0.0
        %244 = vst.msk [vmem:[#allocation2 + $0xb8] sm:$0xff] %vm218, 0.0
        %245 = vst.msk [vmem:[#allocation2 + $0xd8] sm:$0xff] %vm218, 0.0
        %246 = vst.msk [vmem:[#allocation2 + $0xf8] sm:$0xff] %vm218, 0.0
        %247 = vst.msk [vmem:[#allocation2 + $0x118] sm:$0xff] %vm218, 0.0
        %248 = vst.msk [vmem:[#allocation2 + $0x138] sm:$0xff] %vm218, 0.0
        %249 = vst.msk [vmem:[#allocation2 + $0x158] sm:$0xff] %vm218, 0.0
        %250 = vst.msk [vmem:[#allocation2 + $0x178] sm:$0xff] %vm218, 0.0
        %251 = vst.msk [vmem:[#allocation2 + $0x198] sm:$0xff] %vm218, 0.0
        %252 = vst.msk [vmem:[#allocation2 + $0x1b8] sm:$0xff] %vm218, 0.0
        %253 = vst.msk [vmem:[#allocation2 + $0x1d8] sm:$0xff] %vm218, 0.0
        %254 = vst.msk [vmem:[#allocation2 + $0x1f8] sm:$0xff] %vm218, 0.0
        %255 = vst.msk [vmem:[#allocation2 + $0x218] sm:$0xff] %vm218, 0.0
        %256 = vst.msk [vmem:[#allocation2 + $0x238] sm:$0xff] %vm218, 0.0
        %257 = vst.msk [vmem:[#allocation2 + $0x258] sm:$0xff] %vm218, 0.0
        %258 = vst.msk [vmem:[#allocation2 + $0x278] sm:$0xff] %vm218, 0.0
        %259 = vst.msk [vmem:[#allocation2] sm:$0xff] %vm218, 0.0
        %260 = vst.msk [vmem:[#allocation2 + $0x8] sm:$0xff] %vm218, 0.0
        %261 = vst.msk [vmem:[#allocation2 + $0x10] sm:$0xff] %vm218, 0.0
        %262 = vst.msk [vmem:[#allocation2 + $0x18] sm:$0xff] %vm218, 0.0
        %263 = vst.msk [vmem:[#allocation2 + $0x20] sm:$0xff] %vm218, 0.0
        %264 = vst.msk [vmem:[#allocation2 + $0x28] sm:$0xff] %vm218, 0.0
        %265 = vst.msk [vmem:[#allocation2 + $0x30] sm:$0xff] %vm218, 0.0
        %266 = vst.msk [vmem:[#allocation2 + $0x38] sm:$0xff] %vm218, 0.0
        %s267 = scalar_lea.vmem [#allocation2], 576
        %268 = vst.msk [vmem:[%s267] sm:$0xff] %vm218, 0.0
        %269 = vst.msk [vmem:[%s267 + $0x8] sm:$0xff] %vm218, 0.0
        %270 = vst.msk [vmem:[%s267 + $0x10] sm:$0xff] %vm218, 0.0
        %271 = vst.msk [vmem:[%s267 + $0x18] sm:$0xff] %vm218, 0.0
        %272 = vst.msk [vmem:[%s267 + $0x20] sm:$0xff] %vm218, 0.0
        %273 = vst.msk [vmem:[%s267 + $0x28] sm:$0xff] %vm218, 0.0
        %274 = vst.msk [vmem:[%s267 + $0x30] sm:$0xff] %vm218, 0.0
        %275 = vst.msk [vmem:[%s267 + $0x38] sm:$0xff] %vm218, 0.0
        %276 = vst.msk [vmem:[#allocation3] sm:$0xff] %vm218, 0.0
        %277 = vst.msk [vmem:[#allocation3 + $0x20] sm:$0xff] %vm218, 0.0
        %278 = vst.msk [vmem:[#allocation3 + $0x40] sm:$0xff] %vm218, 0.0
        %279 = vst.msk [vmem:[#allocation3 + $0x60] sm:$0xff] %vm218, 0.0
        %280 = vst.msk [vmem:[#allocation3 + $0x80] sm:$0xff] %vm218, 0.0
        %281 = vst.msk [vmem:[#allocation3 + $0xa0] sm:$0xff] %vm218, 0.0
        %282 = vst.msk [vmem:[#allocation3 + $0xc0] sm:$0xff] %vm218, 0.0
        %283 = vst.msk [vmem:[#allocation3 + $0xe0] sm:$0xff] %vm218, 0.0
        %284 = vst.msk [vmem:[#allocation3 + $0x100] sm:$0xff] %vm218, 0.0
        %285 = vst.msk [vmem:[#allocation3 + $0x120] sm:$0xff] %vm218, 0.0
        %286 = vst.msk [vmem:[#allocation3 + $0x140] sm:$0xff] %vm218, 0.0
        %287 = vst.msk [vmem:[#allocation3 + $0x160] sm:$0xff] %vm218, 0.0
        %288 = vst.msk [vmem:[#allocation3 + $0x180] sm:$0xff] %vm218, 0.0
        %289 = vst.msk [vmem:[#allocation3 + $0x1a0] sm:$0xff] %vm218, 0.0
        %290 = vst.msk [vmem:[#allocation3 + $0x1c0] sm:$0xff] %vm218, 0.0
        %291 = vst.msk [vmem:[#allocation3 + $0x1e0] sm:$0xff] %vm218, 0.0
        %292 = vst.msk [vmem:[#allocation3 + $0x200] sm:$0xff] %vm218, 0.0
        %293 = vst.msk [vmem:[#allocation3 + $0x220] sm:$0xff] %vm218, 0.0
        %294 = vst.msk [vmem:[#allocation3 + $0x18] sm:$0xff] %vm218, 0.0
        %295 = vst.msk [vmem:[#allocation3 + $0x38] sm:$0xff] %vm218, 0.0
        %296 = vst.msk [vmem:[#allocation3 + $0x58] sm:$0xff] %vm218, 0.0
        %297 = vst.msk [vmem:[#allocation3 + $0x78] sm:$0xff] %vm218, 0.0
        %298 = vst.msk [vmem:[#allocation3 + $0x98] sm:$0xff] %vm218, 0.0
        %299 = vst.msk [vmem:[#allocation3 + $0xb8] sm:$0xff] %vm218, 0.0
        %300 = vst.msk [vmem:[#allocation3 + $0xd8] sm:$0xff] %vm218, 0.0
        %301 = vst.msk [vmem:[#allocation3 + $0xf8] sm:$0xff] %vm218, 0.0
        %302 = vst.msk [vmem:[#allocation3 + $0x118] sm:$0xff] %vm218, 0.0
        %303 = vst.msk [vmem:[#allocation3 + $0x138] sm:$0xff] %vm218, 0.0
        %304 = vst.msk [vmem:[#allocation3 + $0x158] sm:$0xff] %vm218, 0.0
        %305 = vst.msk [vmem:[#allocation3 + $0x178] sm:$0xff] %vm218, 0.0
        %306 = vst.msk [vmem:[#allocation3 + $0x198] sm:$0xff] %vm218, 0.0
        %307 = vst.msk [vmem:[#allocation3 + $0x1b8] sm:$0xff] %vm218, 0.0
        %308 = vst.msk [vmem:[#allocation3 + $0x1d8] sm:$0xff] %vm218, 0.0
        %309 = vst.msk [vmem:[#allocation3 + $0x1f8] sm:$0xff] %vm218, 0.0
        %310 = vst.msk [vmem:[#allocation3 + $0x218] sm:$0xff] %vm218, 0.0
        %311 = vst.msk [vmem:[#allocation3 + $0x238] sm:$0xff] %vm218, 0.0
        %312 = vst.msk [vmem:[#allocation3] sm:$0xff] %vm218, 0.0
        %313 = vst.msk [vmem:[#allocation3 + $0x8] sm:$0xff] %vm218, 0.0
        %314 = vst.msk [vmem:[#allocation3 + $0x10] sm:$0xff] %vm218, 0.0
        %315 = vst.msk [vmem:[#allocation3 + $0x18] sm:$0xff] %vm218, 0.0
        %s316 = scalar_lea.vmem [#allocation3], 544
        %317 = vst.msk [vmem:[%s316] sm:$0xff] %vm218, 0.0
        %318 = vst.msk [vmem:[%s316 + $0x8] sm:$0xff] %vm218, 0.0
        %319 = vst.msk [vmem:[%s316 + $0x10] sm:$0xff] %vm218, 0.0
        %320 = vst.msk [vmem:[%s316 + $0x18] sm:$0xff] %vm218, 0.0
        %v321 = vld [vmem:[%s187] sm:$0xff]
        %v322 = vld [vmem:[%s187 + $0x8] sm:$0xff]
        %v323 = vld [vmem:[%s187 + $0x10] sm:$0xff]
        %v324 = vld [vmem:[%s187 + $0x18] sm:$0xff]
        %v325 = vld [vmem:[%s187 + $0x20] sm:$0xff]
        %v326 = vld [vmem:[%s187 + $0x28] sm:$0xff]
        %v327 = vld [vmem:[%s187 + $0x30] sm:$0xff]
        %v328 = vld [vmem:[%s187 + $0x38] sm:$0xff]
        %v329 = vld [vmem:[%s187 + $0x40] sm:$0xff]
        %v330 = vld [vmem:[%s187 + $0x48] sm:$0xff]
        %v331 = vld [vmem:[%s187 + $0x50] sm:$0xff]
        %v332 = vld [vmem:[%s187 + $0x58] sm:$0xff]
        %v333 = vld [vmem:[%s187 + $0x60] sm:$0xff]
        %v334 = vld [vmem:[%s187 + $0x68] sm:$0xff]
        %v335 = vld [vmem:[%s187 + $0x70] sm:$0xff]
        %v336 = vld [vmem:[%s187 + $0x78] sm:$0xff]
        %v337 = vld [vmem:[%s187 + $0x80] sm:$0xff]
        %v338 = vld [vmem:[%s187 + $0x88] sm:$0xff]
        %v339 = vld [vmem:[%s187 + $0x90] sm:$0xff]
        %v340 = vld [vmem:[%s187 + $0x98] sm:$0xff]
        %v341 = vld [vmem:[%s187 + $0xa0] sm:$0xff]
        %v342 = vld [vmem:[%s187 + $0xa8] sm:$0xff]
        %v343 = vld [vmem:[%s187 + $0xb0] sm:$0xff]
        %v344 = vld [vmem:[%s187 + $0xb8] sm:$0xff]
        %v345 = vld [vmem:[%s187 + $0xc0] sm:$0xff]
        %v346 = vld [vmem:[%s187 + $0xc8] sm:$0xff]
        %v347 = vld [vmem:[%s187 + $0xd0] sm:$0xff]
        %v348 = vld [vmem:[%s187 + $0xd8] sm:$0xff]
        %v349 = vld [vmem:[%s187 + $0xe0] sm:$0xff]
        %v350 = vld [vmem:[%s187 + $0xe8] sm:$0xff]
        %v351 = vld [vmem:[%s187 + $0xf0] sm:$0xff]
        %v352 = vld [vmem:[%s187 + $0xf8] sm:$0xff]
        %s353 = scalar_lea.vmem [#allocation2], 64
        %354 = vst.msk [vmem:[%s353 + $0x8] sm:$0xff] %vm218, %v321
        %355 = vst.msk [vmem:[%s353 + $0x10] sm:$0xff] %vm218, %v322
        %356 = vst.msk [vmem:[%s353 + $0x28] sm:$0xff] %vm218, %v323
        %357 = vst.msk [vmem:[%s353 + $0x30] sm:$0xff] %vm218, %v324
        %358 = vst.msk [vmem:[%s353 + $0x48] sm:$0xff] %vm218, %v325
        %359 = vst.msk [vmem:[%s353 + $0x50] sm:$0xff] %vm218, %v326
        %360 = vst.msk [vmem:[%s353 + $0x68] sm:$0xff] %vm218, %v327
        %361 = vst.msk [vmem:[%s353 + $0x70] sm:$0xff] %vm218, %v328
        %362 = vst.msk [vmem:[%s353 + $0x88] sm:$0xff] %vm218, %v329
        %363 = vst.msk [vmem:[%s353 + $0x90] sm:$0xff] %vm218, %v330
        %364 = vst.msk [vmem:[%s353 + $0xa8] sm:$0xff] %vm218, %v331
        %365 = vst.msk [vmem:[%s353 + $0xb0] sm:$0xff] %vm218, %v332
        %366 = vst.msk [vmem:[%s353 + $0xc8] sm:$0xff] %vm218, %v333
        %367 = vst.msk [vmem:[%s353 + $0xd0] sm:$0xff] %vm218, %v334
        %368 = vst.msk [vmem:[%s353 + $0xe8] sm:$0xff] %vm218, %v335
        %369 = vst.msk [vmem:[%s353 + $0xf0] sm:$0xff] %vm218, %v336
        %370 = vst.msk [vmem:[%s353 + $0x108] sm:$0xff] %vm218, %v337
        %371 = vst.msk [vmem:[%s353 + $0x110] sm:$0xff] %vm218, %v338
        %372 = vst.msk [vmem:[%s353 + $0x128] sm:$0xff] %vm218, %v339
        %373 = vst.msk [vmem:[%s353 + $0x130] sm:$0xff] %vm218, %v340
        %374 = vst.msk [vmem:[%s353 + $0x148] sm:$0xff] %vm218, %v341
        %375 = vst.msk [vmem:[%s353 + $0x150] sm:$0xff] %vm218, %v342
        %376 = vst.msk [vmem:[%s353 + $0x168] sm:$0xff] %vm218, %v343
        %377 = vst.msk [vmem:[%s353 + $0x170] sm:$0xff] %vm218, %v344
        %378 = vst.msk [vmem:[%s353 + $0x188] sm:$0xff] %vm218, %v345
        %379 = vst.msk [vmem:[%s353 + $0x190] sm:$0xff] %vm218, %v346
        %380 = vst.msk [vmem:[%s353 + $0x1a8] sm:$0xff] %vm218, %v347
        %381 = vst.msk [vmem:[%s353 + $0x1b0] sm:$0xff] %vm218, %v348
        %382 = vst.msk [vmem:[%s353 + $0x1c8] sm:$0xff] %vm218, %v349
        %383 = vst.msk [vmem:[%s353 + $0x1d0] sm:$0xff] %vm218, %v350
        %384 = vst.msk [vmem:[%s353 + $0x1e8] sm:$0xff] %vm218, %v351
        %385 = vst.msk [vmem:[%s353 + $0x1f0] sm:$0xff] %vm218, %v352
        %v386 = vld [vmem:[#allocation2 + $0x6] sm:$0xff]
        %v387 = vld [vmem:[#allocation2 + $0xe] sm:$0xff]
        %v388 = vld [vmem:[#allocation2 + $0x26] sm:$0xff]
        %v389 = vld [vmem:[#allocation2 + $0x2e] sm:$0xff]
        %v390 = vld [vmem:[#allocation2 + $0x46] sm:$0xff]
        %v391 = vld [vmem:[#allocation2 + $0x4e] sm:$0xff]
        %v392 = vld [vmem:[#allocation2 + $0x66] sm:$0xff]
        %v393 = vld [vmem:[#allocation2 + $0x6e] sm:$0xff]
        %v394 = vld [vmem:[#allocation2 + $0x86] sm:$0xff]
        %v395 = vld [vmem:[#allocation2 + $0x8e] sm:$0xff]
        %v396 = vld [vmem:[#allocation2 + $0xa6] sm:$0xff]
        %v397 = vld [vmem:[#allocation2 + $0xae] sm:$0xff]
        %v398 = vld [vmem:[#allocation2 + $0xc6] sm:$0xff]
        %v399 = vld [vmem:[#allocation2 + $0xce] sm:$0xff]
        %v400 = vld [vmem:[#allocation2 + $0xe6] sm:$0xff]
        %v401 = vld [vmem:[#allocation2 + $0xee] sm:$0xff]
        %v402 = vld [vmem:[#allocation2 + $0x106] sm:$0xff]
        %v403 = vld [vmem:[#allocation2 + $0x10e] sm:$0xff]
        %v404 = vld [vmem:[#allocation2 + $0x126] sm:$0xff]
        %v405 = vld [vmem:[#allocation2 + $0x12e] sm:$0xff]
        %v406 = vld [vmem:[#allocation2 + $0x146] sm:$0xff]
        %v407 = vld [vmem:[#allocation2 + $0x14e] sm:$0xff]
        %v408 = vld [vmem:[#allocation2 + $0x166] sm:$0xff]
        %v409 = vld [vmem:[#allocation2 + $0x16e] sm:$0xff]
        %v410 = vld [vmem:[#allocation2 + $0x186] sm:$0xff]
        %v411 = vld [vmem:[#allocation2 + $0x18e] sm:$0xff]
        %v412 = vld [vmem:[#allocation2 + $0x1a6] sm:$0xff]
        %v413 = vld [vmem:[#allocation2 + $0x1ae] sm:$0xff]
        %v414 = vld [vmem:[#allocation2 + $0x1c6] sm:$0xff]
        %v415 = vld [vmem:[#allocation2 + $0x1ce] sm:$0xff]
        %v416 = vld [vmem:[#allocation2 + $0x1e6] sm:$0xff]
        %v417 = vld [vmem:[#allocation2 + $0x1ee] sm:$0xff]
        %v418 = vld [vmem:[#allocation2 + $0x206] sm:$0xff]
        %v419 = vld [vmem:[#allocation2 + $0x20e] sm:$0xff]
        %v420 = vld [vmem:[#allocation2 + $0x226] sm:$0xff]
        %v421 = vld [vmem:[#allocation2 + $0x22e] sm:$0xff]
        %v422 = vld [vmem:[#allocation2 + $0x246] sm:$0xff]
        %v423 = vld [vmem:[#allocation2 + $0x24e] sm:$0xff]
        %v424 = vld [vmem:[#allocation2 + $0x266] sm:$0xff]
        %v425 = vld [vmem:[#allocation2 + $0x26e] sm:$0xff]
        %v426 = vld [vmem:[#allocation2 + $0x8] sm:$0xff]
        %v427 = vld [vmem:[#allocation2 + $0x10] sm:$0xff]
        %v428 = vld [vmem:[#allocation2 + $0x28] sm:$0xff]
        %v429 = vld [vmem:[#allocation2 + $0x30] sm:$0xff]
        %v430 = vld [vmem:[#allocation2 + $0x48] sm:$0xff]
        %v431 = vld [vmem:[#allocation2 + $0x50] sm:$0xff]
        %v432 = vld [vmem:[#allocation2 + $0x68] sm:$0xff]
        %v433 = vld [vmem:[#allocation2 + $0x70] sm:$0xff]
        %v434 = vld [vmem:[#allocation2 + $0x88] sm:$0xff]
        %v435 = vld [vmem:[#allocation2 + $0x90] sm:$0xff]
        %v436 = vld [vmem:[#allocation2 + $0xa8] sm:$0xff]
        %v437 = vld [vmem:[#allocation2 + $0xb0] sm:$0xff]
        %v438 = vld [vmem:[#allocation2 + $0xc8] sm:$0xff]
        %v439 = vld [vmem:[#allocation2 + $0xd0] sm:$0xff]
        %v440 = vld [vmem:[#allocation2 + $0xe8] sm:$0xff]
        %v441 = vld [vmem:[#allocation2 + $0xf0] sm:$0xff]
        %v442 = vld [vmem:[#allocation2 + $0x108] sm:$0xff]
        %v443 = vld [vmem:[#allocation2 + $0x110] sm:$0xff]
        %v444 = vld [vmem:[#allocation2 + $0x128] sm:$0xff]
        %v445 = vld [vmem:[#allocation2 + $0x130] sm:$0xff]
        %v446 = vld [vmem:[#allocation2 + $0x148] sm:$0xff]
        %v447 = vld [vmem:[#allocation2 + $0x150] sm:$0xff]
        %v448 = vld [vmem:[#allocation2 + $0x168] sm:$0xff]
        %v449 = vld [vmem:[#allocation2 + $0x170] sm:$0xff]
        %v450 = vld [vmem:[#allocation2 + $0x188] sm:$0xff]
        %v451 = vld [vmem:[#allocation2 + $0x190] sm:$0xff]
        %v452 = vld [vmem:[#allocation2 + $0x1a8] sm:$0xff]
        %v453 = vld [vmem:[#allocation2 + $0x1b0] sm:$0xff]
        %v454 = vld [vmem:[#allocation2 + $0x1c8] sm:$0xff]
        %v455 = vld [vmem:[#allocation2 + $0x1d0] sm:$0xff]
        %v456 = vld [vmem:[#allocation2 + $0x1e8] sm:$0xff]
        %v457 = vld [vmem:[#allocation2 + $0x1f0] sm:$0xff]
        %v458 = vld [vmem:[#allocation2 + $0x208] sm:$0xff]
        %v459 = vld [vmem:[#allocation2 + $0x210] sm:$0xff]
        %v460 = vld [vmem:[#allocation2 + $0x228] sm:$0xff]
        %v461 = vld [vmem:[#allocation2 + $0x230] sm:$0xff]
        %v462 = vld [vmem:[#allocation2 + $0x248] sm:$0xff]
        %v463 = vld [vmem:[#allocation2 + $0x250] sm:$0xff]
        %v464 = vld [vmem:[#allocation2 + $0x268] sm:$0xff]
        %v465 = vld [vmem:[#allocation2 + $0x270] sm:$0xff]
        %v466 = vld [vmem:[#allocation2 + $0xa] sm:$0xff]
        %v467 = vld [vmem:[#allocation2 + $0x12] sm:$0xff]
        %v468 = vld [vmem:[#allocation2 + $0x2a] sm:$0xff]
        %v469 = vld [vmem:[#allocation2 + $0x32] sm:$0xff]
        %v470 = vld [vmem:[#allocation2 + $0x4a] sm:$0xff]
        %v471 = vld [vmem:[#allocation2 + $0x52] sm:$0xff]
        %v472 = vld [vmem:[#allocation2 + $0x6a] sm:$0xff]
        %v473 = vld [vmem:[#allocation2 + $0x72] sm:$0xff]
        %v474 = vld [vmem:[#allocation2 + $0x8a] sm:$0xff]
        %v475 = vld [vmem:[#allocation2 + $0x92] sm:$0xff]
        %v476 = vld [vmem:[#allocation2 + $0xaa] sm:$0xff]
        %v477 = vld [vmem:[#allocation2 + $0xb2] sm:$0xff]
        %v478 = vld [vmem:[#allocation2 + $0xca] sm:$0xff]
        %v479 = vld [vmem:[#allocation2 + $0xd2] sm:$0xff]
        %v480 = vld [vmem:[#allocation2 + $0xea] sm:$0xff]
        %v481 = vld [vmem:[#allocation2 + $0xf2] sm:$0xff]
        %v482 = vld [vmem:[#allocation2 + $0x10a] sm:$0xff]
        %v483 = vld [vmem:[#allocation2 + $0x112] sm:$0xff]
        %v484 = vld [vmem:[#allocation2 + $0x12a] sm:$0xff]
        %v485 = vld [vmem:[#allocation2 + $0x132] sm:$0xff]
        %v486 = vld [vmem:[#allocation2 + $0x14a] sm:$0xff]
        %v487 = vld [vmem:[#allocation2 + $0x152] sm:$0xff]
        %v488 = vld [vmem:[#allocation2 + $0x16a] sm:$0xff]
        %v489 = vld [vmem:[#allocation2 + $0x172] sm:$0xff]
        %v490 = vld [vmem:[#allocation2 + $0x18a] sm:$0xff]
        %v491 = vld [vmem:[#allocation2 + $0x192] sm:$0xff]
        %v492 = vld [vmem:[#allocation2 + $0x1aa] sm:$0xff]
        %v493 = vld [vmem:[#allocation2 + $0x1b2] sm:$0xff]
        %v494 = vld [vmem:[#allocation2 + $0x1ca] sm:$0xff]
        %v495 = vld [vmem:[#allocation2 + $0x1d2] sm:$0xff]
        %v496 = vld [vmem:[#allocation2 + $0x1ea] sm:$0xff]
        %v497 = vld [vmem:[#allocation2 + $0x1f2] sm:$0xff]
        %v498 = vld [vmem:[#allocation2 + $0x20a] sm:$0xff]
        %v499 = vld [vmem:[#allocation2 + $0x212] sm:$0xff]
        %v500 = vld [vmem:[#allocation2 + $0x22a] sm:$0xff]
        %v501 = vld [vmem:[#allocation2 + $0x232] sm:$0xff]
        %v502 = vld [vmem:[#allocation2 + $0x24a] sm:$0xff]
        %v503 = vld [vmem:[#allocation2 + $0x252] sm:$0xff]
        %v504 = vld [vmem:[#allocation2 + $0x26a] sm:$0xff]
        %v505 = vld [vmem:[#allocation2 + $0x272] sm:$0xff]
        %546 = vrot.lane.b32.xlu0 %v426, 32
        %v547 = vpop.permute.xlu0 %546
        %548 = vrot.lane.b32.xlu0 %v427, 32
        %v549 = vpop.permute.xlu0 %548
        %550 = vrot.lane.b32.xlu0 %v428, 32
        %v551 = vpop.permute.xlu0 %550
        %552 = vrot.lane.b32.xlu0 %v429, 32
        %v553 = vpop.permute.xlu0 %552
        %554 = vrot.lane.b32.xlu0 %v430, 32
        %v555 = vpop.permute.xlu0 %554
        %556 = vrot.lane.b32.xlu0 %v431, 32
        %v557 = vpop.permute.xlu0 %556
        %558 = vrot.lane.b32.xlu0 %v432, 32
        %v559 = vpop.permute.xlu0 %558
        %560 = vrot.lane.b32.xlu0 %v433, 32
        %v561 = vpop.permute.xlu0 %560
        %562 = vrot.lane.b32.xlu0 %v434, 32
        %v563 = vpop.permute.xlu0 %562
        %564 = vrot.lane.b32.xlu0 %v435, 32
        %v565 = vpop.permute.xlu0 %564
        %566 = vrot.lane.b32.xlu0 %v436, 32
        %v567 = vpop.permute.xlu0 %566
        %568 = vrot.lane.b32.xlu0 %v437, 32
        %v569 = vpop.permute.xlu0 %568
        %570 = vrot.lane.b32.xlu0 %v438, 32
        %v571 = vpop.permute.xlu0 %570
        %572 = vrot.lane.b32.xlu0 %v439, 32
        %v573 = vpop.permute.xlu0 %572
        %574 = vrot.lane.b32.xlu0 %v440, 32
        %v575 = vpop.permute.xlu0 %574
        %576 = vrot.lane.b32.xlu0 %v441, 32
        %v577 = vpop.permute.xlu0 %576
        %578 = vrot.lane.b32.xlu0 %v442, 32
        %v579 = vpop.permute.xlu0 %578
        %580 = vrot.lane.b32.xlu0 %v443, 32
        %v581 = vpop.permute.xlu0 %580
        %582 = vrot.lane.b32.xlu0 %v444, 32
        %v583 = vpop.permute.xlu0 %582
        %584 = vrot.lane.b32.xlu0 %v445, 32
        %v585 = vpop.permute.xlu0 %584
        %586 = vrot.lane.b32.xlu0 %v446, 32
        %v587 = vpop.permute.xlu0 %586
        %588 = vrot.lane.b32.xlu0 %v447, 32
        %v589 = vpop.permute.xlu0 %588
        %590 = vrot.lane.b32.xlu0 %v448, 32
        %v591 = vpop.permute.xlu0 %590
        %592 = vrot.lane.b32.xlu0 %v449, 32
        %v593 = vpop.permute.xlu0 %592
        %594 = vrot.lane.b32.xlu0 %v450, 32
        %v595 = vpop.permute.xlu0 %594
        %596 = vrot.lane.b32.xlu0 %v451, 32
        %v597 = vpop.permute.xlu0 %596
        %598 = vrot.lane.b32.xlu0 %v452, 32
        %v599 = vpop.permute.xlu0 %598
        %600 = vrot.lane.b32.xlu0 %v453, 32
        %v601 = vpop.permute.xlu0 %600
        %602 = vrot.lane.b32.xlu0 %v454, 32
        %v603 = vpop.permute.xlu0 %602
        %604 = vrot.lane.b32.xlu0 %v455, 32
        %v605 = vpop.permute.xlu0 %604
        %606 = vrot.lane.b32.xlu0 %v456, 32
        %v607 = vpop.permute.xlu0 %606
        %608 = vrot.lane.b32.xlu0 %v457, 32
        %v609 = vpop.permute.xlu0 %608
        %610 = vrot.lane.b32.xlu0 %v458, 32
        %v611 = vpop.permute.xlu0 %610
        %612 = vrot.lane.b32.xlu0 %v459, 32
        %v613 = vpop.permute.xlu0 %612
        %614 = vrot.lane.b32.xlu0 %v460, 32
        %v615 = vpop.permute.xlu0 %614
        %616 = vrot.lane.b32.xlu0 %v461, 32
        %v617 = vpop.permute.xlu0 %616
        %618 = vrot.lane.b32.xlu0 %v462, 32
        %v619 = vpop.permute.xlu0 %618
        %620 = vrot.lane.b32.xlu0 %v463, 32
        %v621 = vpop.permute.xlu0 %620
        %622 = vrot.lane.b32.xlu0 %v464, 32
        %v623 = vpop.permute.xlu0 %622
        %624 = vrot.lane.b32.xlu0 %v465, 32
        %v625 = vpop.permute.xlu0 %624
        %706 = vrot.lane.b32.xlu0 %v466, 64
        %v707 = vpop.permute.xlu0 %706
        %708 = vrot.lane.b32.xlu0 %v467, 64
        %v709 = vpop.permute.xlu0 %708
        %710 = vrot.lane.b32.xlu0 %v468, 64
        %v711 = vpop.permute.xlu0 %710
        %712 = vrot.lane.b32.xlu0 %v469, 64
        %v713 = vpop.permute.xlu0 %712
        %714 = vrot.lane.b32.xlu0 %v470, 64
        %v715 = vpop.permute.xlu0 %714
        %716 = vrot.lane.b32.xlu0 %v471, 64
        %v717 = vpop.permute.xlu0 %716
        %718 = vrot.lane.b32.xlu0 %v472, 64
        %v719 = vpop.permute.xlu0 %718
        %720 = vrot.lane.b32.xlu0 %v473, 64
        %v721 = vpop.permute.xlu0 %720
        %722 = vrot.lane.b32.xlu0 %v474, 64
        %v723 = vpop.permute.xlu0 %722
        %724 = vrot.lane.b32.xlu0 %v475, 64
        %v725 = vpop.permute.xlu0 %724
        %726 = vrot.lane.b32.xlu0 %v476, 64
        %v727 = vpop.permute.xlu0 %726
        %728 = vrot.lane.b32.xlu0 %v477, 64
        %v729 = vpop.permute.xlu0 %728
        %730 = vrot.lane.b32.xlu0 %v478, 64
        %v731 = vpop.permute.xlu0 %730
        %732 = vrot.lane.b32.xlu0 %v479, 64
        %v733 = vpop.permute.xlu0 %732
        %734 = vrot.lane.b32.xlu0 %v480, 64
        %v735 = vpop.permute.xlu0 %734
        %736 = vrot.lane.b32.xlu0 %v481, 64
        %v737 = vpop.permute.xlu0 %736
        %738 = vrot.lane.b32.xlu0 %v482, 64
        %v739 = vpop.permute.xlu0 %738
        %740 = vrot.lane.b32.xlu0 %v483, 64
        %v741 = vpop.permute.xlu0 %740
        %742 = vrot.lane.b32.xlu0 %v484, 64
        %v743 = vpop.permute.xlu0 %742
        %744 = vrot.lane.b32.xlu0 %v485, 64
        %v745 = vpop.permute.xlu0 %744
        %746 = vrot.lane.b32.xlu0 %v486, 64
        %v747 = vpop.permute.xlu0 %746
        %748 = vrot.lane.b32.xlu0 %v487, 64
        %v749 = vpop.permute.xlu0 %748
        %750 = vrot.lane.b32.xlu0 %v488, 64
        %v751 = vpop.permute.xlu0 %750
        %752 = vrot.lane.b32.xlu0 %v489, 64
        %v753 = vpop.permute.xlu0 %752
        %754 = vrot.lane.b32.xlu0 %v490, 64
        %v755 = vpop.permute.xlu0 %754
        %756 = vrot.lane.b32.xlu0 %v491, 64
        %v757 = vpop.permute.xlu0 %756
        %758 = vrot.lane.b32.xlu0 %v492, 64
        %v759 = vpop.permute.xlu0 %758
        %760 = vrot.lane.b32.xlu0 %v493, 64
        %v761 = vpop.permute.xlu0 %760
        %762 = vrot.lane.b32.xlu0 %v494, 64
        %v763 = vpop.permute.xlu0 %762
        %764 = vrot.lane.b32.xlu0 %v495, 64
        %v765 = vpop.permute.xlu0 %764
        %766 = vrot.lane.b32.xlu0 %v496, 64
        %v767 = vpop.permute.xlu0 %766
        %768 = vrot.lane.b32.xlu0 %v497, 64
        %v769 = vpop.permute.xlu0 %768
        %770 = vrot.lane.b32.xlu0 %v498, 64
        %v771 = vpop.permute.xlu0 %770
        %772 = vrot.lane.b32.xlu0 %v499, 64
        %v773 = vpop.permute.xlu0 %772
        %774 = vrot.lane.b32.xlu0 %v500, 64
        %v775 = vpop.permute.xlu0 %774
        %776 = vrot.lane.b32.xlu0 %v501, 64
        %v777 = vpop.permute.xlu0 %776
        %778 = vrot.lane.b32.xlu0 %v502, 64
        %v779 = vpop.permute.xlu0 %778
        %780 = vrot.lane.b32.xlu0 %v503, 64
        %v781 = vpop.permute.xlu0 %780
        %782 = vrot.lane.b32.xlu0 %v504, 64
        %v783 = vpop.permute.xlu0 %782
        %784 = vrot.lane.b32.xlu0 %v505, 64
        %v785 = vpop.permute.xlu0 %784
        %v826 = vsel %vm218, %v386, %v547
        %v827 = vsel %vm218, %v387, %v549
        %v828 = vsel %vm218, %v388, %v551
        %v829 = vsel %vm218, %v389, %v553
        %v830 = vsel %vm218, %v390, %v555
        %v831 = vsel %vm218, %v391, %v557
        %v832 = vsel %vm218, %v392, %v559
        %v833 = vsel %vm218, %v393, %v561
        %v834 = vsel %vm218, %v394, %v563
        %v835 = vsel %vm218, %v395, %v565
        %v836 = vsel %vm218, %v396, %v567
        %v837 = vsel %vm218, %v397, %v569
        %v838 = vsel %vm218, %v398, %v571
        %v839 = vsel %vm218, %v399, %v573
        %v840 = vsel %vm218, %v400, %v575
        %v841 = vsel %vm218, %v401, %v577
        %v842 = vsel %vm218, %v402, %v579
        %v843 = vsel %vm218, %v403, %v581
        %v844 = vsel %vm218, %v404, %v583
        %v845 = vsel %vm218, %v405, %v585
        %v846 = vsel %vm218, %v406, %v587
        %v847 = vsel %vm218, %v407, %v589
        %v848 = vsel %vm218, %v408, %v591
        %v849 = vsel %vm218, %v409, %v593
        %v850 = vsel %vm218, %v410, %v595
        %v851 = vsel %vm218, %v411, %v597
        %v852 = vsel %vm218, %v412, %v599
        %v853 = vsel %vm218, %v413, %v601
        %v854 = vsel %vm218, %v414, %v603
        %v855 = vsel %vm218, %v415, %v605
        %v856 = vsel %vm218, %v416, %v607
        %v857 = vsel %vm218, %v417, %v609
        %v858 = vsel %vm218, %v418, %v611
        %v859 = vsel %vm218, %v419, %v613
        %v860 = vsel %vm218, %v420, %v615
        %v861 = vsel %vm218, %v421, %v617
        %v862 = vsel %vm218, %v422, %v619
        %v863 = vsel %vm218, %v423, %v621
        %v864 = vsel %vm218, %v424, %v623
        %v865 = vsel %vm218, %v425, %v625
        %vm866 = vcmask 523264
        %v867 = vsel %vm866, %v826, %v707
        %v868 = vsel %vm866, %v827, %v709
        %v869 = vsel %vm866, %v828, %v711
        %v870 = vsel %vm866, %v829, %v713
        %v871 = vsel %vm866, %v830, %v715
        %v872 = vsel %vm866, %v831, %v717
        %v873 = vsel %vm866, %v832, %v719
        %v874 = vsel %vm866, %v833, %v721
        %v875 = vsel %vm866, %v834, %v723
        %v876 = vsel %vm866, %v835, %v725
        %v877 = vsel %vm866, %v836, %v727
        %v878 = vsel %vm866, %v837, %v729
        %v879 = vsel %vm866, %v838, %v731
        %v880 = vsel %vm866, %v839, %v733
        %v881 = vsel %vm866, %v840, %v735
        %v882 = vsel %vm866, %v841, %v737
        %v883 = vsel %vm866, %v842, %v739
        %v884 = vsel %vm866, %v843, %v741
        %v885 = vsel %vm866, %v844, %v743
        %v886 = vsel %vm866, %v845, %v745
        %v887 = vsel %vm866, %v846, %v747
        %v888 = vsel %vm866, %v847, %v749
        %v889 = vsel %vm866, %v848, %v751
        %v890 = vsel %vm866, %v849, %v753
        %v891 = vsel %vm866, %v850, %v755
        %v892 = vsel %vm866, %v851, %v757
        %v893 = vsel %vm866, %v852, %v759
        %v894 = vsel %vm866, %v853, %v761
        %v895 = vsel %vm866, %v854, %v763
        %v896 = vsel %vm866, %v855, %v765
        %v897 = vsel %vm866, %v856, %v767
        %v898 = vsel %vm866, %v857, %v769
        %v899 = vsel %vm866, %v858, %v771
        %v900 = vsel %vm866, %v859, %v773
        %v901 = vsel %vm866, %v860, %v775
        %v902 = vsel %vm866, %v861, %v777
        %v903 = vsel %vm866, %v862, %v779
        %v904 = vsel %vm866, %v863, %v781
        %v905 = vsel %vm866, %v864, %v783
        %v906 = vsel %vm866, %v865, %v785
        %v907 = vld [vmem:[#allocation7] sm:$0xff]
        %v908 = vld [vmem:[#allocation7 + $0x8] sm:$0xff]
        %v909 = vld [vmem:[#allocation7 + $0x10] sm:$0xff]
        %v910 = vld [vmem:[#allocation7 + $0x18] sm:$0xff]
        %v911 = vld [vmem:[#allocation7 + $0x20] sm:$0xff]
        %v912 = vld [vmem:[#allocation7 + $0x28] sm:$0xff]
        %v913 = vld [vmem:[#allocation7 + $0x30] sm:$0xff]
        %v914 = vld [vmem:[#allocation7 + $0x38] sm:$0xff]
        %v915 = vld [vmem:[#allocation7 + $0x40] sm:$0xff]
        %v916 = vld [vmem:[#allocation7 + $0x48] sm:$0xff]
        %v917 = vld [vmem:[#allocation7 + $0x50] sm:$0xff]
        %v918 = vld [vmem:[#allocation7 + $0x58] sm:$0xff]
        %s919 = scalar_lea.vmem [#allocation7], 96
        %v920 = vld [vmem:[%s919] sm:$0xff]
        %v921 = vld [vmem:[%s919 + $0x8] sm:$0xff]
        %v922 = vld [vmem:[%s919 + $0x10] sm:$0xff]
        %v923 = vld [vmem:[%s919 + $0x18] sm:$0xff]
        %v924 = vld [vmem:[%s919 + $0x20] sm:$0xff]
        %v925 = vld [vmem:[%s919 + $0x28] sm:$0xff]
        %v926 = vld [vmem:[%s919 + $0x30] sm:$0xff]
        %v927 = vld [vmem:[%s919 + $0x38] sm:$0xff]
        %v928 = vld [vmem:[%s919 + $0x40] sm:$0xff]
        %v929 = vld [vmem:[%s919 + $0x48] sm:$0xff]
        %v930 = vld [vmem:[%s919 + $0x50] sm:$0xff]
        %v931 = vld [vmem:[%s919 + $0x58] sm:$0xff]
        %vm932 = vcmask 785408
        %v934 = vsel %vm932, %v871, 0
        %v937 = vsel %vm932, %v872, 0
        %v940 = vsel %vm932, %v873, 0
        %v943 = vsel %vm932, %v874, 0
        %v946 = vsel %vm932, %v875, 0
        %v949 = vsel %vm932, %v876, 0
        %v952 = vsel %vm932, %v877, 0
        %v955 = vsel %vm932, %v878, 0
        %v958 = vsel %vm932, %v879, 0
        %v961 = vsel %vm932, %v880, 0
        %v964 = vsel %vm932, %v881, 0
        %v967 = vsel %vm932, %v882, 0
        %v970 = vsel %vm932, %v883, 0
        %v973 = vsel %vm932, %v884, 0
        %v976 = vsel %vm932, %v885, 0
        %v979 = vsel %vm932, %v886, 0
        %v982 = vsel %vm932, %v887, 0
        %v985 = vsel %vm932, %v888, 0
        %v988 = vsel %vm932, %v889, 0
        %v991 = vsel %vm932, %v890, 0
        %v994 = vsel %vm932, %v891, 0
        %v997 = vsel %vm932, %v892, 0
        %v1000 = vsel %vm932, %v893, 0
        %v1003 = vsel %vm932, %v894, 0
        %v1006 = vsel %vm932, %v895, 0
        %v1009 = vsel %vm932, %v896, 0
        %v1012 = vsel %vm932, %v897, 0
        %v1015 = vsel %vm932, %v898, 0
        %v1018 = vsel %vm932, %v899, 0
        %v1021 = vsel %vm932, %v900, 0
        %v1024 = vsel %vm932, %v901, 0
        %v1027 = vsel %vm932, %v902, 0
        %1029 = vmatprep.subr.mxu0 0.0
        %1030 = vmatpush1.msra.mxu0 %v920
        %1031 = vmatprep.subr.mxu0 0.0
        %1032 = vmatpush1.msra.mxu0 %v921
        %1033 = vmatprep.subr.mxu0 0.0
        %1034 = vmatpush1.msra.mxu0 %v922
        %1035 = vmatprep.subr.mxu0 0.0
        %1036 = vmatpush1.msra.mxu0 %v923
        %1037 = vmatprep.subr.mxu0 0.0
        %1038 = vmatpush1.msra.mxu0 %v924
        %1039 = vmatprep.subr.mxu0 0.0
        %1040 = vmatpush1.msra.mxu0 %v925
        %1041 = vmatprep.subr.mxu0 0.0
        %1042 = vmatpush1.msra.mxu0 %v926
        %1043 = vmatprep.subr.mxu0 0.0
        %1044 = vmatpush1.msra.mxu0 %v927
        %1045 = vmatprep.subr.mxu0 0.0
        %1046 = vmatpush1.msra.mxu0 %v928
        %1047 = vmatprep.subr.mxu0 0.0
        %1048 = vmatpush1.msra.mxu0 %v929
        %1049 = vmatprep.subr.mxu0 0.0
        %1050 = vmatpush1.msra.mxu0 %v930
        %1051 = vmatprep.subr.mxu0 0.0
        %1052 = vmatpush1.msra.mxu0 %v931
        %1053 = vmatprep.subr.mxu0 0.0
        %1054 = vmatpush1.msra.mxu0 0.0
        %1055 = vmatprep.subr.mxu0 0.0
        %1056 = vmatpush1.msra.mxu0 0.0
        %1057 = vmatprep.subr.mxu0 0.0
        %1058 = vmatpush1.msra.mxu0 0.0
        %1059 = vmatprep.subr.mxu0 0.0
        %1060 = vmatpush1.msra.mxu0 0.0
        %1061 = vmatprep.subr.mxu0 0.0
        %1062 = vmatpush1.msra.mxu0 0.0
        %1063 = vmatprep.subr.mxu0 0.0
        %1064 = vmatpush1.msra.mxu0 0.0
        %1065 = vmatprep.subr.mxu0 0.0
        %1066 = vmatpush1.msra.mxu0 0.0
        %1067 = vmatprep.subr.mxu0 0.0
        %1068 = vmatpush1.msra.mxu0 0.0
        %1069 = vmatprep.subr.mxu0 0.0
        %1070 = vmatpush1.msra.mxu0 0.0
        %1071 = vmatprep.subr.mxu0 0.0
        %1072 = vmatpush1.msra.mxu0 0.0
        %1073 = vmatprep.subr.mxu0 0.0
        %1074 = vmatpush1.msra.mxu0 0.0
        %1075 = vmatprep.subr.mxu0 0.0
        %1076 = vmatpush1.msra.mxu0 0.0
        %1077 = vmatprep.subr.mxu0 0.0
        %1078 = vmatpush1.msra.mxu0 0.0
        %1079 = vmatprep.subr.mxu0 0.0
        %1080 = vmatpush1.msra.mxu0 0.0
        %1081 = vmatprep.subr.mxu0 0.0
        %1082 = vmatpush1.msra.mxu0 0.0
        %1083 = vmatprep.subr.mxu0 0.0
        %1084 = vmatpush1.msra.mxu0 0.0
        %1085 = vmatprep.subr.mxu0 0.0
        %1086 = vmatpush1.msra.mxu0 0.0
        %1087 = vmatprep.subr.mxu0 0.0
        %1088 = vmatpush1.msra.mxu0 0.0
        %1089 = vmatprep.subr.mxu0 0.0
        %1090 = vmatpush1.msra.mxu0 0.0
        %1091 = vmatprep.subr.mxu0 0.0
        %1092 = vmatpush1.msra.mxu0 0.0
        %1093 = vmatprep.mubr.f32.mxu0 0.0
        %1094 = vmatmul.mubr.f32.gmra.mrb[0].mxu0 %v934
        %v1095 = vpop.f32.mrb[0].mxu0
        %v1096 = vadd.f32 0.0, %v1095
        %v1097 = vpop.f32.mrb[0].mxu0
        %1098 = vmatprep.mubr.f32.mxu0 0.0
        %1099 = vmatmul.mubr.f32.gmra.mrb[0].mxu0 %v937
        %v1100 = vpop.f32.mrb[0].mxu0
        %v1101 = vadd.f32 0.0, %v1100
        %v1102 = vpop.f32.mrb[0].mxu0
        %1103 = vmatprep.mubr.f32.mxu0 0.0
        %1104 = vmatmul.mubr.f32.gmra.mrb[0].mxu0 %v940
        %v1105 = vpop.f32.mrb[0].mxu0
        %v1106 = vadd.f32 0.0, %v1105
        %v1107 = vpop.f32.mrb[0].mxu0
        %1108 = vmatprep.mubr.f32.mxu0 0.0
        %1109 = vmatmul.mubr.f32.gmra.mrb[0].mxu0 %v943
        %v1110 = vpop.f32.mrb[0].mxu0
        %v1111 = vadd.f32 0.0, %v1110
        %v1112 = vpop.f32.mrb[0].mxu0
        %1113 = vmatprep.mubr.f32.mxu0 0.0
        %1114 = vmatmul.mubr.f32.gmra.mrb[0].mxu0 %v946
        %v1115 = vpop.f32.mrb[0].mxu0
        %v1116 = vadd.f32 0.0, %v1115
        %v1117 = vpop.f32.mrb[0].mxu0
        %1118 = vmatprep.mubr.f32.mxu0 0.0
        %1119 = vmatmul.mubr.f32.gmra.mrb[0].mxu0 %v949
        %v1120 = vpop.f32.mrb[0].mxu0
        %v1121 = vadd.f32 0.0, %v1120
        %v1122 = vpop.f32.mrb[0].mxu0
        %1123 = vmatprep.mubr.f32.mxu0 0.0
        %1124 = vmatmul.mubr.f32.gmra.mrb[0].mxu0 %v952
        %v1125 = vpop.f32.mrb[0].mxu0
        %v1126 = vadd.f32 0.0, %v1125
        %v1127 = vpop.f32.mrb[0].mxu0
        %1128 = vmatprep.mubr.f32.mxu0 0.0
        %1129 = vmatmul.mubr.f32.gmra.mrb[0].mxu0 %v955
        %v1130 = vpop.f32.mrb[0].mxu0
        %v1131 = vadd.f32 0.0, %v1130
        %v1132 = vpop.f32.mrb[0].mxu0
        %1133 = vmatprep.mubr.f32.mxu0 0.0
        %1134 = vmatmul.mubr.f32.gmra.mrb[0].mxu0 %v958
        %v1135 = vpop.f32.mrb[0].mxu0
        %v1136 = vadd.f32 0.0, %v1135
        %v1137 = vpop.f32.mrb[0].mxu0
        %1138 = vmatprep.mubr.f32.mxu0 0.0
        %1139 = vmatmul.mubr.f32.gmra.mrb[0].mxu0 %v961
        %v1140 = vpop.f32.mrb[0].mxu0
        %v1141 = vadd.f32 0.0, %v1140
        %v1142 = vpop.f32.mrb[0].mxu0
        %1143 = vmatprep.mubr.f32.mxu0 0.0
        %1144 = vmatmul.mubr.f32.gmra.mrb[0].mxu0 %v964
        %v1145 = vpop.f32.mrb[0].mxu0
        %v1146 = vadd.f32 0.0, %v1145
        %v1147 = vpop.f32.mrb[0].mxu0
        %1148 = vmatprep.mubr.f32.mxu0 0.0
        %1149 = vmatmul.mubr.f32.gmra.mrb[0].mxu0 %v967
        %v1150 = vpop.f32.mrb[0].mxu0
        %v1151 = vadd.f32 0.0, %v1150
        %v1152 = vpop.f32.mrb[0].mxu0
        %1153 = vmatprep.mubr.f32.mxu0 0.0
        %1154 = vmatmul.mubr.f32.gmra.mrb[0].mxu0 %v970
        %v1155 = vpop.f32.mrb[0].mxu0
        %v1156 = vadd.f32 0.0, %v1155
        %v1157 = vpop.f32.mrb[0].mxu0
        %1158 = vmatprep.mubr.f32.mxu0 0.0
        %1159 = vmatmul.mubr.f32.gmra.mrb[0].mxu0 %v973
        %v1160 = vpop.f32.mrb[0].mxu0
        %v1161 = vadd.f32 0.0, %v1160
        %v1162 = vpop.f32.mrb[0].mxu0
        %1163 = vmatprep.mubr.f32.mxu0 0.0
        %1164 = vmatmul.mubr.f32.gmra.mrb[0].mxu0 %v976
        %v1165 = vpop.f32.mrb[0].mxu0
        %v1166 = vadd.f32 0.0, %v1165
        %v1167 = vpop.f32.mrb[0].mxu0
        %1168 = vmatprep.mubr.f32.mxu0 0.0
        %1169 = vmatmul.mubr.f32.gmra.mrb[0].mxu0 %v979
        %v1170 = vpop.f32.mrb[0].mxu0
        %v1171 = vadd.f32 0.0, %v1170
        %v1172 = vpop.f32.mrb[0].mxu0
        %1173 = vmatprep.mubr.f32.mxu0 0.0
        %1174 = vmatmul.mubr.f32.gmra.mrb[0].mxu0 %v982
        %v1175 = vpop.f32.mrb[0].mxu0
        %v1176 = vadd.f32 0.0, %v1175
        %v1177 = vpop.f32.mrb[0].mxu0
        %1178 = vmatprep.mubr.f32.mxu0 0.0
        %1179 = vmatmul.mubr.f32.gmra.mrb[0].mxu0 %v985
        %v1180 = vpop.f32.mrb[0].mxu0
        %v1181 = vadd.f32 0.0, %v1180
        %v1182 = vpop.f32.mrb[0].mxu0
        %1183 = vmatprep.mubr.f32.mxu0 0.0
        %1184 = vmatmul.mubr.f32.gmra.mrb[0].mxu0 %v988
        %v1185 = vpop.f32.mrb[0].mxu0
        %v1186 = vadd.f32 0.0, %v1185
        %v1187 = vpop.f32.mrb[0].mxu0
        %1188 = vmatprep.mubr.f32.mxu0 0.0
        %1189 = vmatmul.mubr.f32.gmra.mrb[0].mxu0 %v991
        %v1190 = vpop.f32.mrb[0].mxu0
        %v1191 = vadd.f32 0.0, %v1190
        %v1192 = vpop.f32.mrb[0].mxu0
        %1193 = vmatprep.mubr.f32.mxu0 0.0
        %1194 = vmatmul.mubr.f32.gmra.mrb[0].mxu0 %v994
        %v1195 = vpop.f32.mrb[0].mxu0
        %v1196 = vadd.f32 0.0, %v1195
        %v1197 = vpop.f32.mrb[0].mxu0
        %1198 = vmatprep.mubr.f32.mxu0 0.0
        %1199 = vmatmul.mubr.f32.gmra.mrb[0].mxu0 %v997
        %v1200 = vpop.f32.mrb[0].mxu0
        %v1201 = vadd.f32 0.0, %v1200
        %v1202 = vpop.f32.mrb[0].mxu0
        %1203 = vmatprep.mubr.f32.mxu0 0.0
        %1204 = vmatmul.mubr.f32.gmra.mrb[0].mxu0 %v1000
        %v1205 = vpop.f32.mrb[0].mxu0
        %v1206 = vadd.f32 0.0, %v1205
        %v1207 = vpop.f32.mrb[0].mxu0
        %1208 = vmatprep.mubr.f32.mxu0 0.0
        %1209 = vmatmul.mubr.f32.gmra.mrb[0].mxu0 %v1003
        %v1210 = vpop.f32.mrb[0].mxu0
        %v1211 = vadd.f32 0.0, %v1210
        %v1212 = vpop.f32.mrb[0].mxu0
        %1213 = vmatprep.mubr.f32.mxu0 0.0
        %1214 = vmatmul.mubr.f32.gmra.mrb[0].mxu0 %v1006
        %v1215 = vpop.f32.mrb[0].mxu0
        %v1216 = vadd.f32 0.0, %v1215
        %v1217 = vpop.f32.mrb[0].mxu0
        %1218 = vmatprep.mubr.f32.mxu0 0.0
        %1219 = vmatmul.mubr.f32.gmra.mrb[0].mxu0 %v1009
        %v1220 = vpop.f32.mrb[0].mxu0
        %v1221 = vadd.f32 0.0, %v1220
        %v1222 = vpop.f32.mrb[0].mxu0
        %1223 = vmatprep.mubr.f32.mxu0 0.0
        %1224 = vmatmul.mubr.f32.gmra.mrb[0].mxu0 %v1012
        %v1225 = vpop.f32.mrb[0].mxu0
        %v1226 = vadd.f32 0.0, %v1225
        %v1227 = vpop.f32.mrb[0].mxu0
        %1228 = vmatprep.mubr.f32.mxu0 0.0
        %1229 = vmatmul.mubr.f32.gmra.mrb[0].mxu0 %v1015
        %v1230 = vpop.f32.mrb[0].mxu0
        %v1231 = vadd.f32 0.0, %v1230
        %v1232 = vpop.f32.mrb[0].mxu0
        %1233 = vmatprep.mubr.f32.mxu0 0.0
        %1234 = vmatmul.mubr.f32.gmra.mrb[0].mxu0 %v1018
        %v1235 = vpop.f32.mrb[0].mxu0
        %v1236 = vadd.f32 0.0, %v1235
        %v1237 = vpop.f32.mrb[0].mxu0
        %1238 = vmatprep.mubr.f32.mxu0 0.0
        %1239 = vmatmul.mubr.f32.gmra.mrb[0].mxu0 %v1021
        %v1240 = vpop.f32.mrb[0].mxu0
        %v1241 = vadd.f32 0.0, %v1240
        %v1242 = vpop.f32.mrb[0].mxu0
        %1243 = vmatprep.mubr.f32.mxu0 0.0
        %1244 = vmatmul.mubr.f32.gmra.mrb[0].mxu0 %v1024
        %v1245 = vpop.f32.mrb[0].mxu0
        %v1246 = vadd.f32 0.0, %v1245
        %v1247 = vpop.f32.mrb[0].mxu0
        %1248 = vmatprep.mubr.f32.mxu0 0.0
        %1249 = vmatmul.mubr.f32.gmra.mrb[0].mxu0 %v1027
        %v1250 = vpop.f32.mrb[0].mxu0
        %v1251 = vadd.f32 0.0, %v1250
        %v1252 = vpop.f32.mrb[0].mxu0
        %1253 = vdwg.mxu0
        %v1255 = vsel %vm932, %v867, 0
        %v1258 = vsel %vm932, %v868, 0
        %v1261 = vsel %vm932, %v869, 0
        %v1264 = vsel %vm932, %v870, 0
        %1266 = vmatprep.subr.mxu0 0.0
        %1267 = vmatpush1.msra.mxu0 %v907
        %1268 = vmatprep.subr.mxu0 0.0
        %1269 = vmatpush1.msra.mxu0 %v908
        %1270 = vmatprep.subr.mxu0 0.0
        %1271 = vmatpush1.msra.mxu0 %v909
        %1272 = vmatprep.subr.mxu0 0.0
        %1273 = vmatpush1.msra.mxu0 %v910
        %1274 = vmatprep.subr.mxu0 0.0
        %1275 = vmatpush1.msra.mxu0 %v911
        %1276 = vmatprep.subr.mxu0 0.0
        %1277 = vmatpush1.msra.mxu0 %v912
        %1278 = vmatprep.subr.mxu0 0.0
        %1279 = vmatpush1.msra.mxu0 %v913
        %1280 = vmatprep.subr.mxu0 0.0
        %1281 = vmatpush1.msra.mxu0 %v914
        %1282 = vmatprep.subr.mxu0 0.0
        %1283 = vmatpush1.msra.mxu0 %v915
        %1284 = vmatprep.subr.mxu0 0.0
        %1285 = vmatpush1.msra.mxu0 %v916
        %1286 = vmatprep.subr.mxu0 0.0
        %1287 = vmatpush1.msra.mxu0 %v917
        %1288 = vmatprep.subr.mxu0 0.0
        %1289 = vmatpush1.msra.mxu0 %v918
        %1290 = vmatprep.subr.mxu0 0.0
        %1291 = vmatpush1.msra.mxu0 0.0
        %1292 = vmatprep.subr.mxu0 0.0
        %1293 = vmatpush1.msra.mxu0 0.0
        %1294 = vmatprep.subr.mxu0 0.0
        %1295 = vmatpush1.msra.mxu0 0.0
        %1296 = vmatprep.subr.mxu0 0.0
        %1297 = vmatpush1.msra.mxu0 0.0
        %1298 = vmatprep.subr.mxu0 0.0
        %1299 = vmatpush1.msra.mxu0 0.0
        %1300 = vmatprep.subr.mxu0 0.0
        %1301 = vmatpush1.msra.mxu0 0.0
        %1302 = vmatprep.subr.mxu0 0.0
        %1303 = vmatpush1.msra.mxu0 0.0
        %1304 = vmatprep.subr.mxu0 0.0
        %1305 = vmatpush1.msra.mxu0 0.0
        %1306 = vmatprep.subr.mxu0 0.0
        %1307 = vmatpush1.msra.mxu0 0.0
        %1308 = vmatprep.subr.mxu0 0.0
        %1309 = vmatpush1.msra.mxu0 0.0
        %1310 = vmatprep.subr.mxu0 0.0
        %1311 = vmatpush1.msra.mxu0 0.0
        %1312 = vmatprep.subr.mxu0 0.0
        %1313 = vmatpush1.msra.mxu0 0.0
        %1314 = vmatprep.subr.mxu0 0.0
        %1315 = vmatpush1.msra.mxu0 0.0
        %1316 = vmatprep.subr.mxu0 0.0
        %1317 = vmatpush1.msra.mxu0 0.0
        %1318 = vmatprep.subr.mxu0 0.0
        %1319 = vmatpush1.msra.mxu0 0.0
        %1320 = vmatprep.subr.mxu0 0.0
        %1321 = vmatpush1.msra.mxu0 0.0
        %1322 = vmatprep.subr.mxu0 0.0
        %1323 = vmatpush1.msra.mxu0 0.0
        %1324 = vmatprep.subr.mxu0 0.0
        %1325 = vmatpush1.msra.mxu0 0.0
        %1326 = vmatprep.subr.mxu0 0.0
        %1327 = vmatpush1.msra.mxu0 0.0
        %1328 = vmatprep.subr.mxu0 0.0
        %1329 = vmatpush1.msra.mxu0 0.0
        %1330 = vmatprep.mubr.f32.mxu0 0.0
        %1331 = vmatmul.mubr.f32.gmra.mrb[0].mxu0 %v1255
        %v1332 = vpop.f32.mrb[0].mxu0
        %v1333 = vadd.f32 %v1096, %v1332
        %v1334 = vpop.f32.mrb[0].mxu0
        %1335 = vmatprep.mubr.f32.mxu0 0.0
        %1336 = vmatmul.mubr.f32.gmra.mrb[0].mxu0 %v1258
        %v1337 = vpop.f32.mrb[0].mxu0
        %v1338 = vadd.f32 %v1101, %v1337
        %v1339 = vpop.f32.mrb[0].mxu0
        %1340 = vmatprep.mubr.f32.mxu0 0.0
        %1341 = vmatmul.mubr.f32.gmra.mrb[0].mxu0 %v1261
        %v1342 = vpop.f32.mrb[0].mxu0
        %v1343 = vadd.f32 %v1106, %v1342
        %v1344 = vpop.f32.mrb[0].mxu0
        %1345 = vmatprep.mubr.f32.mxu0 0.0
        %1346 = vmatmul.mubr.f32.gmra.mrb[0].mxu0 %v1264
        %v1347 = vpop.f32.mrb[0].mxu0
        %v1348 = vadd.f32 %v1111, %v1347
        %v1349 = vpop.f32.mrb[0].mxu0
        %1350 = vmatprep.mubr.f32.mxu0 0.0
        %1351 = vmatmul.mubr.f32.gmra.mrb[0].mxu0 %v934
        %v1352 = vpop.f32.mrb[0].mxu0
        %v1353 = vadd.f32 %v1116, %v1352
        %v1354 = vpop.f32.mrb[0].mxu0
        %1355 = vmatprep.mubr.f32.mxu0 0.0
        %1356 = vmatmul.mubr.f32.gmra.mrb[0].mxu0 %v937
        %v1357 = vpop.f32.mrb[0].mxu0
        %v1358 = vadd.f32 %v1121, %v1357
        %v1359 = vpop.f32.mrb[0].mxu0
        %1360 = vmatprep.mubr.f32.mxu0 0.0
        %1361 = vmatmul.mubr.f32.gmra.mrb[0].mxu0 %v940
        %v1362 = vpop.f32.mrb[0].mxu0
        %v1363 = vadd.f32 %v1126, %v1362
        %v1364 = vpop.f32.mrb[0].mxu0
        %1365 = vmatprep.mubr.f32.mxu0 0.0
        %1366 = vmatmul.mubr.f32.gmra.mrb[0].mxu0 %v943
        %v1367 = vpop.f32.mrb[0].mxu0
        %v1368 = vadd.f32 %v1131, %v1367
        %v1369 = vpop.f32.mrb[0].mxu0
        %1370 = vmatprep.mubr.f32.mxu0 0.0
        %1371 = vmatmul.mubr.f32.gmra.mrb[0].mxu0 %v946
        %v1372 = vpop.f32.mrb[0].mxu0
        %v1373 = vadd.f32 %v1136, %v1372
        %v1374 = vpop.f32.mrb[0].mxu0
        %1375 = vmatprep.mubr.f32.mxu0 0.0
        %1376 = vmatmul.mubr.f32.gmra.mrb[0].mxu0 %v949
        %v1377 = vpop.f32.mrb[0].mxu0
        %v1378 = vadd.f32 %v1141, %v1377
        %v1379 = vpop.f32.mrb[0].mxu0
        %1380 = vmatprep.mubr.f32.mxu0 0.0
        %1381 = vmatmul.mubr.f32.gmra.mrb[0].mxu0 %v952
        %v1382 = vpop.f32.mrb[0].mxu0
        %v1383 = vadd.f32 %v1146, %v1382
        %v1384 = vpop.f32.mrb[0].mxu0
        %1385 = vmatprep.mubr.f32.mxu0 0.0
        %1386 = vmatmul.mubr.f32.gmra.mrb[0].mxu0 %v955
        %v1387 = vpop.f32.mrb[0].mxu0
        %v1388 = vadd.f32 %v1151, %v1387
        %v1389 = vpop.f32.mrb[0].mxu0
        %1390 = vmatprep.mubr.f32.mxu0 0.0
        %1391 = vmatmul.mubr.f32.gmra.mrb[0].mxu0 %v958
        %v1392 = vpop.f32.mrb[0].mxu0
        %v1393 = vadd.f32 %v1156, %v1392
        %v1394 = vpop.f32.mrb[0].mxu0
        %1395 = vmatprep.mubr.f32.mxu0 0.0
        %1396 = vmatmul.mubr.f32.gmra.mrb[0].mxu0 %v961
        %v1397 = vpop.f32.mrb[0].mxu0
        %v1398 = vadd.f32 %v1161, %v1397
        %v1399 = vpop.f32.mrb[0].mxu0
        %1400 = vmatprep.mubr.f32.mxu0 0.0
        %1401 = vmatmul.mubr.f32.gmra.mrb[0].mxu0 %v964
        %v1402 = vpop.f32.mrb[0].mxu0
        %v1403 = vadd.f32 %v1166, %v1402
        %v1404 = vpop.f32.mrb[0].mxu0
        %1405 = vmatprep.mubr.f32.mxu0 0.0
        %1406 = vmatmul.mubr.f32.gmra.mrb[0].mxu0 %v967
        %v1407 = vpop.f32.mrb[0].mxu0
        %v1408 = vadd.f32 %v1171, %v1407
        %v1409 = vpop.f32.mrb[0].mxu0
        %1410 = vmatprep.mubr.f32.mxu0 0.0
        %1411 = vmatmul.mubr.f32.gmra.mrb[0].mxu0 %v970
        %v1412 = vpop.f32.mrb[0].mxu0
        %v1413 = vadd.f32 %v1176, %v1412
        %v1414 = vpop.f32.mrb[0].mxu0
        %1415 = vmatprep.mubr.f32.mxu0 0.0
        %1416 = vmatmul.mubr.f32.gmra.mrb[0].mxu0 %v973
        %v1417 = vpop.f32.mrb[0].mxu0
        %v1418 = vadd.f32 %v1181, %v1417
        %v1419 = vpop.f32.mrb[0].mxu0
        %1420 = vmatprep.mubr.f32.mxu0 0.0
        %1421 = vmatmul.mubr.f32.gmra.mrb[0].mxu0 %v976
        %v1422 = vpop.f32.mrb[0].mxu0
        %v1423 = vadd.f32 %v1186, %v1422
        %v1424 = vpop.f32.mrb[0].mxu0
        %1425 = vmatprep.mubr.f32.mxu0 0.0
        %1426 = vmatmul.mubr.f32.gmra.mrb[0].mxu0 %v979
        %v1427 = vpop.f32.mrb[0].mxu0
        %v1428 = vadd.f32 %v1191, %v1427
        %v1429 = vpop.f32.mrb[0].mxu0
        %1430 = vmatprep.mubr.f32.mxu0 0.0
        %1431 = vmatmul.mubr.f32.gmra.mrb[0].mxu0 %v982
        %v1432 = vpop.f32.mrb[0].mxu0
        %v1433 = vadd.f32 %v1196, %v1432
        %v1434 = vpop.f32.mrb[0].mxu0
        %1435 = vmatprep.mubr.f32.mxu0 0.0
        %1436 = vmatmul.mubr.f32.gmra.mrb[0].mxu0 %v985
        %v1437 = vpop.f32.mrb[0].mxu0
        %v1438 = vadd.f32 %v1201, %v1437
        %v1439 = vpop.f32.mrb[0].mxu0
        %1440 = vmatprep.mubr.f32.mxu0 0.0
        %1441 = vmatmul.mubr.f32.gmra.mrb[0].mxu0 %v988
        %v1442 = vpop.f32.mrb[0].mxu0
        %v1443 = vadd.f32 %v1206, %v1442
        %v1444 = vpop.f32.mrb[0].mxu0
        %1445 = vmatprep.mubr.f32.mxu0 0.0
        %1446 = vmatmul.mubr.f32.gmra.mrb[0].mxu0 %v991
        %v1447 = vpop.f32.mrb[0].mxu0
        %v1448 = vadd.f32 %v1211, %v1447
        %v1449 = vpop.f32.mrb[0].mxu0
        %1450 = vmatprep.mubr.f32.mxu0 0.0
        %1451 = vmatmul.mubr.f32.gmra.mrb[0].mxu0 %v994
        %v1452 = vpop.f32.mrb[0].mxu0
        %v1453 = vadd.f32 %v1216, %v1452
        %v1454 = vpop.f32.mrb[0].mxu0
        %1455 = vmatprep.mubr.f32.mxu0 0.0
        %1456 = vmatmul.mubr.f32.gmra.mrb[0].mxu0 %v997
        %v1457 = vpop.f32.mrb[0].mxu0
        %v1458 = vadd.f32 %v1221, %v1457
        %v1459 = vpop.f32.mrb[0].mxu0
        %1460 = vmatprep.mubr.f32.mxu0 0.0
        %1461 = vmatmul.mubr.f32.gmra.mrb[0].mxu0 %v1000
        %v1462 = vpop.f32.mrb[0].mxu0
        %v1463 = vadd.f32 %v1226, %v1462
        %v1464 = vpop.f32.mrb[0].mxu0
        %1465 = vmatprep.mubr.f32.mxu0 0.0
        %1466 = vmatmul.mubr.f32.gmra.mrb[0].mxu0 %v1003
        %v1467 = vpop.f32.mrb[0].mxu0
        %v1468 = vadd.f32 %v1231, %v1467
        %v1469 = vpop.f32.mrb[0].mxu0
        %1470 = vmatprep.mubr.f32.mxu0 0.0
        %1471 = vmatmul.mubr.f32.gmra.mrb[0].mxu0 %v1006
        %v1472 = vpop.f32.mrb[0].mxu0
        %v1473 = vadd.f32 %v1236, %v1472
        %v1474 = vpop.f32.mrb[0].mxu0
        %1475 = vmatprep.mubr.f32.mxu0 0.0
        %1476 = vmatmul.mubr.f32.gmra.mrb[0].mxu0 %v1009
        %v1477 = vpop.f32.mrb[0].mxu0
        %v1478 = vadd.f32 %v1241, %v1477
        %v1479 = vpop.f32.mrb[0].mxu0
        %1480 = vmatprep.mubr.f32.mxu0 0.0
        %1481 = vmatmul.mubr.f32.gmra.mrb[0].mxu0 %v1012
        %v1482 = vpop.f32.mrb[0].mxu0
        %v1483 = vadd.f32 %v1246, %v1482
        %v1484 = vpop.f32.mrb[0].mxu0
        %1485 = vmatprep.mubr.f32.mxu0 0.0
        %1486 = vmatmul.mubr.f32.gmra.mrb[0].mxu0 %v1015
        %v1487 = vpop.f32.mrb[0].mxu0
        %v1488 = vadd.f32 %v1251, %v1487
        %v1489 = vpop.f32.mrb[0].mxu0
        %1490 = vdwg.mxu0
        %s1491 = scalar_lea.vmem [#allocation7], 192
        %v1492 = vld [vmem:[%s1491] sm:$0xff]
        %v1493 = vld [vmem:[%s1491 + $0x8] sm:$0xff]
        %v1494 = vld [vmem:[%s1491 + $0x10] sm:$0xff]
        %v1495 = vld [vmem:[%s1491 + $0x18] sm:$0xff]
        %v1496 = vld [vmem:[%s1491 + $0x20] sm:$0xff]
        %v1497 = vld [vmem:[%s1491 + $0x28] sm:$0xff]
        %v1498 = vld [vmem:[%s1491 + $0x30] sm:$0xff]
        %v1499 = vld [vmem:[%s1491 + $0x38] sm:$0xff]
        %v1500 = vld [vmem:[%s1491 + $0x40] sm:$0xff]
        %v1501 = vld [vmem:[%s1491 + $0x48] sm:$0xff]
        %v1502 = vld [vmem:[%s1491 + $0x50] sm:$0xff]
        %v1503 = vld [vmem:[%s1491 + $0x58] sm:$0xff]
        %v1505 = vsel %vm932, %v903, 0
        %v1508 = vsel %vm932, %v904, 0
        %v1511 = vsel %vm932, %v905, 0
        %v1514 = vsel %vm932, %v906, 0
        %1516 = vmatprep.subr.mxu0 0.0
        %1517 = vmatpush1.msra.mxu0 %v1492
        %1518 = vmatprep.subr.mxu0 0.0
        %1519 = vmatpush1.msra.mxu0 %v1493
        %1520 = vmatprep.subr.mxu0 0.0
        %1521 = vmatpush1.msra.mxu0 %v1494
        %1522 = vmatprep.subr.mxu0 0.0
        %1523 = vmatpush1.msra.mxu0 %v1495
        %1524 = vmatprep.subr.mxu0 0.0
        %1525 = vmatpush1.msra.mxu0 %v1496
        %1526 = vmatprep.subr.mxu0 0.0
        %1527 = vmatpush1.msra.mxu0 %v1497
        %1528 = vmatprep.subr.mxu0 0.0
        %1529 = vmatpush1.msra.mxu0 %v1498
        %1530 = vmatprep.subr.mxu0 0.0
        %1531 = vmatpush1.msra.mxu0 %v1499
        %1532 = vmatprep.subr.mxu0 0.0
        %1533 = vmatpush1.msra.mxu0 %v1500
        %1534 = vmatprep.subr.mxu0 0.0
        %1535 = vmatpush1.msra.mxu0 %v1501
        %1536 = vmatprep.subr.mxu0 0.0
        %1537 = vmatpush1.msra.mxu0 %v1502
        %1538 = vmatprep.subr.mxu0 0.0
        %1539 = vmatpush1.msra.mxu0 %v1503
        %1540 = vmatprep.subr.mxu0 0.0
        %1541 = vmatpush1.msra.mxu0 0.0
        %1542 = vmatprep.subr.mxu0 0.0
        %1543 = vmatpush1.msra.mxu0 0.0
        %1544 = vmatprep.subr.mxu0 0.0
        %1545 = vmatpush1.msra.mxu0 0.0
        %1546 = vmatprep.subr.mxu0 0.0
        %1547 = vmatpush1.msra.mxu0 0.0
        %1548 = vmatprep.subr.mxu0 0.0
        %1549 = vmatpush1.msra.mxu0 0.0
        %1550 = vmatprep.subr.mxu0 0.0
        %1551 = vmatpush1.msra.mxu0 0.0
        %1552 = vmatprep.subr.mxu0 0.0
        %1553 = vmatpush1.msra.mxu0 0.0
        %1554 = vmatprep.subr.mxu0 0.0
        %1555 = vmatpush1.msra.mxu0 0.0
        %1556 = vmatprep.subr.mxu0 0.0
        %1557 = vmatpush1.msra.mxu0 0.0
        %1558 = vmatprep.subr.mxu0 0.0
        %1559 = vmatpush1.msra.mxu0 0.0
        %1560 = vmatprep.subr.mxu0 0.0
        %1561 = vmatpush1.msra.mxu0 0.0
        %1562 = vmatprep.subr.mxu0 0.0
        %1563 = vmatpush1.msra.mxu0 0.0
        %1564 = vmatprep.subr.mxu0 0.0
        %1565 = vmatpush1.msra.mxu0 0.0
        %1566 = vmatprep.subr.mxu0 0.0
        %1567 = vmatpush1.msra.mxu0 0.0
        %1568 = vmatprep.subr.mxu0 0.0
        %1569 = vmatpush1.msra.mxu0 0.0
        %1570 = vmatprep.subr.mxu0 0.0
        %1571 = vmatpush1.msra.mxu0 0.0
        %1572 = vmatprep.subr.mxu0 0.0
        %1573 = vmatpush1.msra.mxu0 0.0
        %1574 = vmatprep.subr.mxu0 0.0
        %1575 = vmatpush1.msra.mxu0 0.0
        %1576 = vmatprep.subr.mxu0 0.0
        %1577 = vmatpush1.msra.mxu0 0.0
        %1578 = vmatprep.subr.mxu0 0.0
        %1579 = vmatpush1.msra.mxu0 0.0
        %1580 = vmatprep.mubr.f32.mxu0 0.0
        %1581 = vmatmul.mubr.f32.gmra.mrb[0].mxu0 %v946
        %v1582 = vpop.f32.mrb[0].mxu0
        %v1583 = vadd.f32 0.0, %v1582
        %v1584 = vpop.f32.mrb[0].mxu0
        %1585 = vmatprep.mubr.f32.mxu0 0.0
        %1586 = vmatmul.mubr.f32.gmra.mrb[0].mxu0 %v949
        %v1587 = vpop.f32.mrb[0].mxu0
        %v1588 = vadd.f32 0.0, %v1587
        %v1589 = vpop.f32.mrb[0].mxu0
        %1590 = vmatprep.mubr.f32.mxu0 0.0
        %1591 = vmatmul.mubr.f32.gmra.mrb[0].mxu0 %v952
        %v1592 = vpop.f32.mrb[0].mxu0
        %v1593 = vadd.f32 0.0, %v1592
        %v1594 = vpop.f32.mrb[0].mxu0
        %1595 = vmatprep.mubr.f32.mxu0 0.0
        %1596 = vmatmul.mubr.f32.gmra.mrb[0].mxu0 %v955
        %v1597 = vpop.f32.mrb[0].mxu0
        %v1598 = vadd.f32 0.0, %v1597
        %v1599 = vpop.f32.mrb[0].mxu0
        %1600 = vmatprep.mubr.f32.mxu0 0.0
        %1601 = vmatmul.mubr.f32.gmra.mrb[0].mxu0 %v958
        %v1602 = vpop.f32.mrb[0].mxu0
        %v1603 = vadd.f32 0.0, %v1602
        %v1604 = vpop.f32.mrb[0].mxu0
        %1605 = vmatprep.mubr.f32.mxu0 0.0
        %1606 = vmatmul.mubr.f32.gmra.mrb[0].mxu0 %v961
        %v1607 = vpop.f32.mrb[0].mxu0
        %v1608 = vadd.f32 0.0, %v1607
        %v1609 = vpop.f32.mrb[0].mxu0
        %1610 = vmatprep.mubr.f32.mxu0 0.0
        %1611 = vmatmul.mubr.f32.gmra.mrb[0].mxu0 %v964
        %v1612 = vpop.f32.mrb[0].mxu0
        %v1613 = vadd.f32 0.0, %v1612
        %v1614 = vpop.f32.mrb[0].mxu0
        %1615 = vmatprep.mubr.f32.mxu0 0.0
        %1616 = vmatmul.mubr.f32.gmra.mrb[0].mxu0 %v967
        %v1617 = vpop.f32.mrb[0].mxu0
        %v1618 = vadd.f32 0.0, %v1617
        %v1619 = vpop.f32.mrb[0].mxu0
        %1620 = vmatprep.mubr.f32.mxu0 0.0
        %1621 = vmatmul.mubr.f32.gmra.mrb[0].mxu0 %v970
        %v1622 = vpop.f32.mrb[0].mxu0
        %v1623 = vadd.f32 0.0, %v1622
        %v1624 = vpop.f32.mrb[0].mxu0
        %1625 = vmatprep.mubr.f32.mxu0 0.0
        %1626 = vmatmul.mubr.f32.gmra.mrb[0].mxu0 %v973
        %v1627 = vpop.f32.mrb[0].mxu0
        %v1628 = vadd.f32 0.0, %v1627
        %v1629 = vpop.f32.mrb[0].mxu0
        %1630 = vmatprep.mubr.f32.mxu0 0.0
        %1631 = vmatmul.mubr.f32.gmra.mrb[0].mxu0 %v976
        %v1632 = vpop.f32.mrb[0].mxu0
        %v1633 = vadd.f32 0.0, %v1632
        %v1634 = vpop.f32.mrb[0].mxu0
        %1635 = vmatprep.mubr.f32.mxu0 0.0
        %1636 = vmatmul.mubr.f32.gmra.mrb[0].mxu0 %v979
        %v1637 = vpop.f32.mrb[0].mxu0
        %v1638 = vadd.f32 0.0, %v1637
        %v1639 = vpop.f32.mrb[0].mxu0
        %1640 = vmatprep.mubr.f32.mxu0 0.0
        %1641 = vmatmul.mubr.f32.gmra.mrb[0].mxu0 %v982
        %v1642 = vpop.f32.mrb[0].mxu0
        %v1643 = vadd.f32 0.0, %v1642
        %v1644 = vpop.f32.mrb[0].mxu0
        %1645 = vmatprep.mubr.f32.mxu0 0.0
        %1646 = vmatmul.mubr.f32.gmra.mrb[0].mxu0 %v985
        %v1647 = vpop.f32.mrb[0].mxu0
        %v1648 = vadd.f32 0.0, %v1647
        %v1649 = vpop.f32.mrb[0].mxu0
        %1650 = vmatprep.mubr.f32.mxu0 0.0
        %1651 = vmatmul.mubr.f32.gmra.mrb[0].mxu0 %v988
        %v1652 = vpop.f32.mrb[0].mxu0
        %v1653 = vadd.f32 0.0, %v1652
        %v1654 = vpop.f32.mrb[0].mxu0
        %1655 = vmatprep.mubr.f32.mxu0 0.0
        %1656 = vmatmul.mubr.f32.gmra.mrb[0].mxu0 %v991
        %v1657 = vpop.f32.mrb[0].mxu0
        %v1658 = vadd.f32 0.0, %v1657
        %v1659 = vpop.f32.mrb[0].mxu0
        %1660 = vmatprep.mubr.f32.mxu0 0.0
        %1661 = vmatmul.mubr.f32.gmra.mrb[0].mxu0 %v994
        %v1662 = vpop.f32.mrb[0].mxu0
        %v1663 = vadd.f32 0.0, %v1662
        %v1664 = vpop.f32.mrb[0].mxu0
        %1665 = vmatprep.mubr.f32.mxu0 0.0
        %1666 = vmatmul.mubr.f32.gmra.mrb[0].mxu0 %v997
        %v1667 = vpop.f32.mrb[0].mxu0
        %v1668 = vadd.f32 0.0, %v1667
        %v1669 = vpop.f32.mrb[0].mxu0
        %1670 = vmatprep.mubr.f32.mxu0 0.0
        %1671 = vmatmul.mubr.f32.gmra.mrb[0].mxu0 %v1000
        %v1672 = vpop.f32.mrb[0].mxu0
        %v1673 = vadd.f32 0.0, %v1672
        %v1674 = vpop.f32.mrb[0].mxu0
        %1675 = vmatprep.mubr.f32.mxu0 0.0
        %1676 = vmatmul.mubr.f32.gmra.mrb[0].mxu0 %v1003
        %v1677 = vpop.f32.mrb[0].mxu0
        %v1678 = vadd.f32 0.0, %v1677
        %v1679 = vpop.f32.mrb[0].mxu0
        %1680 = vmatprep.mubr.f32.mxu0 0.0
        %1681 = vmatmul.mubr.f32.gmra.mrb[0].mxu0 %v1006
        %v1682 = vpop.f32.mrb[0].mxu0
        %v1683 = vadd.f32 0.0, %v1682
        %v1684 = vpop.f32.mrb[0].mxu0
        %1685 = vmatprep.mubr.f32.mxu0 0.0
        %1686 = vmatmul.mubr.f32.gmra.mrb[0].mxu0 %v1009
        %v1687 = vpop.f32.mrb[0].mxu0
        %v1688 = vadd.f32 0.0, %v1687
        %v1689 = vpop.f32.mrb[0].mxu0
        %1690 = vmatprep.mubr.f32.mxu0 0.0
        %1691 = vmatmul.mubr.f32.gmra.mrb[0].mxu0 %v1012
        %v1692 = vpop.f32.mrb[0].mxu0
        %v1693 = vadd.f32 0.0, %v1692
        %v1694 = vpop.f32.mrb[0].mxu0
        %1695 = vmatprep.mubr.f32.mxu0 0.0
        %1696 = vmatmul.mubr.f32.gmra.mrb[0].mxu0 %v1015
        %v1697 = vpop.f32.mrb[0].mxu0
        %v1698 = vadd.f32 0.0, %v1697
        %v1699 = vpop.f32.mrb[0].mxu0
        %1700 = vmatprep.mubr.f32.mxu0 0.0
        %1701 = vmatmul.mubr.f32.gmra.mrb[0].mxu0 %v1018
        %v1702 = vpop.f32.mrb[0].mxu0
        %v1703 = vadd.f32 0.0, %v1702
        %v1704 = vpop.f32.mrb[0].mxu0
        %1705 = vmatprep.mubr.f32.mxu0 0.0
        %1706 = vmatmul.mubr.f32.gmra.mrb[0].mxu0 %v1021
        %v1707 = vpop.f32.mrb[0].mxu0
        %v1708 = vadd.f32 0.0, %v1707
        %v1709 = vpop.f32.mrb[0].mxu0
        %1710 = vmatprep.mubr.f32.mxu0 0.0
        %1711 = vmatmul.mubr.f32.gmra.mrb[0].mxu0 %v1024
        %v1712 = vpop.f32.mrb[0].mxu0
        %v1713 = vadd.f32 0.0, %v1712
        %v1714 = vpop.f32.mrb[0].mxu0
        %1715 = vmatprep.mubr.f32.mxu0 0.0
        %1716 = vmatmul.mubr.f32.gmra.mrb[0].mxu0 %v1027
        %v1717 = vpop.f32.mrb[0].mxu0
        %v1718 = vadd.f32 0.0, %v1717
        %v1719 = vpop.f32.mrb[0].mxu0
        %1720 = vmatprep.mubr.f32.mxu0 0.0
        %1721 = vmatmul.mubr.f32.gmra.mrb[0].mxu0 %v1505
        %v1722 = vpop.f32.mrb[0].mxu0
        %v1723 = vadd.f32 0.0, %v1722
        %v1724 = vpop.f32.mrb[0].mxu0
        %1725 = vmatprep.mubr.f32.mxu0 0.0
        %1726 = vmatmul.mubr.f32.gmra.mrb[0].mxu0 %v1508
        %v1727 = vpop.f32.mrb[0].mxu0
        %v1728 = vadd.f32 0.0, %v1727
        %v1729 = vpop.f32.mrb[0].mxu0
        %1730 = vmatprep.mubr.f32.mxu0 0.0
        %1731 = vmatmul.mubr.f32.gmra.mrb[0].mxu0 %v1511
        %v1732 = vpop.f32.mrb[0].mxu0
        %v1733 = vadd.f32 0.0, %v1732
        %v1734 = vpop.f32.mrb[0].mxu0
        %1735 = vmatprep.mubr.f32.mxu0 0.0
        %1736 = vmatmul.mubr.f32.gmra.mrb[0].mxu0 %v1514
        %v1737 = vpop.f32.mrb[0].mxu0
        %v1738 = vadd.f32 0.0, %v1737
        %v1739 = vpop.f32.mrb[0].mxu0
        %1740 = vdwg.mxu0
        %v1741 = vadd.f32 %v1333, %v1583
        %v1742 = vadd.f32 %v1338, %v1588
        %v1743 = vadd.f32 %v1343, %v1593
        %v1744 = vadd.f32 %v1348, %v1598
        %v1745 = vadd.f32 %v1353, %v1603
        %v1746 = vadd.f32 %v1358, %v1608
        %v1747 = vadd.f32 %v1363, %v1613
        %v1748 = vadd.f32 %v1368, %v1618
        %v1749 = vadd.f32 %v1373, %v1623
        %v1750 = vadd.f32 %v1378, %v1628
        %v1751 = vadd.f32 %v1383, %v1633
        %v1752 = vadd.f32 %v1388, %v1638
        %v1753 = vadd.f32 %v1393, %v1643
        %v1754 = vadd.f32 %v1398, %v1648
        %v1755 = vadd.f32 %v1403, %v1653
        %v1756 = vadd.f32 %v1408, %v1658
        %v1757 = vadd.f32 %v1413, %v1663
        %v1758 = vadd.f32 %v1418, %v1668
        %v1759 = vadd.f32 %v1423, %v1673
        %v1760 = vadd.f32 %v1428, %v1678
        %v1761 = vadd.f32 %v1433, %v1683
        %v1762 = vadd.f32 %v1438, %v1688
        %v1763 = vadd.f32 %v1443, %v1693
        %v1764 = vadd.f32 %v1448, %v1698
        %v1765 = vadd.f32 %v1453, %v1703
        %v1766 = vadd.f32 %v1458, %v1708
        %v1767 = vadd.f32 %v1463, %v1713
        %v1768 = vadd.f32 %v1468, %v1718
        %v1769 = vadd.f32 %v1473, %v1723
        %v1770 = vadd.f32 %v1478, %v1728
        %v1771 = vadd.f32 %v1483, %v1733
        %v1772 = vadd.f32 %v1488, %v1738
        %vm1773 = vcmp.ge.f32.partialorder %v1741, 0.0
        %vm1774 = vcmp.ge.f32.partialorder %v1742, 0.0
        %vm1775 = vcmp.ge.f32.partialorder %v1743, 0.0
        %vm1776 = vcmp.ge.f32.partialorder %v1744, 0.0
        %vm1777 = vcmp.ge.f32.partialorder %v1745, 0.0
        %vm1778 = vcmp.ge.f32.partialorder %v1746, 0.0
        %vm1779 = vcmp.ge.f32.partialorder %v1747, 0.0
        %vm1780 = vcmp.ge.f32.partialorder %v1748, 0.0
        %vm1781 = vcmp.ge.f32.partialorder %v1749, 0.0
        %vm1782 = vcmp.ge.f32.partialorder %v1750, 0.0
        %vm1783 = vcmp.ge.f32.partialorder %v1751, 0.0
        %vm1784 = vcmp.ge.f32.partialorder %v1752, 0.0
        %vm1785 = vcmp.ge.f32.partialorder %v1753, 0.0
        %vm1786 = vcmp.ge.f32.partialorder %v1754, 0.0
        %vm1787 = vcmp.ge.f32.partialorder %v1755, 0.0
        %vm1788 = vcmp.ge.f32.partialorder %v1756, 0.0
        %vm1789 = vcmp.ge.f32.partialorder %v1757, 0.0
        %vm1790 = vcmp.ge.f32.partialorder %v1758, 0.0
        %vm1791 = vcmp.ge.f32.partialorder %v1759, 0.0
        %vm1792 = vcmp.ge.f32.partialorder %v1760, 0.0
        %vm1793 = vcmp.ge.f32.partialorder %v1761, 0.0
        %vm1794 = vcmp.ge.f32.partialorder %v1762, 0.0
        %vm1795 = vcmp.ge.f32.partialorder %v1763, 0.0
        %vm1796 = vcmp.ge.f32.partialorder %v1764, 0.0
        %vm1797 = vcmp.ge.f32.partialorder %v1765, 0.0
        %vm1798 = vcmp.ge.f32.partialorder %v1766, 0.0
        %vm1799 = vcmp.ge.f32.partialorder %v1767, 0.0
        %vm1800 = vcmp.ge.f32.partialorder %v1768, 0.0
        %vm1801 = vcmp.ge.f32.partialorder %v1769, 0.0
        %vm1802 = vcmp.ge.f32.partialorder %v1770, 0.0
        %vm1803 = vcmp.ge.f32.partialorder %v1771, 0.0
        %vm1804 = vcmp.ge.f32.partialorder %v1772, 0.0
        %v1805 = vmul.f32 %v1741, 0.2
        %v1806 = vmul.f32 %v1742, 0.2
        %v1807 = vmul.f32 %v1743, 0.2
        %v1808 = vmul.f32 %v1744, 0.2
        %v1809 = vmul.f32 %v1745, 0.2
        %v1810 = vmul.f32 %v1746, 0.2
        %v1811 = vmul.f32 %v1747, 0.2
        %v1812 = vmul.f32 %v1748, 0.2
        %v1813 = vmul.f32 %v1749, 0.2
        %v1814 = vmul.f32 %v1750, 0.2
        %v1815 = vmul.f32 %v1751, 0.2
        %v1816 = vmul.f32 %v1752, 0.2
        %v1817 = vmul.f32 %v1753, 0.2
        %v1818 = vmul.f32 %v1754, 0.2
        %v1819 = vmul.f32 %v1755, 0.2
        %v1820 = vmul.f32 %v1756, 0.2
        %v1821 = vmul.f32 %v1757, 0.2
        %v1822 = vmul.f32 %v1758, 0.2
        %v1823 = vmul.f32 %v1759, 0.2
        %v1824 = vmul.f32 %v1760, 0.2
        %v1825 = vmul.f32 %v1761, 0.2
        %v1826 = vmul.f32 %v1762, 0.2
        %v1827 = vmul.f32 %v1763, 0.2
        %v1828 = vmul.f32 %v1764, 0.2
        %v1829 = vmul.f32 %v1765, 0.2
        %v1830 = vmul.f32 %v1766, 0.2
        %v1831 = vmul.f32 %v1767, 0.2
        %v1832 = vmul.f32 %v1768, 0.2
        %v1833 = vmul.f32 %v1769, 0.2
        %v1834 = vmul.f32 %v1770, 0.2
        %v1835 = vmul.f32 %v1771, 0.2
        %v1836 = vmul.f32 %v1772, 0.2
        %v1837 = vsel %vm1773, %v1741, %v1805
        %v1838 = vsel %vm1774, %v1742, %v1806
        %v1839 = vsel %vm1775, %v1743, %v1807
        %v1840 = vsel %vm1776, %v1744, %v1808
        %v1841 = vsel %vm1777, %v1745, %v1809
        %v1842 = vsel %vm1778, %v1746, %v1810
        %v1843 = vsel %vm1779, %v1747, %v1811
        %v1844 = vsel %vm1780, %v1748, %v1812
        %v1845 = vsel %vm1781, %v1749, %v1813
        %v1846 = vsel %vm1782, %v1750, %v1814
        %v1847 = vsel %vm1783, %v1751, %v1815
        %v1848 = vsel %vm1784, %v1752, %v1816
        %v1849 = vsel %vm1785, %v1753, %v1817
        %v1850 = vsel %vm1786, %v1754, %v1818
        %v1851 = vsel %vm1787, %v1755, %v1819
        %v1852 = vsel %vm1788, %v1756, %v1820
        %v1853 = vsel %vm1789, %v1757, %v1821
        %v1854 = vsel %vm1790, %v1758, %v1822
        %v1855 = vsel %vm1791, %v1759, %v1823
        %v1856 = vsel %vm1792, %v1760, %v1824
        %v1857 = vsel %vm1793, %v1761, %v1825
        %v1858 = vsel %vm1794, %v1762, %v1826
        %v1859 = vsel %vm1795, %v1763, %v1827
        %v1860 = vsel %vm1796, %v1764, %v1828
        %v1861 = vsel %vm1797, %v1765, %v1829
        %v1862 = vsel %vm1798, %v1766, %v1830
        %v1863 = vsel %vm1799, %v1767, %v1831
        %v1864 = vsel %vm1800, %v1768, %v1832
        %v1865 = vsel %vm1801, %v1769, %v1833
        %v1866 = vsel %vm1802, %v1770, %v1834
        %v1867 = vsel %vm1803, %v1771, %v1835
        %v1868 = vsel %vm1804, %v1772, %v1836
        %s1869 = scalar_lea.vmem [#allocation3], 32
        %1870 = vst.msk [vmem:[%s1869 + $0x8] sm:$0xff] %vm218, %v1837
        %1871 = vst.msk [vmem:[%s1869 + $0x10] sm:$0xff] %vm218, %v1838
        %1872 = vst.msk [vmem:[%s1869 + $0x28] sm:$0xff] %vm218, %v1839
        %1873 = vst.msk [vmem:[%s1869 + $0x30] sm:$0xff] %vm218, %v1840
        %1874 = vst.msk [vmem:[%s1869 + $0x48] sm:$0xff] %vm218, %v1841
        %1875 = vst.msk [vmem:[%s1869 + $0x50] sm:$0xff] %vm218, %v1842
        %1876 = vst.msk [vmem:[%s1869 + $0x68] sm:$0xff] %vm218, %v1843
        %1877 = vst.msk [vmem:[%s1869 + $0x70] sm:$0xff] %vm218, %v1844
        %1878 = vst.msk [vmem:[%s1869 + $0x88] sm:$0xff] %vm218, %v1845
        %1879 = vst.msk [vmem:[%s1869 + $0x90] sm:$0xff] %vm218, %v1846
        %1880 = vst.msk [vmem:[%s1869 + $0xa8] sm:$0xff] %vm218, %v1847
        %1881 = vst.msk [vmem:[%s1869 + $0xb0] sm:$0xff] %vm218, %v1848
        %1882 = vst.msk [vmem:[%s1869 + $0xc8] sm:$0xff] %vm218, %v1849
        %1883 = vst.msk [vmem:[%s1869 + $0xd0] sm:$0xff] %vm218, %v1850
        %1884 = vst.msk [vmem:[%s1869 + $0xe8] sm:$0xff] %vm218, %v1851
        %1885 = vst.msk [vmem:[%s1869 + $0xf0] sm:$0xff] %vm218, %v1852
        %1886 = vst.msk [vmem:[%s1869 + $0x108] sm:$0xff] %vm218, %v1853
        %1887 = vst.msk [vmem:[%s1869 + $0x110] sm:$0xff] %vm218, %v1854
        %1888 = vst.msk [vmem:[%s1869 + $0x128] sm:$0xff] %vm218, %v1855
        %1889 = vst.msk [vmem:[%s1869 + $0x130] sm:$0xff] %vm218, %v1856
        %1890 = vst.msk [vmem:[%s1869 + $0x148] sm:$0xff] %vm218, %v1857
        %1891 = vst.msk [vmem:[%s1869 + $0x150] sm:$0xff] %vm218, %v1858
        %1892 = vst.msk [vmem:[%s1869 + $0x168] sm:$0xff] %vm218, %v1859
        %1893 = vst.msk [vmem:[%s1869 + $0x170] sm:$0xff] %vm218, %v1860
        %1894 = vst.msk [vmem:[%s1869 + $0x188] sm:$0xff] %vm218, %v1861
        %1895 = vst.msk [vmem:[%s1869 + $0x190] sm:$0xff] %vm218, %v1862
        %1896 = vst.msk [vmem:[%s1869 + $0x1a8] sm:$0xff] %vm218, %v1863
        %1897 = vst.msk [vmem:[%s1869 + $0x1b0] sm:$0xff] %vm218, %v1864
        %1898 = vst.msk [vmem:[%s1869 + $0x1c8] sm:$0xff] %vm218, %v1865
        %1899 = vst.msk [vmem:[%s1869 + $0x1d0] sm:$0xff] %vm218, %v1866
        %1900 = vst.msk [vmem:[%s1869 + $0x1e8] sm:$0xff] %vm218, %v1867
        %1901 = vst.msk [vmem:[%s1869 + $0x1f0] sm:$0xff] %vm218, %v1868
        %v1902 = vld [vmem:[#allocation3 + $0x7] sm:$0xff]
        %v1903 = vld [vmem:[#allocation3 + $0xf] sm:$0xff]
        %v1904 = vld [vmem:[#allocation3 + $0x27] sm:$0xff]
        %v1905 = vld [vmem:[#allocation3 + $0x2f] sm:$0xff]
        %v1906 = vld [vmem:[#allocation3 + $0x47] sm:$0xff]
        %v1907 = vld [vmem:[#allocation3 + $0x4f] sm:$0xff]
        %v1908 = vld [vmem:[#allocation3 + $0x67] sm:$0xff]
        %v1909 = vld [vmem:[#allocation3 + $0x6f] sm:$0xff]
        %v1910 = vld [vmem:[#allocation3 + $0x87] sm:$0xff]
        %v1911 = vld [vmem:[#allocation3 + $0x8f] sm:$0xff]
        %v1912 = vld [vmem:[#allocation3 + $0xa7] sm:$0xff]
        %v1913 = vld [vmem:[#allocation3 + $0xaf] sm:$0xff]
        %v1914 = vld [vmem:[#allocation3 + $0xc7] sm:$0xff]
        %v1915 = vld [vmem:[#allocation3 + $0xcf] sm:$0xff]
        %v1916 = vld [vmem:[#allocation3 + $0xe7] sm:$0xff]
        %v1917 = vld [vmem:[#allocation3 + $0xef] sm:$0xff]
        %v1918 = vld [vmem:[#allocation3 + $0x107] sm:$0xff]
        %v1919 = vld [vmem:[#allocation3 + $0x10f] sm:$0xff]
        %v1920 = vld [vmem:[#allocation3 + $0x127] sm:$0xff]
        %v1921 = vld [vmem:[#allocation3 + $0x12f] sm:$0xff]
        %v1922 = vld [vmem:[#allocation3 + $0x147] sm:$0xff]
        %v1923 = vld [vmem:[#allocation3 + $0x14f] sm:$0xff]
        %v1924 = vld [vmem:[#allocation3 + $0x167] sm:$0xff]
        %v1925 = vld [vmem:[#allocation3 + $0x16f] sm:$0xff]
        %v1926 = vld [vmem:[#allocation3 + $0x187] sm:$0xff]
        %v1927 = vld [vmem:[#allocation3 + $0x18f] sm:$0xff]
        %v1928 = vld [vmem:[#allocation3 + $0x1a7] sm:$0xff]
        %v1929 = vld [vmem:[#allocation3 + $0x1af] sm:$0xff]
        %v1930 = vld [vmem:[#allocation3 + $0x1c7] sm:$0xff]
        %v1931 = vld [vmem:[#allocation3 + $0x1cf] sm:$0xff]
        %v1932 = vld [vmem:[#allocation3 + $0x1e7] sm:$0xff]
        %v1933 = vld [vmem:[#allocation3 + $0x1ef] sm:$0xff]
        %v1934 = vld [vmem:[#allocation3 + $0x207] sm:$0xff]
        %v1935 = vld [vmem:[#allocation3 + $0x20f] sm:$0xff]
        %v1936 = vld [vmem:[#allocation3 + $0x227] sm:$0xff]
        %v1937 = vld [vmem:[#allocation3 + $0x22f] sm:$0xff]
        %v1938 = vld [vmem:[#allocation3 + $0x8] sm:$0xff]
        %v1939 = vld [vmem:[#allocation3 + $0x10] sm:$0xff]
        %v1940 = vld [vmem:[#allocation3 + $0x28] sm:$0xff]
        %v1941 = vld [vmem:[#allocation3 + $0x30] sm:$0xff]
        %v1942 = vld [vmem:[#allocation3 + $0x48] sm:$0xff]
        %v1943 = vld [vmem:[#allocation3 + $0x50] sm:$0xff]
        %v1944 = vld [vmem:[#allocation3 + $0x68] sm:$0xff]
        %v1945 = vld [vmem:[#allocation3 + $0x70] sm:$0xff]
        %v1946 = vld [vmem:[#allocation3 + $0x88] sm:$0xff]
        %v1947 = vld [vmem:[#allocation3 + $0x90] sm:$0xff]
        %v1948 = vld [vmem:[#allocation3 + $0xa8] sm:$0xff]
        %v1949 = vld [vmem:[#allocation3 + $0xb0] sm:$0xff]
        %v1950 = vld [vmem:[#allocation3 + $0xc8] sm:$0xff]
        %v1951 = vld [vmem:[#allocation3 + $0xd0] sm:$0xff]
        %v1952 = vld [vmem:[#allocation3 + $0xe8] sm:$0xff]
        %v1953 = vld [vmem:[#allocation3 + $0xf0] sm:$0xff]
        %v1954 = vld [vmem:[#allocation3 + $0x108] sm:$0xff]
        %v1955 = vld [vmem:[#allocation3 + $0x110] sm:$0xff]
        %v1956 = vld [vmem:[#allocation3 + $0x128] sm:$0xff]
        %v1957 = vld [vmem:[#allocation3 + $0x130] sm:$0xff]
        %v1958 = vld [vmem:[#allocation3 + $0x148] sm:$0xff]
        %v1959 = vld [vmem:[#allocation3 + $0x150] sm:$0xff]
        %v1960 = vld [vmem:[#allocation3 + $0x168] sm:$0xff]
        %v1961 = vld [vmem:[#allocation3 + $0x170] sm:$0xff]
        %v1962 = vld [vmem:[#allocation3 + $0x188] sm:$0xff]
        %v1963 = vld [vmem:[#allocation3 + $0x190] sm:$0xff]
        %v1964 = vld [vmem:[#allocation3 + $0x1a8] sm:$0xff]
        %v1965 = vld [vmem:[#allocation3 + $0x1b0] sm:$0xff]
        %v1966 = vld [vmem:[#allocation3 + $0x1c8] sm:$0xff]
        %v1967 = vld [vmem:[#allocation3 + $0x1d0] sm:$0xff]
        %v1968 = vld [vmem:[#allocation3 + $0x1e8] sm:$0xff]
        %v1969 = vld [vmem:[#allocation3 + $0x1f0] sm:$0xff]
        %v1970 = vld [vmem:[#allocation3 + $0x208] sm:$0xff]
        %v1971 = vld [vmem:[#allocation3 + $0x210] sm:$0xff]
        %v1972 = vld [vmem:[#allocation3 + $0x228] sm:$0xff]
        %v1973 = vld [vmem:[#allocation3 + $0x230] sm:$0xff]
        %v1974 = vld [vmem:[#allocation3 + $0x9] sm:$0xff]
        %v1975 = vld [vmem:[#allocation3 + $0x11] sm:$0xff]
        %v1976 = vld [vmem:[#allocation3 + $0x29] sm:$0xff]
        %v1977 = vld [vmem:[#allocation3 + $0x31] sm:$0xff]
        %v1978 = vld [vmem:[#allocation3 + $0x49] sm:$0xff]
        %v1979 = vld [vmem:[#allocation3 + $0x51] sm:$0xff]
        %v1980 = vld [vmem:[#allocation3 + $0x69] sm:$0xff]
        %v1981 = vld [vmem:[#allocation3 + $0x71] sm:$0xff]
        %v1982 = vld [vmem:[#allocation3 + $0x89] sm:$0xff]
        %v1983 = vld [vmem:[#allocation3 + $0x91] sm:$0xff]
        %v1984 = vld [vmem:[#allocation3 + $0xa9] sm:$0xff]
        %v1985 = vld [vmem:[#allocation3 + $0xb1] sm:$0xff]
        %v1986 = vld [vmem:[#allocation3 + $0xc9] sm:$0xff]
        %v1987 = vld [vmem:[#allocation3 + $0xd1] sm:$0xff]
        %v1988 = vld [vmem:[#allocation3 + $0xe9] sm:$0xff]
        %v1989 = vld [vmem:[#allocation3 + $0xf1] sm:$0xff]
        %v1990 = vld [vmem:[#allocation3 + $0x109] sm:$0xff]
        %v1991 = vld [vmem:[#allocation3 + $0x111] sm:$0xff]
        %v1992 = vld [vmem:[#allocation3 + $0x129] sm:$0xff]
        %v1993 = vld [vmem:[#allocation3 + $0x131] sm:$0xff]
        %v1994 = vld [vmem:[#allocation3 + $0x149] sm:$0xff]
        %v1995 = vld [vmem:[#allocation3 + $0x151] sm:$0xff]
        %v1996 = vld [vmem:[#allocation3 + $0x169] sm:$0xff]
        %v1997 = vld [vmem:[#allocation3 + $0x171] sm:$0xff]
        %v1998 = vld [vmem:[#allocation3 + $0x189] sm:$0xff]
        %v1999 = vld [vmem:[#allocation3 + $0x191] sm:$0xff]
        %v2000 = vld [vmem:[#allocation3 + $0x1a9] sm:$0xff]
        %v2001 = vld [vmem:[#allocation3 + $0x1b1] sm:$0xff]
        %v2002 = vld [vmem:[#allocation3 + $0x1c9] sm:$0xff]
        %v2003 = vld [vmem:[#allocation3 + $0x1d1] sm:$0xff]
        %v2004 = vld [vmem:[#allocation3 + $0x1e9] sm:$0xff]
        %v2005 = vld [vmem:[#allocation3 + $0x1f1] sm:$0xff]
        %v2006 = vld [vmem:[#allocation3 + $0x209] sm:$0xff]
        %v2007 = vld [vmem:[#allocation3 + $0x211] sm:$0xff]
        %v2008 = vld [vmem:[#allocation3 + $0x229] sm:$0xff]
        %v2009 = vld [vmem:[#allocation3 + $0x231] sm:$0xff]
        %2046 = vrot.lane.b32.xlu0 %v1938, 32
        %v2047 = vpop.permute.xlu0 %2046
        %2048 = vrot.lane.b32.xlu0 %v1939, 32
        %v2049 = vpop.permute.xlu0 %2048
        %2050 = vrot.lane.b32.xlu0 %v1940, 32
        %v2051 = vpop.permute.xlu0 %2050
        %2052 = vrot.lane.b32.xlu0 %v1941, 32
        %v2053 = vpop.permute.xlu0 %2052
        %2054 = vrot.lane.b32.xlu0 %v1942, 32
        %v2055 = vpop.permute.xlu0 %2054
        %2056 = vrot.lane.b32.xlu0 %v1943, 32
        %v2057 = vpop.permute.xlu0 %2056
        %2058 = vrot.lane.b32.xlu0 %v1944, 32
        %v2059 = vpop.permute.xlu0 %2058
        %2060 = vrot.lane.b32.xlu0 %v1945, 32
        %v2061 = vpop.permute.xlu0 %2060
        %2062 = vrot.lane.b32.xlu0 %v1946, 32
        %v2063 = vpop.permute.xlu0 %2062
        %2064 = vrot.lane.b32.xlu0 %v1947, 32
        %v2065 = vpop.permute.xlu0 %2064
        %2066 = vrot.lane.b32.xlu0 %v1948, 32
        %v2067 = vpop.permute.xlu0 %2066
        %2068 = vrot.lane.b32.xlu0 %v1949, 32
        %v2069 = vpop.permute.xlu0 %2068
        %2070 = vrot.lane.b32.xlu0 %v1950, 32
        %v2071 = vpop.permute.xlu0 %2070
        %2072 = vrot.lane.b32.xlu0 %v1951, 32
        %v2073 = vpop.permute.xlu0 %2072
        %2074 = vrot.lane.b32.xlu0 %v1952, 32
        %v2075 = vpop.permute.xlu0 %2074
        %2076 = vrot.lane.b32.xlu0 %v1953, 32
        %v2077 = vpop.permute.xlu0 %2076
        %2078 = vrot.lane.b32.xlu0 %v1954, 32
        %v2079 = vpop.permute.xlu0 %2078
        %2080 = vrot.lane.b32.xlu0 %v1955, 32
        %v2081 = vpop.permute.xlu0 %2080
        %2082 = vrot.lane.b32.xlu0 %v1956, 32
        %v2083 = vpop.permute.xlu0 %2082
        %2084 = vrot.lane.b32.xlu0 %v1957, 32
        %v2085 = vpop.permute.xlu0 %2084
        %2086 = vrot.lane.b32.xlu0 %v1958, 32
        %v2087 = vpop.permute.xlu0 %2086
        %2088 = vrot.lane.b32.xlu0 %v1959, 32
        %v2089 = vpop.permute.xlu0 %2088
        %2090 = vrot.lane.b32.xlu0 %v1960, 32
        %v2091 = vpop.permute.xlu0 %2090
        %2092 = vrot.lane.b32.xlu0 %v1961, 32
        %v2093 = vpop.permute.xlu0 %2092
        %2094 = vrot.lane.b32.xlu0 %v1962, 32
        %v2095 = vpop.permute.xlu0 %2094
        %2096 = vrot.lane.b32.xlu0 %v1963, 32
        %v2097 = vpop.permute.xlu0 %2096
        %2098 = vrot.lane.b32.xlu0 %v1964, 32
        %v2099 = vpop.permute.xlu0 %2098
        %2100 = vrot.lane.b32.xlu0 %v1965, 32
        %v2101 = vpop.permute.xlu0 %2100
        %2102 = vrot.lane.b32.xlu0 %v1966, 32
        %v2103 = vpop.permute.xlu0 %2102
        %2104 = vrot.lane.b32.xlu0 %v1967, 32
        %v2105 = vpop.permute.xlu0 %2104
        %2106 = vrot.lane.b32.xlu0 %v1968, 32
        %v2107 = vpop.permute.xlu0 %2106
        %2108 = vrot.lane.b32.xlu0 %v1969, 32
        %v2109 = vpop.permute.xlu0 %2108
        %2110 = vrot.lane.b32.xlu0 %v1970, 32
        %v2111 = vpop.permute.xlu0 %2110
        %2112 = vrot.lane.b32.xlu0 %v1971, 32
        %v2113 = vpop.permute.xlu0 %2112
        %2114 = vrot.lane.b32.xlu0 %v1972, 32
        %v2115 = vpop.permute.xlu0 %2114
        %2116 = vrot.lane.b32.xlu0 %v1973, 32
        %v2117 = vpop.permute.xlu0 %2116
        %2190 = vrot.lane.b32.xlu0 %v1974, 64
        %v2191 = vpop.permute.xlu0 %2190
        %2192 = vrot.lane.b32.xlu0 %v1975, 64
        %v2193 = vpop.permute.xlu0 %2192
        %2194 = vrot.lane.b32.xlu0 %v1976, 64
        %v2195 = vpop.permute.xlu0 %2194
        %2196 = vrot.lane.b32.xlu0 %v1977, 64
        %v2197 = vpop.permute.xlu0 %2196
        %2198 = vrot.lane.b32.xlu0 %v1978, 64
        %v2199 = vpop.permute.xlu0 %2198
        %2200 = vrot.lane.b32.xlu0 %v1979, 64
        %v2201 = vpop.permute.xlu0 %2200
        %2202 = vrot.lane.b32.xlu0 %v1980, 64
        %v2203 = vpop.permute.xlu0 %2202
        %2204 = vrot.lane.b32.xlu0 %v1981, 64
        %v2205 = vpop.permute.xlu0 %2204
        %2206 = vrot.lane.b32.xlu0 %v1982, 64
        %v2207 = vpop.permute.xlu0 %2206
        %2208 = vrot.lane.b32.xlu0 %v1983, 64
        %v2209 = vpop.permute.xlu0 %2208
        %2210 = vrot.lane.b32.xlu0 %v1984, 64
        %v2211 = vpop.permute.xlu0 %2210
        %2212 = vrot.lane.b32.xlu0 %v1985, 64
        %v2213 = vpop.permute.xlu0 %2212
        %2214 = vrot.lane.b32.xlu0 %v1986, 64
        %v2215 = vpop.permute.xlu0 %2214
        %2216 = vrot.lane.b32.xlu0 %v1987, 64
        %v2217 = vpop.permute.xlu0 %2216
        %2218 = vrot.lane.b32.xlu0 %v1988, 64
        %v2219 = vpop.permute.xlu0 %2218
        %2220 = vrot.lane.b32.xlu0 %v1989, 64
        %v2221 = vpop.permute.xlu0 %2220
        %2222 = vrot.lane.b32.xlu0 %v1990, 64
        %v2223 = vpop.permute.xlu0 %2222
        %2224 = vrot.lane.b32.xlu0 %v1991, 64
        %v2225 = vpop.permute.xlu0 %2224
        %2226 = vrot.lane.b32.xlu0 %v1992, 64
        %v2227 = vpop.permute.xlu0 %2226
        %2228 = vrot.lane.b32.xlu0 %v1993, 64
        %v2229 = vpop.permute.xlu0 %2228
        %2230 = vrot.lane.b32.xlu0 %v1994, 64
        %v2231 = vpop.permute.xlu0 %2230
        %2232 = vrot.lane.b32.xlu0 %v1995, 64
        %v2233 = vpop.permute.xlu0 %2232
        %2234 = vrot.lane.b32.xlu0 %v1996, 64
        %v2235 = vpop.permute.xlu0 %2234
        %2236 = vrot.lane.b32.xlu0 %v1997, 64
        %v2237 = vpop.permute.xlu0 %2236
        %2238 = vrot.lane.b32.xlu0 %v1998, 64
        %v2239 = vpop.permute.xlu0 %2238
        %2240 = vrot.lane.b32.xlu0 %v1999, 64
        %v2241 = vpop.permute.xlu0 %2240
        %2242 = vrot.lane.b32.xlu0 %v2000, 64
        %v2243 = vpop.permute.xlu0 %2242
        %2244 = vrot.lane.b32.xlu0 %v2001, 64
        %v2245 = vpop.permute.xlu0 %2244
        %2246 = vrot.lane.b32.xlu0 %v2002, 64
        %v2247 = vpop.permute.xlu0 %2246
        %2248 = vrot.lane.b32.xlu0 %v2003, 64
        %v2249 = vpop.permute.xlu0 %2248
        %2250 = vrot.lane.b32.xlu0 %v2004, 64
        %v2251 = vpop.permute.xlu0 %2250
        %2252 = vrot.lane.b32.xlu0 %v2005, 64
        %v2253 = vpop.permute.xlu0 %2252
        %2254 = vrot.lane.b32.xlu0 %v2006, 64
        %v2255 = vpop.permute.xlu0 %2254
        %2256 = vrot.lane.b32.xlu0 %v2007, 64
        %v2257 = vpop.permute.xlu0 %2256
        %2258 = vrot.lane.b32.xlu0 %v2008, 64
        %v2259 = vpop.permute.xlu0 %2258
        %2260 = vrot.lane.b32.xlu0 %v2009, 64
        %v2261 = vpop.permute.xlu0 %2260
        %v2298 = vsel %vm218, %v1902, %v2047
        %v2299 = vsel %vm218, %v1903, %v2049
        %v2300 = vsel %vm218, %v1904, %v2051
        %v2301 = vsel %vm218, %v1905, %v2053
        %v2302 = vsel %vm218, %v1906, %v2055
        %v2303 = vsel %vm218, %v1907, %v2057
        %v2304 = vsel %vm218, %v1908, %v2059
        %v2305 = vsel %vm218, %v1909, %v2061
        %v2306 = vsel %vm218, %v1910, %v2063
        %v2307 = vsel %vm218, %v1911, %v2065
        %v2308 = vsel %vm218, %v1912, %v2067
        %v2309 = vsel %vm218, %v1913, %v2069
        %v2310 = vsel %vm218, %v1914, %v2071
        %v2311 = vsel %vm218, %v1915, %v2073
        %v2312 = vsel %vm218, %v1916, %v2075
        %v2313 = vsel %vm218, %v1917, %v2077
        %v2314 = vsel %vm218, %v1918, %v2079
        %v2315 = vsel %vm218, %v1919, %v2081
        %v2316 = vsel %vm218, %v1920, %v2083
        %v2317 = vsel %vm218, %v1921, %v2085
        %v2318 = vsel %vm218, %v1922, %v2087
        %v2319 = vsel %vm218, %v1923, %v2089
        %v2320 = vsel %vm218, %v1924, %v2091
        %v2321 = vsel %vm218, %v1925, %v2093
        %v2322 = vsel %vm218, %v1926, %v2095
        %v2323 = vsel %vm218, %v1927, %v2097
        %v2324 = vsel %vm218, %v1928, %v2099
        %v2325 = vsel %vm218, %v1929, %v2101
        %v2326 = vsel %vm218, %v1930, %v2103
        %v2327 = vsel %vm218, %v1931, %v2105
        %v2328 = vsel %vm218, %v1932, %v2107
        %v2329 = vsel %vm218, %v1933, %v2109
        %v2330 = vsel %vm218, %v1934, %v2111
        %v2331 = vsel %vm218, %v1935, %v2113
        %v2332 = vsel %vm218, %v1936, %v2115
        %v2333 = vsel %vm218, %v1937, %v2117
        %v2334 = vsel %vm866, %v2298, %v2191
        %v2335 = vsel %vm866, %v2299, %v2193
        %v2336 = vsel %vm866, %v2300, %v2195
        %v2337 = vsel %vm866, %v2301, %v2197
        %v2338 = vsel %vm866, %v2302, %v2199
        %v2339 = vsel %vm866, %v2303, %v2201
        %v2340 = vsel %vm866, %v2304, %v2203
        %v2341 = vsel %vm866, %v2305, %v2205
        %v2342 = vsel %vm866, %v2306, %v2207
        %v2343 = vsel %vm866, %v2307, %v2209
        %v2344 = vsel %vm866, %v2308, %v2211
        %v2345 = vsel %vm866, %v2309, %v2213
        %v2346 = vsel %vm866, %v2310, %v2215
        %v2347 = vsel %vm866, %v2311, %v2217
        %v2348 = vsel %vm866, %v2312, %v2219
        %v2349 = vsel %vm866, %v2313, %v2221
        %v2350 = vsel %vm866, %v2314, %v2223
        %v2351 = vsel %vm866, %v2315, %v2225
        %v2352 = vsel %vm866, %v2316, %v2227
        %v2353 = vsel %vm866, %v2317, %v2229
        %v2354 = vsel %vm866, %v2318, %v2231
        %v2355 = vsel %vm866, %v2319, %v2233
        %v2356 = vsel %vm866, %v2320, %v2235
        %v2357 = vsel %vm866, %v2321, %v2237
        %v2358 = vsel %vm866, %v2322, %v2239
        %v2359 = vsel %vm866, %v2323, %v2241
        %v2360 = vsel %vm866, %v2324, %v2243
        %v2361 = vsel %vm866, %v2325, %v2245
        %v2362 = vsel %vm866, %v2326, %v2247
        %v2363 = vsel %vm866, %v2327, %v2249
        %v2364 = vsel %vm866, %v2328, %v2251
        %v2365 = vsel %vm866, %v2329, %v2253
        %v2366 = vsel %vm866, %v2330, %v2255
        %v2367 = vsel %vm866, %v2331, %v2257
        %v2368 = vsel %vm866, %v2332, %v2259
        %v2369 = vsel %vm866, %v2333, %v2261
        %v2370 = vld [vmem:[#allocation9] sm:$0xff]
        %v2371 = vld [vmem:[#allocation9 + $0x8] sm:$0xff]
        %v2372 = vld [vmem:[#allocation9 + $0x10] sm:$0xff]
        %v2373 = vld [vmem:[#allocation9 + $0x18] sm:$0xff]
        %v2374 = vld [vmem:[#allocation9 + $0x20] sm:$0xff]
        %v2375 = vld [vmem:[#allocation9 + $0x28] sm:$0xff]
        %v2376 = vld [vmem:[#allocation9 + $0x30] sm:$0xff]
        %v2377 = vld [vmem:[#allocation9 + $0x38] sm:$0xff]
        %v2378 = vld [vmem:[#allocation9 + $0x40] sm:$0xff]
        %v2379 = vld [vmem:[#allocation9 + $0x48] sm:$0xff]
        %v2380 = vld [vmem:[#allocation9 + $0x50] sm:$0xff]
        %v2381 = vld [vmem:[#allocation9 + $0x58] sm:$0xff]
        %s2382 = scalar_lea.vmem [#allocation9], 96
        %v2383 = vld [vmem:[%s2382] sm:$0xff]
        %v2384 = vld [vmem:[%s2382 + $0x8] sm:$0xff]
        %v2385 = vld [vmem:[%s2382 + $0x10] sm:$0xff]
        %v2386 = vld [vmem:[%s2382 + $0x18] sm:$0xff]
        %v2387 = vld [vmem:[%s2382 + $0x20] sm:$0xff]
        %v2388 = vld [vmem:[%s2382 + $0x28] sm:$0xff]
        %v2389 = vld [vmem:[%s2382 + $0x30] sm:$0xff]
        %v2390 = vld [vmem:[%s2382 + $0x38] sm:$0xff]
        %v2391 = vld [vmem:[%s2382 + $0x40] sm:$0xff]
        %v2392 = vld [vmem:[%s2382 + $0x48] sm:$0xff]
        %v2393 = vld [vmem:[%s2382 + $0x50] sm:$0xff]
        %v2394 = vld [vmem:[%s2382 + $0x58] sm:$0xff]
        %v2396 = vsel %vm932, %v2336, 0
        %v2399 = vsel %vm932, %v2337, 0
        %v2402 = vsel %vm932, %v2338, 0
        %v2405 = vsel %vm932, %v2339, 0
        %v2408 = vsel %vm932, %v2340, 0
        %v2411 = vsel %vm932, %v2341, 0
        %v2414 = vsel %vm932, %v2342, 0
        %v2417 = vsel %vm932, %v2343, 0
        %v2420 = vsel %vm932, %v2344, 0
        %v2423 = vsel %vm932, %v2345, 0
        %v2426 = vsel %vm932, %v2346, 0
        %v2429 = vsel %vm932, %v2347, 0
        %v2432 = vsel %vm932, %v2348, 0
        %v2435 = vsel %vm932, %v2349, 0
        %v2438 = vsel %vm932, %v2350, 0
        %v2441 = vsel %vm932, %v2351, 0
        %v2444 = vsel %vm932, %v2352, 0
        %v2447 = vsel %vm932, %v2353, 0
        %v2450 = vsel %vm932, %v2354, 0
        %v2453 = vsel %vm932, %v2355, 0
        %v2456 = vsel %vm932, %v2356, 0
        %v2459 = vsel %vm932, %v2357, 0
        %v2462 = vsel %vm932, %v2358, 0
        %v2465 = vsel %vm932, %v2359, 0
        %v2468 = vsel %vm932, %v2360, 0
        %v2471 = vsel %vm932, %v2361, 0
        %v2474 = vsel %vm932, %v2362, 0
        %v2477 = vsel %vm932, %v2363, 0
        %v2480 = vsel %vm932, %v2364, 0
        %v2483 = vsel %vm932, %v2365, 0
        %v2486 = vsel %vm932, %v2366, 0
        %v2489 = vsel %vm932, %v2367, 0
        %2491 = vmatprep.subr.mxu0 0.0
        %2492 = vmatpush1.msra.mxu0 %v2383
        %2493 = vmatprep.subr.mxu0 0.0
        %2494 = vmatpush1.msra.mxu0 %v2384
        %2495 = vmatprep.subr.mxu0 0.0
        %2496 = vmatpush1.msra.mxu0 %v2385
        %2497 = vmatprep.subr.mxu0 0.0
        %2498 = vmatpush1.msra.mxu0 %v2386
        %2499 = vmatprep.subr.mxu0 0.0
        %2500 = vmatpush1.msra.mxu0 %v2387
        %2501 = vmatprep.subr.mxu0 0.0
        %2502 = vmatpush1.msra.mxu0 %v2388
        %2503 = vmatprep.subr.mxu0 0.0
        %2504 = vmatpush1.msra.mxu0 %v2389
        %2505 = vmatprep.subr.mxu0 0.0
        %2506 = vmatpush1.msra.mxu0 %v2390
        %2507 = vmatprep.subr.mxu0 0.0
        %2508 = vmatpush1.msra.mxu0 %v2391
        %2509 = vmatprep.subr.mxu0 0.0
        %2510 = vmatpush1.msra.mxu0 %v2392
        %2511 = vmatprep.subr.mxu0 0.0
        %2512 = vmatpush1.msra.mxu0 %v2393
        %2513 = vmatprep.subr.mxu0 0.0
        %2514 = vmatpush1.msra.mxu0 %v2394
        %2515 = vmatprep.subr.mxu0 0.0
        %2516 = vmatpush1.msra.mxu0 0.0
        %2517 = vmatprep.subr.mxu0 0.0
        %2518 = vmatpush1.msra.mxu0 0.0
        %2519 = vmatprep.subr.mxu0 0.0
        %2520 = vmatpush1.msra.mxu0 0.0
        %2521 = vmatprep.subr.mxu0 0.0
        %2522 = vmatpush1.msra.mxu0 0.0
        %2523 = vmatprep.subr.mxu0 0.0
        %2524 = vmatpush1.msra.mxu0 0.0
        %2525 = vmatprep.subr.mxu0 0.0
        %2526 = vmatpush1.msra.mxu0 0.0
        %2527 = vmatprep.subr.mxu0 0.0
        %2528 = vmatpush1.msra.mxu0 0.0
        %2529 = vmatprep.subr.mxu0 0.0
        %2530 = vmatpush1.msra.mxu0 0.0
        %2531 = vmatprep.subr.mxu0 0.0
        %2532 = vmatpush1.msra.mxu0 0.0
        %2533 = vmatprep.subr.mxu0 0.0
        %2534 = vmatpush1.msra.mxu0 0.0
        %2535 = vmatprep.subr.mxu0 0.0
        %2536 = vmatpush1.msra.mxu0 0.0
        %2537 = vmatprep.subr.mxu0 0.0
        %2538 = vmatpush1.msra.mxu0 0.0
        %2539 = vmatprep.subr.mxu0 0.0
        %2540 = vmatpush1.msra.mxu0 0.0
        %2541 = vmatprep.subr.mxu0 0.0
        %2542 = vmatpush1.msra.mxu0 0.0
        %2543 = vmatprep.subr.mxu0 0.0
        %2544 = vmatpush1.msra.mxu0 0.0
        %2545 = vmatprep.subr.mxu0 0.0
        %2546 = vmatpush1.msra.mxu0 0.0
        %2547 = vmatprep.subr.mxu0 0.0
        %2548 = vmatpush1.msra.mxu0 0.0
        %2549 = vmatprep.subr.mxu0 0.0
        %2550 = vmatpush1.msra.mxu0 0.0
        %2551 = vmatprep.subr.mxu0 0.0
        %2552 = vmatpush1.msra.mxu0 0.0
        %2553 = vmatprep.subr.mxu0 0.0
        %2554 = vmatpush1.msra.mxu0 0.0
        %2555 = vmatprep.mubr.f32.mxu0 0.0
        %2556 = vmatmul.mubr.f32.gmra.mrb[0].mxu0 %v2396
        %v2557 = vpop.f32.mrb[0].mxu0
        %v2558 = vadd.f32 0.0, %v2557
        %v2559 = vpop.f32.mrb[0].mxu0
        %2560 = vmatprep.mubr.f32.mxu0 0.0
        %2561 = vmatmul.mubr.f32.gmra.mrb[0].mxu0 %v2399
        %v2562 = vpop.f32.mrb[0].mxu0
        %v2563 = vadd.f32 0.0, %v2562
        %v2564 = vpop.f32.mrb[0].mxu0
        %2565 = vmatprep.mubr.f32.mxu0 0.0
        %2566 = vmatmul.mubr.f32.gmra.mrb[0].mxu0 %v2402
        %v2567 = vpop.f32.mrb[0].mxu0
        %v2568 = vadd.f32 0.0, %v2567
        %v2569 = vpop.f32.mrb[0].mxu0
        %2570 = vmatprep.mubr.f32.mxu0 0.0
        %2571 = vmatmul.mubr.f32.gmra.mrb[0].mxu0 %v2405
        %v2572 = vpop.f32.mrb[0].mxu0
        %v2573 = vadd.f32 0.0, %v2572
        %v2574 = vpop.f32.mrb[0].mxu0
        %2575 = vmatprep.mubr.f32.mxu0 0.0
        %2576 = vmatmul.mubr.f32.gmra.mrb[0].mxu0 %v2408
        %v2577 = vpop.f32.mrb[0].mxu0
        %v2578 = vadd.f32 0.0, %v2577
        %v2579 = vpop.f32.mrb[0].mxu0
        %2580 = vmatprep.mubr.f32.mxu0 0.0
        %2581 = vmatmul.mubr.f32.gmra.mrb[0].mxu0 %v2411
        %v2582 = vpop.f32.mrb[0].mxu0
        %v2583 = vadd.f32 0.0, %v2582
        %v2584 = vpop.f32.mrb[0].mxu0
        %2585 = vmatprep.mubr.f32.mxu0 0.0
        %2586 = vmatmul.mubr.f32.gmra.mrb[0].mxu0 %v2414
        %v2587 = vpop.f32.mrb[0].mxu0
        %v2588 = vadd.f32 0.0, %v2587
        %v2589 = vpop.f32.mrb[0].mxu0
        %2590 = vmatprep.mubr.f32.mxu0 0.0
        %2591 = vmatmul.mubr.f32.gmra.mrb[0].mxu0 %v2417
        %v2592 = vpop.f32.mrb[0].mxu0
        %v2593 = vadd.f32 0.0, %v2592
        %v2594 = vpop.f32.mrb[0].mxu0
        %2595 = vmatprep.mubr.f32.mxu0 0.0
        %2596 = vmatmul.mubr.f32.gmra.mrb[0].mxu0 %v2420
        %v2597 = vpop.f32.mrb[0].mxu0
        %v2598 = vadd.f32 0.0, %v2597
        %v2599 = vpop.f32.mrb[0].mxu0
        %2600 = vmatprep.mubr.f32.mxu0 0.0
        %2601 = vmatmul.mubr.f32.gmra.mrb[0].mxu0 %v2423
        %v2602 = vpop.f32.mrb[0].mxu0
        %v2603 = vadd.f32 0.0, %v2602
        %v2604 = vpop.f32.mrb[0].mxu0
        %2605 = vmatprep.mubr.f32.mxu0 0.0
        %2606 = vmatmul.mubr.f32.gmra.mrb[0].mxu0 %v2426
        %v2607 = vpop.f32.mrb[0].mxu0
        %v2608 = vadd.f32 0.0, %v2607
        %v2609 = vpop.f32.mrb[0].mxu0
        %2610 = vmatprep.mubr.f32.mxu0 0.0
        %2611 = vmatmul.mubr.f32.gmra.mrb[0].mxu0 %v2429
        %v2612 = vpop.f32.mrb[0].mxu0
        %v2613 = vadd.f32 0.0, %v2612
        %v2614 = vpop.f32.mrb[0].mxu0
        %2615 = vmatprep.mubr.f32.mxu0 0.0
        %2616 = vmatmul.mubr.f32.gmra.mrb[0].mxu0 %v2432
        %v2617 = vpop.f32.mrb[0].mxu0
        %v2618 = vadd.f32 0.0, %v2617
        %v2619 = vpop.f32.mrb[0].mxu0
        %2620 = vmatprep.mubr.f32.mxu0 0.0
        %2621 = vmatmul.mubr.f32.gmra.mrb[0].mxu0 %v2435
        %v2622 = vpop.f32.mrb[0].mxu0
        %v2623 = vadd.f32 0.0, %v2622
        %v2624 = vpop.f32.mrb[0].mxu0
        %2625 = vmatprep.mubr.f32.mxu0 0.0
        %2626 = vmatmul.mubr.f32.gmra.mrb[0].mxu0 %v2438
        %v2627 = vpop.f32.mrb[0].mxu0
        %v2628 = vadd.f32 0.0, %v2627
        %v2629 = vpop.f32.mrb[0].mxu0
        %2630 = vmatprep.mubr.f32.mxu0 0.0
        %2631 = vmatmul.mubr.f32.gmra.mrb[0].mxu0 %v2441
        %v2632 = vpop.f32.mrb[0].mxu0
        %v2633 = vadd.f32 0.0, %v2632
        %v2634 = vpop.f32.mrb[0].mxu0
        %2635 = vmatprep.mubr.f32.mxu0 0.0
        %2636 = vmatmul.mubr.f32.gmra.mrb[0].mxu0 %v2444
        %v2637 = vpop.f32.mrb[0].mxu0
        %v2638 = vadd.f32 0.0, %v2637
        %v2639 = vpop.f32.mrb[0].mxu0
        %2640 = vmatprep.mubr.f32.mxu0 0.0
        %2641 = vmatmul.mubr.f32.gmra.mrb[0].mxu0 %v2447
        %v2642 = vpop.f32.mrb[0].mxu0
        %v2643 = vadd.f32 0.0, %v2642
        %v2644 = vpop.f32.mrb[0].mxu0
        %2645 = vmatprep.mubr.f32.mxu0 0.0
        %2646 = vmatmul.mubr.f32.gmra.mrb[0].mxu0 %v2450
        %v2647 = vpop.f32.mrb[0].mxu0
        %v2648 = vadd.f32 0.0, %v2647
        %v2649 = vpop.f32.mrb[0].mxu0
        %2650 = vmatprep.mubr.f32.mxu0 0.0
        %2651 = vmatmul.mubr.f32.gmra.mrb[0].mxu0 %v2453
        %v2652 = vpop.f32.mrb[0].mxu0
        %v2653 = vadd.f32 0.0, %v2652
        %v2654 = vpop.f32.mrb[0].mxu0
        %2655 = vmatprep.mubr.f32.mxu0 0.0
        %2656 = vmatmul.mubr.f32.gmra.mrb[0].mxu0 %v2456
        %v2657 = vpop.f32.mrb[0].mxu0
        %v2658 = vadd.f32 0.0, %v2657
        %v2659 = vpop.f32.mrb[0].mxu0
        %2660 = vmatprep.mubr.f32.mxu0 0.0
        %2661 = vmatmul.mubr.f32.gmra.mrb[0].mxu0 %v2459
        %v2662 = vpop.f32.mrb[0].mxu0
        %v2663 = vadd.f32 0.0, %v2662
        %v2664 = vpop.f32.mrb[0].mxu0
        %2665 = vmatprep.mubr.f32.mxu0 0.0
        %2666 = vmatmul.mubr.f32.gmra.mrb[0].mxu0 %v2462
        %v2667 = vpop.f32.mrb[0].mxu0
        %v2668 = vadd.f32 0.0, %v2667
        %v2669 = vpop.f32.mrb[0].mxu0
        %2670 = vmatprep.mubr.f32.mxu0 0.0
        %2671 = vmatmul.mubr.f32.gmra.mrb[0].mxu0 %v2465
        %v2672 = vpop.f32.mrb[0].mxu0
        %v2673 = vadd.f32 0.0, %v2672
        %v2674 = vpop.f32.mrb[0].mxu0
        %2675 = vmatprep.mubr.f32.mxu0 0.0
        %2676 = vmatmul.mubr.f32.gmra.mrb[0].mxu0 %v2468
        %v2677 = vpop.f32.mrb[0].mxu0
        %v2678 = vadd.f32 0.0, %v2677
        %v2679 = vpop.f32.mrb[0].mxu0
        %2680 = vmatprep.mubr.f32.mxu0 0.0
        %2681 = vmatmul.mubr.f32.gmra.mrb[0].mxu0 %v2471
        %v2682 = vpop.f32.mrb[0].mxu0
        %v2683 = vadd.f32 0.0, %v2682
        %v2684 = vpop.f32.mrb[0].mxu0
        %2685 = vmatprep.mubr.f32.mxu0 0.0
        %2686 = vmatmul.mubr.f32.gmra.mrb[0].mxu0 %v2474
        %v2687 = vpop.f32.mrb[0].mxu0
        %v2688 = vadd.f32 0.0, %v2687
        %v2689 = vpop.f32.mrb[0].mxu0
        %2690 = vmatprep.mubr.f32.mxu0 0.0
        %2691 = vmatmul.mubr.f32.gmra.mrb[0].mxu0 %v2477
        %v2692 = vpop.f32.mrb[0].mxu0
        %v2693 = vadd.f32 0.0, %v2692
        %v2694 = vpop.f32.mrb[0].mxu0
        %2695 = vmatprep.mubr.f32.mxu0 0.0
        %2696 = vmatmul.mubr.f32.gmra.mrb[0].mxu0 %v2480
        %v2697 = vpop.f32.mrb[0].mxu0
        %v2698 = vadd.f32 0.0, %v2697
        %v2699 = vpop.f32.mrb[0].mxu0
        %2700 = vmatprep.mubr.f32.mxu0 0.0
        %2701 = vmatmul.mubr.f32.gmra.mrb[0].mxu0 %v2483
        %v2702 = vpop.f32.mrb[0].mxu0
        %v2703 = vadd.f32 0.0, %v2702
        %v2704 = vpop.f32.mrb[0].mxu0
        %2705 = vmatprep.mubr.f32.mxu0 0.0
        %2706 = vmatmul.mubr.f32.gmra.mrb[0].mxu0 %v2486
        %v2707 = vpop.f32.mrb[0].mxu0
        %v2708 = vadd.f32 0.0, %v2707
        %v2709 = vpop.f32.mrb[0].mxu0
        %2710 = vmatprep.mubr.f32.mxu0 0.0
        %2711 = vmatmul.mubr.f32.gmra.mrb[0].mxu0 %v2489
        %v2712 = vpop.f32.mrb[0].mxu0
        %v2713 = vadd.f32 0.0, %v2712
        %v2714 = vpop.f32.mrb[0].mxu0
        %2715 = vdwg.mxu0
        %v2717 = vsel %vm932, %v2334, 0
        %v2720 = vsel %vm932, %v2335, 0
        %2722 = vmatprep.subr.mxu0 0.0
        %2723 = vmatpush1.msra.mxu0 %v2370
        %2724 = vmatprep.subr.mxu0 0.0
        %2725 = vmatpush1.msra.mxu0 %v2371
        %2726 = vmatprep.subr.mxu0 0.0
        %2727 = vmatpush1.msra.mxu0 %v2372
        %2728 = vmatprep.subr.mxu0 0.0
        %2729 = vmatpush1.msra.mxu0 %v2373
        %2730 = vmatprep.subr.mxu0 0.0
        %2731 = vmatpush1.msra.mxu0 %v2374
        %2732 = vmatprep.subr.mxu0 0.0
        %2733 = vmatpush1.msra.mxu0 %v2375
        %2734 = vmatprep.subr.mxu0 0.0
        %2735 = vmatpush1.msra.mxu0 %v2376
        %2736 = vmatprep.subr.mxu0 0.0
        %2737 = vmatpush1.msra.mxu0 %v2377
        %2738 = vmatprep.subr.mxu0 0.0
        %2739 = vmatpush1.msra.mxu0 %v2378
        %2740 = vmatprep.subr.mxu0 0.0
        %2741 = vmatpush1.msra.mxu0 %v2379
        %2742 = vmatprep.subr.mxu0 0.0
        %2743 = vmatpush1.msra.mxu0 %v2380
        %2744 = vmatprep.subr.mxu0 0.0
        %2745 = vmatpush1.msra.mxu0 %v2381
        %2746 = vmatprep.subr.mxu0 0.0
        %2747 = vmatpush1.msra.mxu0 0.0
        %2748 = vmatprep.subr.mxu0 0.0
        %2749 = vmatpush1.msra.mxu0 0.0
        %2750 = vmatprep.subr.mxu0 0.0
        %2751 = vmatpush1.msra.mxu0 0.0
        %2752 = vmatprep.subr.mxu0 0.0
        %2753 = vmatpush1.msra.mxu0 0.0
        %2754 = vmatprep.subr.mxu0 0.0
        %2755 = vmatpush1.msra.mxu0 0.0
        %2756 = vmatprep.subr.mxu0 0.0
        %2757 = vmatpush1.msra.mxu0 0.0
        %2758 = vmatprep.subr.mxu0 0.0
        %2759 = vmatpush1.msra.mxu0 0.0
        %2760 = vmatprep.subr.mxu0 0.0
        %2761 = vmatpush1.msra.mxu0 0.0
        %2762 = vmatprep.subr.mxu0 0.0
        %2763 = vmatpush1.msra.mxu0 0.0
        %2764 = vmatprep.subr.mxu0 0.0
        %2765 = vmatpush1.msra.mxu0 0.0
        %2766 = vmatprep.subr.mxu0 0.0
        %2767 = vmatpush1.msra.mxu0 0.0
        %2768 = vmatprep.subr.mxu0 0.0
        %2769 = vmatpush1.msra.mxu0 0.0
        %2770 = vmatprep.subr.mxu0 0.0
        %2771 = vmatpush1.msra.mxu0 0.0
        %2772 = vmatprep.subr.mxu0 0.0
        %2773 = vmatpush1.msra.mxu0 0.0
        %2774 = vmatprep.subr.mxu0 0.0
        %2775 = vmatpush1.msra.mxu0 0.0
        %2776 = vmatprep.subr.mxu0 0.0
        %2777 = vmatpush1.msra.mxu0 0.0
        %2778 = vmatprep.subr.mxu0 0.0
        %2779 = vmatpush1.msra.mxu0 0.0
        %2780 = vmatprep.subr.mxu0 0.0
        %2781 = vmatpush1.msra.mxu0 0.0
        %2782 = vmatprep.subr.mxu0 0.0
        %2783 = vmatpush1.msra.mxu0 0.0
        %2784 = vmatprep.subr.mxu0 0.0
        %2785 = vmatpush1.msra.mxu0 0.0
        %2786 = vmatprep.mubr.f32.mxu0 0.0
        %2787 = vmatmul.mubr.f32.gmra.mrb[0].mxu0 %v2717
        %v2788 = vpop.f32.mrb[0].mxu0
        %v2789 = vadd.f32 %v2558, %v2788
        %v2790 = vpop.f32.mrb[0].mxu0
        %2791 = vmatprep.mubr.f32.mxu0 0.0
        %2792 = vmatmul.mubr.f32.gmra.mrb[0].mxu0 %v2720
        %v2793 = vpop.f32.mrb[0].mxu0
        %v2794 = vadd.f32 %v2563, %v2793
        %v2795 = vpop.f32.mrb[0].mxu0
        %2796 = vmatprep.mubr.f32.mxu0 0.0
        %2797 = vmatmul.mubr.f32.gmra.mrb[0].mxu0 %v2396
        %v2798 = vpop.f32.mrb[0].mxu0
        %v2799 = vadd.f32 %v2568, %v2798
        %v2800 = vpop.f32.mrb[0].mxu0
        %2801 = vmatprep.mubr.f32.mxu0 0.0
        %2802 = vmatmul.mubr.f32.gmra.mrb[0].mxu0 %v2399
        %v2803 = vpop.f32.mrb[0].mxu0
        %v2804 = vadd.f32 %v2573, %v2803
        %v2805 = vpop.f32.mrb[0].mxu0
        %2806 = vmatprep.mubr.f32.mxu0 0.0
        %2807 = vmatmul.mubr.f32.gmra.mrb[0].mxu0 %v2402
        %v2808 = vpop.f32.mrb[0].mxu0
        %v2809 = vadd.f32 %v2578, %v2808
        %v2810 = vpop.f32.mrb[0].mxu0
        %2811 = vmatprep.mubr.f32.mxu0 0.0
        %2812 = vmatmul.mubr.f32.gmra.mrb[0].mxu0 %v2405
        %v2813 = vpop.f32.mrb[0].mxu0
        %v2814 = vadd.f32 %v2583, %v2813
        %v2815 = vpop.f32.mrb[0].mxu0
        %2816 = vmatprep.mubr.f32.mxu0 0.0
        %2817 = vmatmul.mubr.f32.gmra.mrb[0].mxu0 %v2408
        %v2818 = vpop.f32.mrb[0].mxu0
        %v2819 = vadd.f32 %v2588, %v2818
        %v2820 = vpop.f32.mrb[0].mxu0
        %2821 = vmatprep.mubr.f32.mxu0 0.0
        %2822 = vmatmul.mubr.f32.gmra.mrb[0].mxu0 %v2411
        %v2823 = vpop.f32.mrb[0].mxu0
        %v2824 = vadd.f32 %v2593, %v2823
        %v2825 = vpop.f32.mrb[0].mxu0
        %2826 = vmatprep.mubr.f32.mxu0 0.0
        %2827 = vmatmul.mubr.f32.gmra.mrb[0].mxu0 %v2414
        %v2828 = vpop.f32.mrb[0].mxu0
        %v2829 = vadd.f32 %v2598, %v2828
        %v2830 = vpop.f32.mrb[0].mxu0
        %2831 = vmatprep.mubr.f32.mxu0 0.0
        %2832 = vmatmul.mubr.f32.gmra.mrb[0].mxu0 %v2417
        %v2833 = vpop.f32.mrb[0].mxu0
        %v2834 = vadd.f32 %v2603, %v2833
        %v2835 = vpop.f32.mrb[0].mxu0
        %2836 = vmatprep.mubr.f32.mxu0 0.0
        %2837 = vmatmul.mubr.f32.gmra.mrb[0].mxu0 %v2420
        %v2838 = vpop.f32.mrb[0].mxu0
        %v2839 = vadd.f32 %v2608, %v2838
        %v2840 = vpop.f32.mrb[0].mxu0
        %2841 = vmatprep.mubr.f32.mxu0 0.0
        %2842 = vmatmul.mubr.f32.gmra.mrb[0].mxu0 %v2423
        %v2843 = vpop.f32.mrb[0].mxu0
        %v2844 = vadd.f32 %v2613, %v2843
        %v2845 = vpop.f32.mrb[0].mxu0
        %2846 = vmatprep.mubr.f32.mxu0 0.0
        %2847 = vmatmul.mubr.f32.gmra.mrb[0].mxu0 %v2426
        %v2848 = vpop.f32.mrb[0].mxu0
        %v2849 = vadd.f32 %v2618, %v2848
        %v2850 = vpop.f32.mrb[0].mxu0
        %2851 = vmatprep.mubr.f32.mxu0 0.0
        %2852 = vmatmul.mubr.f32.gmra.mrb[0].mxu0 %v2429
        %v2853 = vpop.f32.mrb[0].mxu0
        %v2854 = vadd.f32 %v2623, %v2853
        %v2855 = vpop.f32.mrb[0].mxu0
        %2856 = vmatprep.mubr.f32.mxu0 0.0
        %2857 = vmatmul.mubr.f32.gmra.mrb[0].mxu0 %v2432
        %v2858 = vpop.f32.mrb[0].mxu0
        %v2859 = vadd.f32 %v2628, %v2858
        %v2860 = vpop.f32.mrb[0].mxu0
        %2861 = vmatprep.mubr.f32.mxu0 0.0
        %2862 = vmatmul.mubr.f32.gmra.mrb[0].mxu0 %v2435
        %v2863 = vpop.f32.mrb[0].mxu0
        %v2864 = vadd.f32 %v2633, %v2863
        %v2865 = vpop.f32.mrb[0].mxu0
        %2866 = vmatprep.mubr.f32.mxu0 0.0
        %2867 = vmatmul.mubr.f32.gmra.mrb[0].mxu0 %v2438
        %v2868 = vpop.f32.mrb[0].mxu0
        %v2869 = vadd.f32 %v2638, %v2868
        %v2870 = vpop.f32.mrb[0].mxu0
        %2871 = vmatprep.mubr.f32.mxu0 0.0
        %2872 = vmatmul.mubr.f32.gmra.mrb[0].mxu0 %v2441
        %v2873 = vpop.f32.mrb[0].mxu0
        %v2874 = vadd.f32 %v2643, %v2873
        %v2875 = vpop.f32.mrb[0].mxu0
        %2876 = vmatprep.mubr.f32.mxu0 0.0
        %2877 = vmatmul.mubr.f32.gmra.mrb[0].mxu0 %v2444
        %v2878 = vpop.f32.mrb[0].mxu0
        %v2879 = vadd.f32 %v2648, %v2878
        %v2880 = vpop.f32.mrb[0].mxu0
        %2881 = vmatprep.mubr.f32.mxu0 0.0
        %2882 = vmatmul.mubr.f32.gmra.mrb[0].mxu0 %v2447
        %v2883 = vpop.f32.mrb[0].mxu0
        %v2884 = vadd.f32 %v2653, %v2883
        %v2885 = vpop.f32.mrb[0].mxu0
        %2886 = vmatprep.mubr.f32.mxu0 0.0
        %2887 = vmatmul.mubr.f32.gmra.mrb[0].mxu0 %v2450
        %v2888 = vpop.f32.mrb[0].mxu0
        %v2889 = vadd.f32 %v2658, %v2888
        %v2890 = vpop.f32.mrb[0].mxu0
        %2891 = vmatprep.mubr.f32.mxu0 0.0
        %2892 = vmatmul.mubr.f32.gmra.mrb[0].mxu0 %v2453
        %v2893 = vpop.f32.mrb[0].mxu0
        %v2894 = vadd.f32 %v2663, %v2893
        %v2895 = vpop.f32.mrb[0].mxu0
        %2896 = vmatprep.mubr.f32.mxu0 0.0
        %2897 = vmatmul.mubr.f32.gmra.mrb[0].mxu0 %v2456
        %v2898 = vpop.f32.mrb[0].mxu0
        %v2899 = vadd.f32 %v2668, %v2898
        %v2900 = vpop.f32.mrb[0].mxu0
        %2901 = vmatprep.mubr.f32.mxu0 0.0
        %2902 = vmatmul.mubr.f32.gmra.mrb[0].mxu0 %v2459
        %v2903 = vpop.f32.mrb[0].mxu0
        %v2904 = vadd.f32 %v2673, %v2903
        %v2905 = vpop.f32.mrb[0].mxu0
        %2906 = vmatprep.mubr.f32.mxu0 0.0
        %2907 = vmatmul.mubr.f32.gmra.mrb[0].mxu0 %v2462
        %v2908 = vpop.f32.mrb[0].mxu0
        %v2909 = vadd.f32 %v2678, %v2908
        %v2910 = vpop.f32.mrb[0].mxu0
        %2911 = vmatprep.mubr.f32.mxu0 0.0
        %2912 = vmatmul.mubr.f32.gmra.mrb[0].mxu0 %v2465
        %v2913 = vpop.f32.mrb[0].mxu0
        %v2914 = vadd.f32 %v2683, %v2913
        %v2915 = vpop.f32.mrb[0].mxu0
        %2916 = vmatprep.mubr.f32.mxu0 0.0
        %2917 = vmatmul.mubr.f32.gmra.mrb[0].mxu0 %v2468
        %v2918 = vpop.f32.mrb[0].mxu0
        %v2919 = vadd.f32 %v2688, %v2918
        %v2920 = vpop.f32.mrb[0].mxu0
        %2921 = vmatprep.mubr.f32.mxu0 0.0
        %2922 = vmatmul.mubr.f32.gmra.mrb[0].mxu0 %v2471
        %v2923 = vpop.f32.mrb[0].mxu0
        %v2924 = vadd.f32 %v2693, %v2923
        %v2925 = vpop.f32.mrb[0].mxu0
        %2926 = vmatprep.mubr.f32.mxu0 0.0
        %2927 = vmatmul.mubr.f32.gmra.mrb[0].mxu0 %v2474
        %v2928 = vpop.f32.mrb[0].mxu0
        %v2929 = vadd.f32 %v2698, %v2928
        %v2930 = vpop.f32.mrb[0].mxu0
        %2931 = vmatprep.mubr.f32.mxu0 0.0
        %2932 = vmatmul.mubr.f32.gmra.mrb[0].mxu0 %v2477
        %v2933 = vpop.f32.mrb[0].mxu0
        %v2934 = vadd.f32 %v2703, %v2933
        %v2935 = vpop.f32.mrb[0].mxu0
        %2936 = vmatprep.mubr.f32.mxu0 0.0
        %2937 = vmatmul.mubr.f32.gmra.mrb[0].mxu0 %v2480
        %v2938 = vpop.f32.mrb[0].mxu0
        %v2939 = vadd.f32 %v2708, %v2938
        %v2940 = vpop.f32.mrb[0].mxu0
        %2941 = vmatprep.mubr.f32.mxu0 0.0
        %2942 = vmatmul.mubr.f32.gmra.mrb[0].mxu0 %v2483
        %v2943 = vpop.f32.mrb[0].mxu0
        %v2944 = vadd.f32 %v2713, %v2943
        %v2945 = vpop.f32.mrb[0].mxu0
        %2946 = vdwg.mxu0
        %s2947 = scalar_lea.vmem [#allocation9], 192
        %v2948 = vld [vmem:[%s2947] sm:$0xff]
        %v2949 = vld [vmem:[%s2947 + $0x8] sm:$0xff]
        %v2950 = vld [vmem:[%s2947 + $0x10] sm:$0xff]
        %v2951 = vld [vmem:[%s2947 + $0x18] sm:$0xff]
        %v2952 = vld [vmem:[%s2947 + $0x20] sm:$0xff]
        %v2953 = vld [vmem:[%s2947 + $0x28] sm:$0xff]
        %v2954 = vld [vmem:[%s2947 + $0x30] sm:$0xff]
        %v2955 = vld [vmem:[%s2947 + $0x38] sm:$0xff]
        %v2956 = vld [vmem:[%s2947 + $0x40] sm:$0xff]
        %v2957 = vld [vmem:[%s2947 + $0x48] sm:$0xff]
        %v2958 = vld [vmem:[%s2947 + $0x50] sm:$0xff]
        %v2959 = vld [vmem:[%s2947 + $0x58] sm:$0xff]
        %v2961 = vsel %vm932, %v2368, 0
        %v2964 = vsel %vm932, %v2369, 0
        %2966 = vmatprep.subr.mxu0 0.0
        %2967 = vmatpush1.msra.mxu0 %v2948
        %2968 = vmatprep.subr.mxu0 0.0
        %2969 = vmatpush1.msra.mxu0 %v2949
        %2970 = vmatprep.subr.mxu0 0.0
        %2971 = vmatpush1.msra.mxu0 %v2950
        %2972 = vmatprep.subr.mxu0 0.0
        %2973 = vmatpush1.msra.mxu0 %v2951
        %2974 = vmatprep.subr.mxu0 0.0
        %2975 = vmatpush1.msra.mxu0 %v2952
        %2976 = vmatprep.subr.mxu0 0.0
        %2977 = vmatpush1.msra.mxu0 %v2953
        %2978 = vmatprep.subr.mxu0 0.0
        %2979 = vmatpush1.msra.mxu0 %v2954
        %2980 = vmatprep.subr.mxu0 0.0
        %2981 = vmatpush1.msra.mxu0 %v2955
        %2982 = vmatprep.subr.mxu0 0.0
        %2983 = vmatpush1.msra.mxu0 %v2956
        %2984 = vmatprep.subr.mxu0 0.0
        %2985 = vmatpush1.msra.mxu0 %v2957
        %2986 = vmatprep.subr.mxu0 0.0
        %2987 = vmatpush1.msra.mxu0 %v2958
        %2988 = vmatprep.subr.mxu0 0.0
        %2989 = vmatpush1.msra.mxu0 %v2959
        %2990 = vmatprep.subr.mxu0 0.0
        %2991 = vmatpush1.msra.mxu0 0.0
        %2992 = vmatprep.subr.mxu0 0.0
        %2993 = vmatpush1.msra.mxu0 0.0
        %2994 = vmatprep.subr.mxu0 0.0
        %2995 = vmatpush1.msra.mxu0 0.0
        %2996 = vmatprep.subr.mxu0 0.0
        %2997 = vmatpush1.msra.mxu0 0.0
        %2998 = vmatprep.subr.mxu0 0.0
        %2999 = vmatpush1.msra.mxu0 0.0
        %3000 = vmatprep.subr.mxu0 0.0
        %3001 = vmatpush1.msra.mxu0 0.0
        %3002 = vmatprep.subr.mxu0 0.0
        %3003 = vmatpush1.msra.mxu0 0.0
        %3004 = vmatprep.subr.mxu0 0.0
        %3005 = vmatpush1.msra.mxu0 0.0
        %3006 = vmatprep.subr.mxu0 0.0
        %3007 = vmatpush1.msra.mxu0 0.0
        %3008 = vmatprep.subr.mxu0 0.0
        %3009 = vmatpush1.msra.mxu0 0.0
        %3010 = vmatprep.subr.mxu0 0.0
        %3011 = vmatpush1.msra.mxu0 0.0
        %3012 = vmatprep.subr.mxu0 0.0
        %3013 = vmatpush1.msra.mxu0 0.0
        %3014 = vmatprep.subr.mxu0 0.0
        %3015 = vmatpush1.msra.mxu0 0.0
        %3016 = vmatprep.subr.mxu0 0.0
        %3017 = vmatpush1.msra.mxu0 0.0
        %3018 = vmatprep.subr.mxu0 0.0
        %3019 = vmatpush1.msra.mxu0 0.0
        %3020 = vmatprep.subr.mxu0 0.0
        %3021 = vmatpush1.msra.mxu0 0.0
        %3022 = vmatprep.subr.mxu0 0.0
        %3023 = vmatpush1.msra.mxu0 0.0
        %3024 = vmatprep.subr.mxu0 0.0
        %3025 = vmatpush1.msra.mxu0 0.0
        %3026 = vmatprep.subr.mxu0 0.0
        %3027 = vmatpush1.msra.mxu0 0.0
        %3028 = vmatprep.subr.mxu0 0.0
        %3029 = vmatpush1.msra.mxu0 0.0
        %3030 = vmatprep.mubr.f32.mxu0 0.0
        %3031 = vmatmul.mubr.f32.gmra.mrb[0].mxu0 %v2402
        %v3032 = vpop.f32.mrb[0].mxu0
        %v3033 = vadd.f32 0.0, %v3032
        %v3034 = vpop.f32.mrb[0].mxu0
        %3035 = vmatprep.mubr.f32.mxu0 0.0
        %3036 = vmatmul.mubr.f32.gmra.mrb[0].mxu0 %v2405
        %v3037 = vpop.f32.mrb[0].mxu0
        %v3038 = vadd.f32 0.0, %v3037
        %v3039 = vpop.f32.mrb[0].mxu0
        %3040 = vmatprep.mubr.f32.mxu0 0.0
        %3041 = vmatmul.mubr.f32.gmra.mrb[0].mxu0 %v2408
        %v3042 = vpop.f32.mrb[0].mxu0
        %v3043 = vadd.f32 0.0, %v3042
        %v3044 = vpop.f32.mrb[0].mxu0
        %3045 = vmatprep.mubr.f32.mxu0 0.0
        %3046 = vmatmul.mubr.f32.gmra.mrb[0].mxu0 %v2411
        %v3047 = vpop.f32.mrb[0].mxu0
        %v3048 = vadd.f32 0.0, %v3047
        %v3049 = vpop.f32.mrb[0].mxu0
        %3050 = vmatprep.mubr.f32.mxu0 0.0
        %3051 = vmatmul.mubr.f32.gmra.mrb[0].mxu0 %v2414
        %v3052 = vpop.f32.mrb[0].mxu0
        %v3053 = vadd.f32 0.0, %v3052
        %v3054 = vpop.f32.mrb[0].mxu0
        %3055 = vmatprep.mubr.f32.mxu0 0.0
        %3056 = vmatmul.mubr.f32.gmra.mrb[0].mxu0 %v2417
        %v3057 = vpop.f32.mrb[0].mxu0
        %v3058 = vadd.f32 0.0, %v3057
        %v3059 = vpop.f32.mrb[0].mxu0
        %3060 = vmatprep.mubr.f32.mxu0 0.0
        %3061 = vmatmul.mubr.f32.gmra.mrb[0].mxu0 %v2420
        %v3062 = vpop.f32.mrb[0].mxu0
        %v3063 = vadd.f32 0.0, %v3062
        %v3064 = vpop.f32.mrb[0].mxu0
        %3065 = vmatprep.mubr.f32.mxu0 0.0
        %3066 = vmatmul.mubr.f32.gmra.mrb[0].mxu0 %v2423
        %v3067 = vpop.f32.mrb[0].mxu0
        %v3068 = vadd.f32 0.0, %v3067
        %v3069 = vpop.f32.mrb[0].mxu0
        %3070 = vmatprep.mubr.f32.mxu0 0.0
        %3071 = vmatmul.mubr.f32.gmra.mrb[0].mxu0 %v2426
        %v3072 = vpop.f32.mrb[0].mxu0
        %v3073 = vadd.f32 0.0, %v3072
        %v3074 = vpop.f32.mrb[0].mxu0
        %3075 = vmatprep.mubr.f32.mxu0 0.0
        %3076 = vmatmul.mubr.f32.gmra.mrb[0].mxu0 %v2429
        %v3077 = vpop.f32.mrb[0].mxu0
        %v3078 = vadd.f32 0.0, %v3077
        %v3079 = vpop.f32.mrb[0].mxu0
        %3080 = vmatprep.mubr.f32.mxu0 0.0
        %3081 = vmatmul.mubr.f32.gmra.mrb[0].mxu0 %v2432
        %v3082 = vpop.f32.mrb[0].mxu0
        %v3083 = vadd.f32 0.0, %v3082
        %v3084 = vpop.f32.mrb[0].mxu0
        %3085 = vmatprep.mubr.f32.mxu0 0.0
        %3086 = vmatmul.mubr.f32.gmra.mrb[0].mxu0 %v2435
        %v3087 = vpop.f32.mrb[0].mxu0
        %v3088 = vadd.f32 0.0, %v3087
        %v3089 = vpop.f32.mrb[0].mxu0
        %3090 = vmatprep.mubr.f32.mxu0 0.0
        %3091 = vmatmul.mubr.f32.gmra.mrb[0].mxu0 %v2438
        %v3092 = vpop.f32.mrb[0].mxu0
        %v3093 = vadd.f32 0.0, %v3092
        %v3094 = vpop.f32.mrb[0].mxu0
        %3095 = vmatprep.mubr.f32.mxu0 0.0
        %3096 = vmatmul.mubr.f32.gmra.mrb[0].mxu0 %v2441
        %v3097 = vpop.f32.mrb[0].mxu0
        %v3098 = vadd.f32 0.0, %v3097
        %v3099 = vpop.f32.mrb[0].mxu0
        %3100 = vmatprep.mubr.f32.mxu0 0.0
        %3101 = vmatmul.mubr.f32.gmra.mrb[0].mxu0 %v2444
        %v3102 = vpop.f32.mrb[0].mxu0
        %v3103 = vadd.f32 0.0, %v3102
        %v3104 = vpop.f32.mrb[0].mxu0
        %3105 = vmatprep.mubr.f32.mxu0 0.0
        %3106 = vmatmul.mubr.f32.gmra.mrb[0].mxu0 %v2447
        %v3107 = vpop.f32.mrb[0].mxu0
        %v3108 = vadd.f32 0.0, %v3107
        %v3109 = vpop.f32.mrb[0].mxu0
        %3110 = vmatprep.mubr.f32.mxu0 0.0
        %3111 = vmatmul.mubr.f32.gmra.mrb[0].mxu0 %v2450
        %v3112 = vpop.f32.mrb[0].mxu0
        %v3113 = vadd.f32 0.0, %v3112
        %v3114 = vpop.f32.mrb[0].mxu0
        %3115 = vmatprep.mubr.f32.mxu0 0.0
        %3116 = vmatmul.mubr.f32.gmra.mrb[0].mxu0 %v2453
        %v3117 = vpop.f32.mrb[0].mxu0
        %v3118 = vadd.f32 0.0, %v3117
        %v3119 = vpop.f32.mrb[0].mxu0
        %3120 = vmatprep.mubr.f32.mxu0 0.0
        %3121 = vmatmul.mubr.f32.gmra.mrb[0].mxu0 %v2456
        %v3122 = vpop.f32.mrb[0].mxu0
        %v3123 = vadd.f32 0.0, %v3122
        %v3124 = vpop.f32.mrb[0].mxu0
        %3125 = vmatprep.mubr.f32.mxu0 0.0
        %3126 = vmatmul.mubr.f32.gmra.mrb[0].mxu0 %v2459
        %v3127 = vpop.f32.mrb[0].mxu0
        %v3128 = vadd.f32 0.0, %v3127
        %v3129 = vpop.f32.mrb[0].mxu0
        %3130 = vmatprep.mubr.f32.mxu0 0.0
        %3131 = vmatmul.mubr.f32.gmra.mrb[0].mxu0 %v2462
        %v3132 = vpop.f32.mrb[0].mxu0
        %v3133 = vadd.f32 0.0, %v3132
        %v3134 = vpop.f32.mrb[0].mxu0
        %3135 = vmatprep.mubr.f32.mxu0 0.0
        %3136 = vmatmul.mubr.f32.gmra.mrb[0].mxu0 %v2465
        %v3137 = vpop.f32.mrb[0].mxu0
        %v3138 = vadd.f32 0.0, %v3137
        %v3139 = vpop.f32.mrb[0].mxu0
        %3140 = vmatprep.mubr.f32.mxu0 0.0
        %3141 = vmatmul.mubr.f32.gmra.mrb[0].mxu0 %v2468
        %v3142 = vpop.f32.mrb[0].mxu0
        %v3143 = vadd.f32 0.0, %v3142
        %v3144 = vpop.f32.mrb[0].mxu0
        %3145 = vmatprep.mubr.f32.mxu0 0.0
        %3146 = vmatmul.mubr.f32.gmra.mrb[0].mxu0 %v2471
        %v3147 = vpop.f32.mrb[0].mxu0
        %v3148 = vadd.f32 0.0, %v3147
        %v3149 = vpop.f32.mrb[0].mxu0
        %3150 = vmatprep.mubr.f32.mxu0 0.0
        %3151 = vmatmul.mubr.f32.gmra.mrb[0].mxu0 %v2474
        %v3152 = vpop.f32.mrb[0].mxu0
        %v3153 = vadd.f32 0.0, %v3152
        %v3154 = vpop.f32.mrb[0].mxu0
        %3155 = vmatprep.mubr.f32.mxu0 0.0
        %3156 = vmatmul.mubr.f32.gmra.mrb[0].mxu0 %v2477
        %v3157 = vpop.f32.mrb[0].mxu0
        %v3158 = vadd.f32 0.0, %v3157
        %v3159 = vpop.f32.mrb[0].mxu0
        %3160 = vmatprep.mubr.f32.mxu0 0.0
        %3161 = vmatmul.mubr.f32.gmra.mrb[0].mxu0 %v2480
        %v3162 = vpop.f32.mrb[0].mxu0
        %v3163 = vadd.f32 0.0, %v3162
        %v3164 = vpop.f32.mrb[0].mxu0
        %3165 = vmatprep.mubr.f32.mxu0 0.0
        %3166 = vmatmul.mubr.f32.gmra.mrb[0].mxu0 %v2483
        %v3167 = vpop.f32.mrb[0].mxu0
        %v3168 = vadd.f32 0.0, %v3167
        %v3169 = vpop.f32.mrb[0].mxu0
        %3170 = vmatprep.mubr.f32.mxu0 0.0
        %3171 = vmatmul.mubr.f32.gmra.mrb[0].mxu0 %v2486
        %v3172 = vpop.f32.mrb[0].mxu0
        %v3173 = vadd.f32 0.0, %v3172
        %v3174 = vpop.f32.mrb[0].mxu0
        %3175 = vmatprep.mubr.f32.mxu0 0.0
        %3176 = vmatmul.mubr.f32.gmra.mrb[0].mxu0 %v2489
        %v3177 = vpop.f32.mrb[0].mxu0
        %v3178 = vadd.f32 0.0, %v3177
        %v3179 = vpop.f32.mrb[0].mxu0
        %3180 = vmatprep.mubr.f32.mxu0 0.0
        %3181 = vmatmul.mubr.f32.gmra.mrb[0].mxu0 %v2961
        %v3182 = vpop.f32.mrb[0].mxu0
        %v3183 = vadd.f32 0.0, %v3182
        %v3184 = vpop.f32.mrb[0].mxu0
        %3185 = vmatprep.mubr.f32.mxu0 0.0
        %3186 = vmatmul.mubr.f32.gmra.mrb[0].mxu0 %v2964
        %v3187 = vpop.f32.mrb[0].mxu0
        %v3188 = vadd.f32 0.0, %v3187
        %v3189 = vpop.f32.mrb[0].mxu0
        %3190 = vdwg.mxu0
        %v3191 = vadd.f32 %v2789, %v3033
        %v3192 = vadd.f32 %v2794, %v3038
        %v3193 = vadd.f32 %v2799, %v3043
        %v3194 = vadd.f32 %v2804, %v3048
        %v3195 = vadd.f32 %v2809, %v3053
        %v3196 = vadd.f32 %v2814, %v3058
        %v3197 = vadd.f32 %v2819, %v3063
        %v3198 = vadd.f32 %v2824, %v3068
        %v3199 = vadd.f32 %v2829, %v3073
        %v3200 = vadd.f32 %v2834, %v3078
        %v3201 = vadd.f32 %v2839, %v3083
        %v3202 = vadd.f32 %v2844, %v3088
        %v3203 = vadd.f32 %v2849, %v3093
        %v3204 = vadd.f32 %v2854, %v3098
        %v3205 = vadd.f32 %v2859, %v3103
        %v3206 = vadd.f32 %v2864, %v3108
        %v3207 = vadd.f32 %v2869, %v3113
        %v3208 = vadd.f32 %v2874, %v3118
        %v3209 = vadd.f32 %v2879, %v3123
        %v3210 = vadd.f32 %v2884, %v3128
        %v3211 = vadd.f32 %v2889, %v3133
        %v3212 = vadd.f32 %v2894, %v3138
        %v3213 = vadd.f32 %v2899, %v3143
        %v3214 = vadd.f32 %v2904, %v3148
        %v3215 = vadd.f32 %v2909, %v3153
        %v3216 = vadd.f32 %v2914, %v3158
        %v3217 = vadd.f32 %v2919, %v3163
        %v3218 = vadd.f32 %v2924, %v3168
        %v3219 = vadd.f32 %v2929, %v3173
        %v3220 = vadd.f32 %v2934, %v3178
        %v3221 = vadd.f32 %v2939, %v3183
        %v3222 = vadd.f32 %v2944, %v3188
        %vm3223 = vcmp.ge.f32.partialorder %v3191, 0.0
        %vm3224 = vcmp.ge.f32.partialorder %v3192, 0.0
        %vm3225 = vcmp.ge.f32.partialorder %v3193, 0.0
        %vm3226 = vcmp.ge.f32.partialorder %v3194, 0.0
        %vm3227 = vcmp.ge.f32.partialorder %v3195, 0.0
        %vm3228 = vcmp.ge.f32.partialorder %v3196, 0.0
        %vm3229 = vcmp.ge.f32.partialorder %v3197, 0.0
        %vm3230 = vcmp.ge.f32.partialorder %v3198, 0.0
        %vm3231 = vcmp.ge.f32.partialorder %v3199, 0.0
        %vm3232 = vcmp.ge.f32.partialorder %v3200, 0.0
        %vm3233 = vcmp.ge.f32.partialorder %v3201, 0.0
        %vm3234 = vcmp.ge.f32.partialorder %v3202, 0.0
        %vm3235 = vcmp.ge.f32.partialorder %v3203, 0.0
        %vm3236 = vcmp.ge.f32.partialorder %v3204, 0.0
        %vm3237 = vcmp.ge.f32.partialorder %v3205, 0.0
        %vm3238 = vcmp.ge.f32.partialorder %v3206, 0.0
        %vm3239 = vcmp.ge.f32.partialorder %v3207, 0.0
        %vm3240 = vcmp.ge.f32.partialorder %v3208, 0.0
        %vm3241 = vcmp.ge.f32.partialorder %v3209, 0.0
        %vm3242 = vcmp.ge.f32.partialorder %v3210, 0.0
        %vm3243 = vcmp.ge.f32.partialorder %v3211, 0.0
        %vm3244 = vcmp.ge.f32.partialorder %v3212, 0.0
        %vm3245 = vcmp.ge.f32.partialorder %v3213, 0.0
        %vm3246 = vcmp.ge.f32.partialorder %v3214, 0.0
        %vm3247 = vcmp.ge.f32.partialorder %v3215, 0.0
        %vm3248 = vcmp.ge.f32.partialorder %v3216, 0.0
        %vm3249 = vcmp.ge.f32.partialorder %v3217, 0.0
        %vm3250 = vcmp.ge.f32.partialorder %v3218, 0.0
        %vm3251 = vcmp.ge.f32.partialorder %v3219, 0.0
        %vm3252 = vcmp.ge.f32.partialorder %v3220, 0.0
        %vm3253 = vcmp.ge.f32.partialorder %v3221, 0.0
        %vm3254 = vcmp.ge.f32.partialorder %v3222, 0.0
        %v3255 = vmul.f32 %v3191, 0.2
        %v3256 = vmul.f32 %v3192, 0.2
        %v3257 = vmul.f32 %v3193, 0.2
        %v3258 = vmul.f32 %v3194, 0.2
        %v3259 = vmul.f32 %v3195, 0.2
        %v3260 = vmul.f32 %v3196, 0.2
        %v3261 = vmul.f32 %v3197, 0.2
        %v3262 = vmul.f32 %v3198, 0.2
        %v3263 = vmul.f32 %v3199, 0.2
        %v3264 = vmul.f32 %v3200, 0.2
        %v3265 = vmul.f32 %v3201, 0.2
        %v3266 = vmul.f32 %v3202, 0.2
        %v3267 = vmul.f32 %v3203, 0.2
        %v3268 = vmul.f32 %v3204, 0.2
        %v3269 = vmul.f32 %v3205, 0.2
        %v3270 = vmul.f32 %v3206, 0.2
        %v3271 = vmul.f32 %v3207, 0.2
        %v3272 = vmul.f32 %v3208, 0.2
        %v3273 = vmul.f32 %v3209, 0.2
        %v3274 = vmul.f32 %v3210, 0.2
        %v3275 = vmul.f32 %v3211, 0.2
        %v3276 = vmul.f32 %v3212, 0.2
        %v3277 = vmul.f32 %v3213, 0.2
        %v3278 = vmul.f32 %v3214, 0.2
        %v3279 = vmul.f32 %v3215, 0.2
        %v3280 = vmul.f32 %v3216, 0.2
        %v3281 = vmul.f32 %v3217, 0.2
        %v3282 = vmul.f32 %v3218, 0.2
        %v3283 = vmul.f32 %v3219, 0.2
        %v3284 = vmul.f32 %v3220, 0.2
        %v3285 = vmul.f32 %v3221, 0.2
        %v3286 = vmul.f32 %v3222, 0.2
        %v3287 = vsel %vm3223, %v3191, %v3255
        %v3288 = vsel %vm3224, %v3192, %v3256
        %v3289 = vsel %vm3225, %v3193, %v3257
        %v3290 = vsel %vm3226, %v3194, %v3258
        %v3291 = vsel %vm3227, %v3195, %v3259
        %v3292 = vsel %vm3228, %v3196, %v3260
        %v3293 = vsel %vm3229, %v3197, %v3261
        %v3294 = vsel %vm3230, %v3198, %v3262
        %v3295 = vsel %vm3231, %v3199, %v3263
        %v3296 = vsel %vm3232, %v3200, %v3264
        %v3297 = vsel %vm3233, %v3201, %v3265
        %v3298 = vsel %vm3234, %v3202, %v3266
        %v3299 = vsel %vm3235, %v3203, %v3267
        %v3300 = vsel %vm3236, %v3204, %v3268
        %v3301 = vsel %vm3237, %v3205, %v3269
        %v3302 = vsel %vm3238, %v3206, %v3270
        %v3303 = vsel %vm3239, %v3207, %v3271
        %v3304 = vsel %vm3240, %v3208, %v3272
        %v3305 = vsel %vm3241, %v3209, %v3273
        %v3306 = vsel %vm3242, %v3210, %v3274
        %v3307 = vsel %vm3243, %v3211, %v3275
        %v3308 = vsel %vm3244, %v3212, %v3276
        %v3309 = vsel %vm3245, %v3213, %v3277
        %v3310 = vsel %vm3246, %v3214, %v3278
        %v3311 = vsel %vm3247, %v3215, %v3279
        %v3312 = vsel %vm3248, %v3216, %v3280
        %v3313 = vsel %vm3249, %v3217, %v3281
        %v3314 = vsel %vm3250, %v3218, %v3282
        %v3315 = vsel %vm3251, %v3219, %v3283
        %v3316 = vsel %vm3252, %v3220, %v3284
        %v3317 = vsel %vm3253, %v3221, %v3285
        %v3318 = vsel %vm3254, %v3222, %v3286
        %3319 = vst.msk [vmem:[%s217] sm:$0xff] %vm218, %v3287
        %3320 = vst.msk [vmem:[%s217 + $0x8] sm:$0xff] %vm218, %v3288
        %3321 = vst.msk [vmem:[%s217 + $0x10] sm:$0xff] %vm218, %v3289
        %3322 = vst.msk [vmem:[%s217 + $0x18] sm:$0xff] %vm218, %v3290
        %3323 = vst.msk [vmem:[%s217 + $0x20] sm:$0xff] %vm218, %v3291
        %3324 = vst.msk [vmem:[%s217 + $0x28] sm:$0xff] %vm218, %v3292
        %3325 = vst.msk [vmem:[%s217 + $0x30] sm:$0xff] %vm218, %v3293
        %3326 = vst.msk [vmem:[%s217 + $0x38] sm:$0xff] %vm218, %v3294
        %3327 = vst.msk [vmem:[%s217 + $0x40] sm:$0xff] %vm218, %v3295
        %3328 = vst.msk [vmem:[%s217 + $0x48] sm:$0xff] %vm218, %v3296
        %3329 = vst.msk [vmem:[%s217 + $0x50] sm:$0xff] %vm218, %v3297
        %3330 = vst.msk [vmem:[%s217 + $0x58] sm:$0xff] %vm218, %v3298
        %3331 = vst.msk [vmem:[%s217 + $0x60] sm:$0xff] %vm218, %v3299
        %3332 = vst.msk [vmem:[%s217 + $0x68] sm:$0xff] %vm218, %v3300
        %3333 = vst.msk [vmem:[%s217 + $0x70] sm:$0xff] %vm218, %v3301
        %3334 = vst.msk [vmem:[%s217 + $0x78] sm:$0xff] %vm218, %v3302
        %3335 = vst.msk [vmem:[%s217 + $0x80] sm:$0xff] %vm218, %v3303
        %3336 = vst.msk [vmem:[%s217 + $0x88] sm:$0xff] %vm218, %v3304
        %3337 = vst.msk [vmem:[%s217 + $0x90] sm:$0xff] %vm218, %v3305
        %3338 = vst.msk [vmem:[%s217 + $0x98] sm:$0xff] %vm218, %v3306
        %3339 = vst.msk [vmem:[%s217 + $0xa0] sm:$0xff] %vm218, %v3307
        %3340 = vst.msk [vmem:[%s217 + $0xa8] sm:$0xff] %vm218, %v3308
        %3341 = vst.msk [vmem:[%s217 + $0xb0] sm:$0xff] %vm218, %v3309
        %3342 = vst.msk [vmem:[%s217 + $0xb8] sm:$0xff] %vm218, %v3310
        %3343 = vst.msk [vmem:[%s217 + $0xc0] sm:$0xff] %vm218, %v3311
        %3344 = vst.msk [vmem:[%s217 + $0xc8] sm:$0xff] %vm218, %v3312
        %3345 = vst.msk [vmem:[%s217 + $0xd0] sm:$0xff] %vm218, %v3313
        %3346 = vst.msk [vmem:[%s217 + $0xd8] sm:$0xff] %vm218, %v3314
        %3347 = vst.msk [vmem:[%s217 + $0xe0] sm:$0xff] %vm218, %v3315
        %3348 = vst.msk [vmem:[%s217 + $0xe8] sm:$0xff] %vm218, %v3316
        %3349 = vst.msk [vmem:[%s217 + $0xf0] sm:$0xff] %vm218, %v3317
        %3350 = vst.msk [vmem:[%s217 + $0xf8] sm:$0xff] %vm218, %v3318
        %s3351 = sand.u32 %s97, 1
        %s3352 = scalar_lea.sflag [#allocation6], %s3351
        %s3353 = sand.u32 %s97, 1
        %s3354 = smul.addr %s3353, 256
        %s3355 = scalar_lea.vmem [#allocation10], %s3354
        // Predicated region
        $region45: #{tpu_custom_call.1} parent=31 // pred_check
          %p3356 = pneg %p107
        $region46: #{tpu_custom_call.1} parent=31 // pred_check_branch
          %3358 = sbr.rel (%p3356) target = $region48
        $region47: #{tpu_custom_call.1} parent=31 // pred_region
          %s3360 = ssub.s32 4096, 4096
          %3361 = vsyncadd %s3352, %s3360
          %s3362 = smul.addr %s21, 32
          %s3363 = smul.addr %s3362, 128
          %s3364 = scalar_lea.hbm %s3, %s3363
          %s3365 = sshll.u32 %s3355, 4
          %s3366 = int_to_ptr.vmem [resolvable:$true] %s3365
          %3371 = dma.vmem_to_hbm [thread:$0]  %s3366, 4096, %s3364, %s3352, 128, 128, 8
        $region48: #{tpu_custom_call.1} parent=31 // pred_fallthru
          _
      $region32: #{tpu_custom_call.1} parent=5 // pred_fallthru
        _
      %p3372 = scmp.le.s32.totalorder 2, %s16
      // Predicated region
      $region49: #{tpu_custom_call.1} parent=5 // pred_check
        %p3373 = pneg %p3372
      $region50: #{tpu_custom_call.1} parent=5 // pred_check_branch
        %3375 = sbr.rel (%p3373) target = $region52
      $region51: #{tpu_custom_call.1} parent=5 // pred_region
        %s3376 = ssub.s32 %s16, 2
        // Predicated region
        $region53: #{tpu_custom_call.1} parent=51 // pred_check
          %p3377 = pneg %p113
        $region54: #{tpu_custom_call.1} parent=51 // pred_check_branch
          %3379 = sbr.rel (%p3377) target = $region56
        $region55: #{tpu_custom_call.1} parent=51 // pred_region
          %s3380 = sand.u32 %s98, 1
          %s3381 = scalar_lea.sflag [#allocation6], %s3380
          %s3382 = sand.u32 %s98, 1
          %s3383 = smul.addr %s3382, 256
          %s3384 = scalar_lea.vmem [#allocation10], %s3383
          %3385 = dma.done %s3381, 4096
        $region56: #{tpu_custom_call.1} parent=51 // pred_fallthru
          _
      $region52: #{tpu_custom_call.1} parent=5 // pred_fallthru
        _
    $region6: #{tpu_custom_call.1} parent=1 // loop_footer
      %s20 = sadd.s32 1, %s16
    $region7: #{tpu_custom_call.1} parent=1 // loop_footer_branch
      %15 = sbr.rel target = $region3
    $region8: #{tpu_custom_call.1} parent=1 // loop_exit
      _
    %3386 = vsyncpa [#allocation5], 1
    %s3387 = scalar_lea.sflag [#allocation5], 1
    %3388 = vsyncpa %s3387, 1
    %3389 = vsyncpa [#allocation8], 1
    %3390 = vsyncpa [#allocation6], 1
    %s3391 = scalar_lea.sflag [#allocation6], 1
    %3392 = vsyncpa %s3391, 1

</llo_original>
